<compile_context>
chip_gen: v7x
topology: tpu7x:2x2x1
jax: 0.10.0
libtpu: 0.0.40
codegen_flags: <defaults>
</compile_context>

<pallas_src>
import functools

import jax
import jax.numpy as jnp
from jax.experimental import pallas as pl
from jax.experimental.pallas import tpu as pltpu

CFG = dict(
    vocab_size=64,
    context_length=8,
    emb_dim=32,
    n_heads=4,
    n_layers=2,
    drop_rate=0.0,   # eval-mode dropout == identity
    qkv_bias=False,
)
EPS = 1e-5
LANE = 128           # TPU lane width; LM-head output padded to a multiple of this


# ----------------------------- in-kernel helpers -----------------------------

def _layernorm(x, scale, shift):
    """Matches torch reference: mean over last dim, UNBIASED variance (D-1)."""
    d = x.shape[-1]
    mean = jnp.mean(x, axis=-1, keepdims=True)
    diff = x - mean
    var = jnp.sum(diff * diff, axis=-1, keepdims=True) * (1.0 / (d - 1))
    return scale * (diff * jax.lax.rsqrt(var + EPS)) + shift


def _gelu_tanh(x):
    c = jnp.float32(0.7978845608028654)  # sqrt(2/pi)
    return 0.5 * x * (1.0 + jnp.tanh(c * (x + 0.044715 * x * x * x)))


# ------------------------------ fused GPT kernel ------------------------------

def gpt_kernel(ids_ref, tok_emb_ref, pos_emb_ref,
               vecs_ref, wqkv_ref, wo_ref, w1_ref, w2_ref,
               fln_ref, wout_ref, o_ref, x_scratch,
               *, n_layers, n_heads):
    N, D = x_scratch.shape                    # N = B*T flattened rows
    T = pos_emb_ref.shape[0]
    B = N // T
    H = n_heads
    hd = D // H
    inv_sqrt_hd = jnp.float32(1.0 / (hd ** 0.5))

    # ---- embedding: direct row gather (O(N*D)), ids read as SMEM scalars ----
    for i in range(N):                        # static unroll (N = 16)
        tid = ids_ref[i]                      # token id scalar from SMEM
        p = i % T                             # static position index
        x_scratch[i:i + 1, :] = (tok_emb_ref[pl.ds(tid, 1), :]
                                 + pos_emb_ref[p:p + 1, :])
    x = x_scratch[...]                        # (N, D) f32; dropout(p=0.0) == id

    # ---- masks: built ONCE, reused by every layer / head ----
    qi = jax.lax.broadcasted_iota(jnp.int32, (1, T, T), 1)
    ki = jax.lax.broadcasted_iota(jnp.int32, (1, T, T), 2)
    # additive causal mask (hoisted out of the head/layer loops)
    mask_add = jnp.where(qi >= ki, jnp.float32(0.0), jnp.float32(-1e30))
    lane = jax.lax.broadcasted_iota(jnp.int32, (1, 1, D), 2)
    head_masks = [((lane >= h * hd) & (lane < (h + 1) * hd)).astype(jnp.float32)
                  for h in range(H)]

    for l in range(n_layers):                 # static unroll (tiny layer count)
        vec = vecs_ref[l]                     # (8, 4D) packed per-layer vectors
        ln1_s, ln1_b = vec[0:1, 0:D], vec[1:2, 0:D]
        ln2_s, ln2_b = vec[2:3, 0:D], vec[3:4, 0:D]
        bo, b2 = vec[4:5, 0:D], vec[5:6, 0:D]
        b1 = vec[6:7, :]                      # (1, 4D)

        # ---- attention sub-layer ----
        skip = x
        h_in = _layernorm(x, ln1_s, ln1_b)
        qkv = jnp.dot(h_in.astype(jnp.bfloat16), wqkv_ref[l],
                      preferred_element_type=jnp.float32)          # (N, 3D) f32
        q = qkv[:, 0:D].reshape(B, T, D)
        k = qkv[:, D:2 * D].reshape(B, T, D)
        v = qkv[:, 2 * D:3 * D].reshape(B, T, D)

        ctx = jnp.zeros((B, T, D), jnp.float32)
        for hm in head_masks:
            # per-head scores via lane mask: (q*mask_h) . k^T == q_h . k_h^T
            s = jnp.einsum('bqd,bkd->bqk', q * hm, k,
                           preferred_element_type=jnp.float32)     # (B, T, T)
            s = s * inv_sqrt_hd + mask_add
            p = jnp.exp(s - jnp.max(s, axis=-1, keepdims=True))
            p = p * pl.reciprocal(jnp.sum(p, axis=-1, keepdims=True), approx=True)
            # context lands only in head-h lanes; sum over heads == concat
            ctx = ctx + jnp.einsum('bqk,bkd->bqd', p, v * hm,
                                   preferred_element_type=jnp.float32)
        ctx2 = ctx.reshape(N, D)
        x = (jnp.dot(ctx2.astype(jnp.bfloat16), wo_ref[l],
                     preferred_element_type=jnp.float32) + bo + skip)

        # ---- feed-forward sub-layer ----
        skip = x
        h_in = _layernorm(x, ln2_s, ln2_b)
        h_in = (jnp.dot(h_in.astype(jnp.bfloat16), w1_ref[l],
                        preferred_element_type=jnp.float32) + b1)
        h_in = _gelu_tanh(h_in)
        x = (jnp.dot(h_in.astype(jnp.bfloat16), w2_ref[l],
                     preferred_element_type=jnp.float32) + b2 + skip)

    # ---- final LayerNorm + LM head (lane-dense 128-wide store) ----
    h_in = _layernorm(x, fln_ref[0:1, :], fln_ref[1:2, :])
    o_ref[...] = jnp.dot(h_in.astype(jnp.bfloat16), wout_ref[...],
                         preferred_element_type=jnp.float32)


# ------------------------------ parameter init --------------------------------

def init_params(cfg, key):
    D = cfg["emb_dim"]
    V = cfg["vocab_size"]
    C = cfg["context_length"]
    L = cfg["n_layers"]
    F = 4 * D
    std = 0.02
    vpad = ((V + LANE - 1) // LANE) * LANE    # 64 -> 128 lane-dense LM head

    keys = iter(jax.random.split(key, 3 + 9 * L))
    # embeddings kept f32 (gathered once, added to the f32 residual stream)
    tok_emb = std * jax.random.normal(next(keys), (V, D), jnp.float32)
    pos_emb = std * jax.random.normal(next(keys), (C, D), jnp.float32)
    w_out = std * jax.random.normal(next(keys), (D, V), jnp.float32)
    w_out_pad = jnp.zeros((D, vpad), jnp.float32).at[:, :V].set(w_out)

    wqkv, wo, w1, w2, vecs = [], [], [], [], []
    for _ in range(L):
        wq = std * jax.random.normal(next(keys), (D, D), jnp.float32)
        wk = std * jax.random.normal(next(keys), (D, D), jnp.float32)
        wv = std * jax.random.normal(next(keys), (D, D), jnp.float32)
        wqkv.append(jnp.concatenate([wq, wk, wv], axis=1))             # (D, 3D)
        wo.append(std * jax.random.normal(next(keys), (D, D), jnp.float32))
        w1.append(std * jax.random.normal(next(keys), (D, F), jnp.float32))
        w2.append(std * jax.random.normal(next(keys), (F, D), jnp.float32))

        b_o = std * jax.random.normal(next(keys), (D,), jnp.float32)
        b_1 = std * jax.random.normal(next(keys), (F,), jnp.float32)
        b_2 = std * jax.random.normal(next(keys), (D,), jnp.float32)
        vec = jnp.zeros((8, F), jnp.float32)
        vec = vec.at[0, :D].set(1.0)          # ln1 scale (row 1: ln1 shift = 0)
        vec = vec.at[2, :D].set(1.0)          # ln2 scale (row 3: ln2 shift = 0)
        vec = vec.at[4, :D].set(b_o)          # attention out-proj bias
        vec = vec.at[5, :D].set(b_2)          # ffn second-linear bias
        vec = vec.at[6, :].set(b_1)           # ffn first-linear bias (4D wide)
        vecs.append(vec)

    bf16 = jnp.bfloat16                       # MXU-native dtype for weights
    return dict(
        tok_emb=tok_emb, pos_emb=pos_emb,
        w_out=w_out_pad.astype(bf16),
        wqkv=jnp.stack(wqkv).astype(bf16), wo=jnp.stack(wo).astype(bf16),
        w1=jnp.stack(w1).astype(bf16), w2=jnp.stack(w2).astype(bf16),
        vecs=jnp.stack(vecs),                                         # f32
        final_ln=jnp.stack([jnp.ones((D,), jnp.float32),
                            jnp.zeros((D,), jnp.float32)]),           # (2, D)
    )


# --------------------------------- forward ------------------------------------

def gpt_forward(tokens, params, cfg):
    B, T = tokens.shape
    V = cfg["vocab_size"]
    D = cfg["emb_dim"]
    N = B * T
    vpad = params["w_out"].shape[1]

    ids = tokens.reshape(-1).astype(jnp.int32)      # (N,) token ids -> SMEM

    kernel = functools.partial(
        gpt_kernel, n_layers=cfg["n_layers"], n_heads=cfg["n_heads"])

    vmem = pl.BlockSpec(memory_space=pltpu.MemorySpace.VMEM)
    smem = pl.BlockSpec(memory_space=pltpu.MemorySpace.SMEM)

    # Single dispatch, no grid: every operand is VMEM-resident (<100 KiB total),
    # output is one lane-dense (N, 128) slab.
    logits_pad = pl.pallas_call(
        kernel,
        out_shape=jax.ShapeDtypeStruct((N, vpad), jnp.float32),
        in_specs=[smem] + [vmem] * 9,
        out_specs=vmem,
        scratch_shapes=[pltpu.VMEM((N, D), jnp.float32)],
    )(ids, params["tok_emb"], params["pos_emb"][:T],
      params["vecs"], params["wqkv"], params["wo"],
      params["w1"], params["w2"], params["final_ln"], params["w_out"])

    return logits_pad[:, :V].reshape(B, T, V)


# ----------------------------------- main --------------------------------------

if __name__ == "__main__":
    key = jax.random.PRNGKey(0)
    pkey, tkey = jax.random.split(key)

    params = init_params(CFG, pkey)

    B, T = 2, CFG["context_length"]
    tokens = jax.random.randint(tkey, (B, T), 0, CFG["vocab_size"], dtype=jnp.int32)

    logits = gpt_forward(tokens, params, CFG)
    jax.block_until_ready(logits)

    assert logits.shape == (B, T, CFG["vocab_size"])
    assert bool(jnp.all(jnp.isfinite(logits)))
    print("KERNEL_OK")
</pallas_src>

<mosaic_0001>
module attributes {stable_mosaic.version = 11 : i64} {
  func.func @gpt_kernel(%arg0: memref<16xi32, #tpu.memory_space<smem>>, %arg1: memref<64x32xf32, #tpu.memory_space<vmem>>, %arg2: memref<8x32xf32, #tpu.memory_space<vmem>>, %arg3: memref<2x8x128xf32, #tpu.memory_space<vmem>>, %arg4: memref<2x32x96xbf16, #tpu.memory_space<vmem>>, %arg5: memref<2x32x32xbf16, #tpu.memory_space<vmem>>, %arg6: memref<2x32x128xbf16, #tpu.memory_space<vmem>>, %arg7: memref<2x128x32xbf16, #tpu.memory_space<vmem>>, %arg8: memref<2x32xf32, #tpu.memory_space<vmem>>, %arg9: memref<32x128xbf16, #tpu.memory_space<vmem>>, %arg10: memref<16x128xf32, #tpu.memory_space<vmem>>, %arg11: memref<16x32xf32, #tpu.memory_space<vmem>>) attributes {dimension_semantics = [], scalar_prefetch = 0 : i64, scratch_operands = 1 : i64, tpu.core_type = #tpu.core_type<tc>} {
    %c0 = arith.constant 0 : index
    %0 = memref.load %arg0[%c0] : memref<16xi32, #tpu.memory_space<smem>>
    %1 = arith.index_cast %0 : i32 to index
    %c0_0 = arith.constant 0 : index
    %2 = vector.load %arg1[%1, %c0_0] : memref<64x32xf32, #tpu.memory_space<vmem>>, vector<1x32xf32>
    %c0_1 = arith.constant 0 : index
    %c0_2 = arith.constant 0 : index
    %3 = vector.load %arg2[%c0_1, %c0_2] : memref<8x32xf32, #tpu.memory_space<vmem>>, vector<1x32xf32>
    %4 = arith.addf %2, %3 : vector<1x32xf32>
    %c0_3 = arith.constant 0 : index
    %c0_4 = arith.constant 0 : index
    %5 = vector.load %arg11[%c0_3, %c0_4] : memref<16x32xf32, #tpu.memory_space<vmem>>, vector<1x32xf32>
    tpu.vector_store %arg11[%c0_3, %c0_4], %4 {strides = array<i32>} : memref<16x32xf32, #tpu.memory_space<vmem>>, vector<1x32xf32>,
    %c1 = arith.constant 1 : index
    %6 = memref.load %arg0[%c1] : memref<16xi32, #tpu.memory_space<smem>>
    %7 = arith.index_cast %6 : i32 to index
    %c0_5 = arith.constant 0 : index
    %8 = vector.load %arg1[%7, %c0_5] : memref<64x32xf32, #tpu.memory_space<vmem>>, vector<1x32xf32>
    %c1_6 = arith.constant 1 : index
    %c0_7 = arith.constant 0 : index
    %9 = vector.load %arg2[%c1_6, %c0_7] : memref<8x32xf32, #tpu.memory_space<vmem>>, vector<1x32xf32>
    %10 = arith.addf %8, %9 : vector<1x32xf32>
    %c1_8 = arith.constant 1 : index
    %c0_9 = arith.constant 0 : index
    %11 = vector.load %arg11[%c1_8, %c0_9] : memref<16x32xf32, #tpu.memory_space<vmem>>, vector<1x32xf32>
    tpu.vector_store %arg11[%c1_8, %c0_9], %10 {strides = array<i32>} : memref<16x32xf32, #tpu.memory_space<vmem>>, vector<1x32xf32>,
    %c2 = arith.constant 2 : index
    %12 = memref.load %arg0[%c2] : memref<16xi32, #tpu.memory_space<smem>>
    %13 = arith.index_cast %12 : i32 to index
    %c0_10 = arith.constant 0 : index
    %14 = vector.load %arg1[%13, %c0_10] : memref<64x32xf32, #tpu.memory_space<vmem>>, vector<1x32xf32>
    %c2_11 = arith.constant 2 : index
    %c0_12 = arith.constant 0 : index
    %15 = vector.load %arg2[%c2_11, %c0_12] : memref<8x32xf32, #tpu.memory_space<vmem>>, vector<1x32xf32>
    %16 = arith.addf %14, %15 : vector<1x32xf32>
    %c2_13 = arith.constant 2 : index
    %c0_14 = arith.constant 0 : index
    %17 = vector.load %arg11[%c2_13, %c0_14] : memref<16x32xf32, #tpu.memory_space<vmem>>, vector<1x32xf32>
    tpu.vector_store %arg11[%c2_13, %c0_14], %16 {strides = array<i32>} : memref<16x32xf32, #tpu.memory_space<vmem>>, vector<1x32xf32>,
    %c3 = arith.constant 3 : index
    %18 = memref.load %arg0[%c3] : memref<16xi32, #tpu.memory_space<smem>>
    %19 = arith.index_cast %18 : i32 to index
    %c0_15 = arith.constant 0 : index
    %20 = vector.load %arg1[%19, %c0_15] : memref<64x32xf32, #tpu.memory_space<vmem>>, vector<1x32xf32>
    %c3_16 = arith.constant 3 : index
    %c0_17 = arith.constant 0 : index
    %21 = vector.load %arg2[%c3_16, %c0_17] : memref<8x32xf32, #tpu.memory_space<vmem>>, vector<1x32xf32>
    %22 = arith.addf %20, %21 : vector<1x32xf32>
    %c3_18 = arith.constant 3 : index
    %c0_19 = arith.constant 0 : index
    %23 = vector.load %arg11[%c3_18, %c0_19] : memref<16x32xf32, #tpu.memory_space<vmem>>, vector<1x32xf32>
    tpu.vector_store %arg11[%c3_18, %c0_19], %22 {strides = array<i32>} : memref<16x32xf32, #tpu.memory_space<vmem>>, vector<1x32xf32>,
    %c4 = arith.constant 4 : index
    %24 = memref.load %arg0[%c4] : memref<16xi32, #tpu.memory_space<smem>>
    %25 = arith.index_cast %24 : i32 to index
    %c0_20 = arith.constant 0 : index
    %26 = vector.load %arg1[%25, %c0_20] : memref<64x32xf32, #tpu.memory_space<vmem>>, vector<1x32xf32>
    %c4_21 = arith.constant 4 : index
    %c0_22 = arith.constant 0 : index
    %27 = vector.load %arg2[%c4_21, %c0_22] : memref<8x32xf32, #tpu.memory_space<vmem>>, vector<1x32xf32>
    %28 = arith.addf %26, %27 : vector<1x32xf32>
    %c4_23 = arith.constant 4 : index
    %c0_24 = arith.constant 0 : index
    %29 = vector.load %arg11[%c4_23, %c0_24] : memref<16x32xf32, #tpu.memory_space<vmem>>, vector<1x32xf32>
    tpu.vector_store %arg11[%c4_23, %c0_24], %28 {strides = array<i32>} : memref<16x32xf32, #tpu.memory_space<vmem>>, vector<1x32xf32>,
    %c5 = arith.constant 5 : index
    %30 = memref.load %arg0[%c5] : memref<16xi32, #tpu.memory_space<smem>>
    %31 = arith.index_cast %30 : i32 to index
    %c0_25 = arith.constant 0 : index
    %32 = vector.load %arg1[%31, %c0_25] : memref<64x32xf32, #tpu.memory_space<vmem>>, vector<1x32xf32>
    %c5_26 = arith.constant 5 : index
    %c0_27 = arith.constant 0 : index
    %33 = vector.load %arg2[%c5_26, %c0_27] : memref<8x32xf32, #tpu.memory_space<vmem>>, vector<1x32xf32>
    %34 = arith.addf %32, %33 : vector<1x32xf32>
    %c5_28 = arith.constant 5 : index
    %c0_29 = arith.constant 0 : index
    %35 = vector.load %arg11[%c5_28, %c0_29] : memref<16x32xf32, #tpu.memory_space<vmem>>, vector<1x32xf32>
    tpu.vector_store %arg11[%c5_28, %c0_29], %34 {strides = array<i32>} : memref<16x32xf32, #tpu.memory_space<vmem>>, vector<1x32xf32>,
    %c6 = arith.constant 6 : index
    %36 = memref.load %arg0[%c6] : memref<16xi32, #tpu.memory_space<smem>>
    %37 = arith.index_cast %36 : i32 to index
    %c0_30 = arith.constant 0 : index
    %38 = vector.load %arg1[%37, %c0_30] : memref<64x32xf32, #tpu.memory_space<vmem>>, vector<1x32xf32>
    %c6_31 = arith.constant 6 : index
    %c0_32 = arith.constant 0 : index
    %39 = vector.load %arg2[%c6_31, %c0_32] : memref<8x32xf32, #tpu.memory_space<vmem>>, vector<1x32xf32>
    %40 = arith.addf %38, %39 : vector<1x32xf32>
    %c6_33 = arith.constant 6 : index
    %c0_34 = arith.constant 0 : index
    %41 = vector.load %arg11[%c6_33, %c0_34] : memref<16x32xf32, #tpu.memory_space<vmem>>, vector<1x32xf32>
    tpu.vector_store %arg11[%c6_33, %c0_34], %40 {strides = array<i32>} : memref<16x32xf32, #tpu.memory_space<vmem>>, vector<1x32xf32>,
    %c7 = arith.constant 7 : index
    %42 = memref.load %arg0[%c7] : memref<16xi32, #tpu.memory_space<smem>>
    %43 = arith.index_cast %42 : i32 to index
    %c0_35 = arith.constant 0 : index
    %44 = vector.load %arg1[%43, %c0_35] : memref<64x32xf32, #tpu.memory_space<vmem>>, vector<1x32xf32>
    %c7_36 = arith.constant 7 : index
    %c0_37 = arith.constant 0 : index
    %45 = vector.load %arg2[%c7_36, %c0_37] : memref<8x32xf32, #tpu.memory_space<vmem>>, vector<1x32xf32>
    %46 = arith.addf %44, %45 : vector<1x32xf32>
    %c7_38 = arith.constant 7 : index
    %c0_39 = arith.constant 0 : index
    %47 = vector.load %arg11[%c7_38, %c0_39] : memref<16x32xf32, #tpu.memory_space<vmem>>, vector<1x32xf32>
    tpu.vector_store %arg11[%c7_38, %c0_39], %46 {strides = array<i32>} : memref<16x32xf32, #tpu.memory_space<vmem>>, vector<1x32xf32>,
    %c8 = arith.constant 8 : index
    %48 = memref.load %arg0[%c8] : memref<16xi32, #tpu.memory_space<smem>>
    %49 = arith.index_cast %48 : i32 to index
    %c0_40 = arith.constant 0 : index
    %50 = vector.load %arg1[%49, %c0_40] : memref<64x32xf32, #tpu.memory_space<vmem>>, vector<1x32xf32>
    %c0_41 = arith.constant 0 : index
    %c0_42 = arith.constant 0 : index
    %51 = vector.load %arg2[%c0_41, %c0_42] : memref<8x32xf32, #tpu.memory_space<vmem>>, vector<1x32xf32>
    %52 = arith.addf %50, %51 : vector<1x32xf32>
    %c8_43 = arith.constant 8 : index
    %c0_44 = arith.constant 0 : index
    %53 = vector.load %arg11[%c8_43, %c0_44] : memref<16x32xf32, #tpu.memory_space<vmem>>, vector<1x32xf32>
    tpu.vector_store %arg11[%c8_43, %c0_44], %52 {strides = array<i32>} : memref<16x32xf32, #tpu.memory_space<vmem>>, vector<1x32xf32>,
    %c9 = arith.constant 9 : index
    %54 = memref.load %arg0[%c9] : memref<16xi32, #tpu.memory_space<smem>>
    %55 = arith.index_cast %54 : i32 to index
    %c0_45 = arith.constant 0 : index
    %56 = vector.load %arg1[%55, %c0_45] : memref<64x32xf32, #tpu.memory_space<vmem>>, vector<1x32xf32>
    %c1_46 = arith.constant 1 : index
    %c0_47 = arith.constant 0 : index
    %57 = vector.load %arg2[%c1_46, %c0_47] : memref<8x32xf32, #tpu.memory_space<vmem>>, vector<1x32xf32>
    %58 = arith.addf %56, %57 : vector<1x32xf32>
    %c9_48 = arith.constant 9 : index
    %c0_49 = arith.constant 0 : index
    %59 = vector.load %arg11[%c9_48, %c0_49] : memref<16x32xf32, #tpu.memory_space<vmem>>, vector<1x32xf32>
    tpu.vector_store %arg11[%c9_48, %c0_49], %58 {strides = array<i32>} : memref<16x32xf32, #tpu.memory_space<vmem>>, vector<1x32xf32>,
    %c10 = arith.constant 10 : index
    %60 = memref.load %arg0[%c10] : memref<16xi32, #tpu.memory_space<smem>>
    %61 = arith.index_cast %60 : i32 to index
    %c0_50 = arith.constant 0 : index
    %62 = vector.load %arg1[%61, %c0_50] : memref<64x32xf32, #tpu.memory_space<vmem>>, vector<1x32xf32>
    %c2_51 = arith.constant 2 : index
    %c0_52 = arith.constant 0 : index
    %63 = vector.load %arg2[%c2_51, %c0_52] : memref<8x32xf32, #tpu.memory_space<vmem>>, vector<1x32xf32>
    %64 = arith.addf %62, %63 : vector<1x32xf32>
    %c10_53 = arith.constant 10 : index
    %c0_54 = arith.constant 0 : index
    %65 = vector.load %arg11[%c10_53, %c0_54] : memref<16x32xf32, #tpu.memory_space<vmem>>, vector<1x32xf32>
    tpu.vector_store %arg11[%c10_53, %c0_54], %64 {strides = array<i32>} : memref<16x32xf32, #tpu.memory_space<vmem>>, vector<1x32xf32>,
    %c11 = arith.constant 11 : index
    %66 = memref.load %arg0[%c11] : memref<16xi32, #tpu.memory_space<smem>>
    %67 = arith.index_cast %66 : i32 to index
    %c0_55 = arith.constant 0 : index
    %68 = vector.load %arg1[%67, %c0_55] : memref<64x32xf32, #tpu.memory_space<vmem>>, vector<1x32xf32>
    %c3_56 = arith.constant 3 : index
    %c0_57 = arith.constant 0 : index
    %69 = vector.load %arg2[%c3_56, %c0_57] : memref<8x32xf32, #tpu.memory_space<vmem>>, vector<1x32xf32>
    %70 = arith.addf %68, %69 : vector<1x32xf32>
    %c11_58 = arith.constant 11 : index
    %c0_59 = arith.constant 0 : index
    %71 = vector.load %arg11[%c11_58, %c0_59] : memref<16x32xf32, #tpu.memory_space<vmem>>, vector<1x32xf32>
    tpu.vector_store %arg11[%c11_58, %c0_59], %70 {strides = array<i32>} : memref<16x32xf32, #tpu.memory_space<vmem>>, vector<1x32xf32>,
    %c12 = arith.constant 12 : index
    %72 = memref.load %arg0[%c12] : memref<16xi32, #tpu.memory_space<smem>>
    %73 = arith.index_cast %72 : i32 to index
    %c0_60 = arith.constant 0 : index
    %74 = vector.load %arg1[%73, %c0_60] : memref<64x32xf32, #tpu.memory_space<vmem>>, vector<1x32xf32>
    %c4_61 = arith.constant 4 : index
    %c0_62 = arith.constant 0 : index
    %75 = vector.load %arg2[%c4_61, %c0_62] : memref<8x32xf32, #tpu.memory_space<vmem>>, vector<1x32xf32>
    %76 = arith.addf %74, %75 : vector<1x32xf32>
    %c12_63 = arith.constant 12 : index
    %c0_64 = arith.constant 0 : index
    %77 = vector.load %arg11[%c12_63, %c0_64] : memref<16x32xf32, #tpu.memory_space<vmem>>, vector<1x32xf32>
    tpu.vector_store %arg11[%c12_63, %c0_64], %76 {strides = array<i32>} : memref<16x32xf32, #tpu.memory_space<vmem>>, vector<1x32xf32>,
    %c13 = arith.constant 13 : index
    %78 = memref.load %arg0[%c13] : memref<16xi32, #tpu.memory_space<smem>>
    %79 = arith.index_cast %78 : i32 to index
    %c0_65 = arith.constant 0 : index
    %80 = vector.load %arg1[%79, %c0_65] : memref<64x32xf32, #tpu.memory_space<vmem>>, vector<1x32xf32>
    %c5_66 = arith.constant 5 : index
    %c0_67 = arith.constant 0 : index
    %81 = vector.load %arg2[%c5_66, %c0_67] : memref<8x32xf32, #tpu.memory_space<vmem>>, vector<1x32xf32>
    %82 = arith.addf %80, %81 : vector<1x32xf32>
    %c13_68 = arith.constant 13 : index
    %c0_69 = arith.constant 0 : index
    %83 = vector.load %arg11[%c13_68, %c0_69] : memref<16x32xf32, #tpu.memory_space<vmem>>, vector<1x32xf32>
    tpu.vector_store %arg11[%c13_68, %c0_69], %82 {strides = array<i32>} : memref<16x32xf32, #tpu.memory_space<vmem>>, vector<1x32xf32>,
    %c14 = arith.constant 14 : index
    %84 = memref.load %arg0[%c14] : memref<16xi32, #tpu.memory_space<smem>>
    %85 = arith.index_cast %84 : i32 to index
    %c0_70 = arith.constant 0 : index
    %86 = vector.load %arg1[%85, %c0_70] : memref<64x32xf32, #tpu.memory_space<vmem>>, vector<1x32xf32>
    %c6_71 = arith.constant 6 : index
    %c0_72 = arith.constant 0 : index
    %87 = vector.load %arg2[%c6_71, %c0_72] : memref<8x32xf32, #tpu.memory_space<vmem>>, vector<1x32xf32>
    %88 = arith.addf %86, %87 : vector<1x32xf32>
    %c14_73 = arith.constant 14 : index
    %c0_74 = arith.constant 0 : index
    %89 = vector.load %arg11[%c14_73, %c0_74] : memref<16x32xf32, #tpu.memory_space<vmem>>, vector<1x32xf32>
    tpu.vector_store %arg11[%c14_73, %c0_74], %88 {strides = array<i32>} : memref<16x32xf32, #tpu.memory_space<vmem>>, vector<1x32xf32>,
    %c15 = arith.constant 15 : index
    %90 = memref.load %arg0[%c15] : memref<16xi32, #tpu.memory_space<smem>>
    %91 = arith.index_cast %90 : i32 to index
    %c0_75 = arith.constant 0 : index
    %92 = vector.load %arg1[%91, %c0_75] : memref<64x32xf32, #tpu.memory_space<vmem>>, vector<1x32xf32>
    %c7_76 = arith.constant 7 : index
    %c0_77 = arith.constant 0 : index
    %93 = vector.load %arg2[%c7_76, %c0_77] : memref<8x32xf32, #tpu.memory_space<vmem>>, vector<1x32xf32>
    %94 = arith.addf %92, %93 : vector<1x32xf32>
    %c15_78 = arith.constant 15 : index
    %c0_79 = arith.constant 0 : index
    %95 = vector.load %arg11[%c15_78, %c0_79] : memref<16x32xf32, #tpu.memory_space<vmem>>, vector<1x32xf32>
    tpu.vector_store %arg11[%c15_78, %c0_79], %94 {strides = array<i32>} : memref<16x32xf32, #tpu.memory_space<vmem>>, vector<1x32xf32>,
    %c0_80 = arith.constant 0 : index
    %c0_81 = arith.constant 0 : index
    %96 = vector.load %arg11[%c0_80, %c0_81] : memref<16x32xf32, #tpu.memory_space<vmem>>, vector<16x32xf32>
    %97 = tpu.iota {dimensions = array<i32: 1>} : vector<1x8x8xi32>
    %98 = tpu.iota {dimensions = array<i32: 2>} : vector<1x8x8xi32>
    %99 = arith.cmpi sge, %97, %98 : vector<1x8x8xi32>
    %cst = arith.constant 0.000000e+00 : f32
    %cst_82 = arith.constant -1.000000e+30 : f32
    %100 = vector.broadcast %cst : f32 to vector<1x8x8xf32>
    %101 = vector.broadcast %cst_82 : f32 to vector<1x8x8xf32>
    %102 = arith.select %99, %100, %101 : vector<1x8x8xi1>, vector<1x8x8xf32>
    %103 = tpu.iota {dimensions = array<i32: 2>} : vector<1x1x32xi32>
    %c0_i32 = arith.constant 0 : i32
    %104 = vector.broadcast %c0_i32 : i32 to vector<1x1x32xi32>
    %105 = arith.cmpi sge, %103, %104 : vector<1x1x32xi32>
    %c8_i32 = arith.constant 8 : i32
    %106 = vector.broadcast %c8_i32 : i32 to vector<1x1x32xi32>
    %107 = arith.cmpi slt, %103, %106 : vector<1x1x32xi32>
    %108 = arith.andi %105, %107 : vector<1x1x32xi1>
    %109 = arith.extui %108 : vector<1x1x32xi1> to vector<1x1x32xi32>
    %110 = arith.sitofp %109 : vector<1x1x32xi32> to vector<1x1x32xf32>
    %c8_i32_83 = arith.constant 8 : i32
    %111 = vector.broadcast %c8_i32_83 : i32 to vector<1x1x32xi32>
    %112 = arith.cmpi sge, %103, %111 : vector<1x1x32xi32>
    %c16_i32 = arith.constant 16 : i32
    %113 = vector.broadcast %c16_i32 : i32 to vector<1x1x32xi32>
    %114 = arith.cmpi slt, %103, %113 : vector<1x1x32xi32>
    %115 = arith.andi %112, %114 : vector<1x1x32xi1>
    %116 = arith.extui %115 : vector<1x1x32xi1> to vector<1x1x32xi32>
    %117 = arith.sitofp %116 : vector<1x1x32xi32> to vector<1x1x32xf32>
    %c16_i32_84 = arith.constant 16 : i32
    %118 = vector.broadcast %c16_i32_84 : i32 to vector<1x1x32xi32>
    %119 = arith.cmpi sge, %103, %118 : vector<1x1x32xi32>
    %c24_i32 = arith.constant 24 : i32
    %120 = vector.broadcast %c24_i32 : i32 to vector<1x1x32xi32>
    %121 = arith.cmpi slt, %103, %120 : vector<1x1x32xi32>
    %122 = arith.andi %119, %121 : vector<1x1x32xi1>
    %123 = arith.extui %122 : vector<1x1x32xi1> to vector<1x1x32xi32>
    %124 = arith.sitofp %123 : vector<1x1x32xi32> to vector<1x1x32xf32>
    %c24_i32_85 = arith.constant 24 : i32
    %125 = vector.broadcast %c24_i32_85 : i32 to vector<1x1x32xi32>
    %126 = arith.cmpi sge, %103, %125 : vector<1x1x32xi32>
    %c32_i32 = arith.constant 32 : i32
    %127 = vector.broadcast %c32_i32 : i32 to vector<1x1x32xi32>
    %128 = arith.cmpi slt, %103, %127 : vector<1x1x32xi32>
    %129 = arith.andi %126, %128 : vector<1x1x32xi1>
    %130 = arith.extui %129 : vector<1x1x32xi1> to vector<1x1x32xi32>
    %131 = arith.sitofp %130 : vector<1x1x32xi32> to vector<1x1x32xf32>
    %c0_86 = arith.constant 0 : index
    %c0_87 = arith.constant 0 : index
    %c0_88 = arith.constant 0 : index
    %132 = vector.load %arg3[%c0_86, %c0_87, %c0_88] : memref<2x8x128xf32, #tpu.memory_space<vmem>>, vector<1x8x128xf32>
    %133 = vector.shape_cast %132 : vector<1x8x128xf32> to vector<8x128xf32>
    %134 = vector.extract_strided_slice %133 {offsets = [0, 0], sizes = [1, 32], strides = [1, 1]} : vector<8x128xf32> to vector<1x32xf32>
    %135 = vector.extract_strided_slice %133 {offsets = [1, 0], sizes = [1, 32], strides = [1, 1]} : vector<8x128xf32> to vector<1x32xf32>
    %136 = vector.extract_strided_slice %133 {offsets = [2, 0], sizes = [1, 32], strides = [1, 1]} : vector<8x128xf32> to vector<1x32xf32>
    %137 = vector.extract_strided_slice %133 {offsets = [3, 0], sizes = [1, 32], strides = [1, 1]} : vector<8x128xf32> to vector<1x32xf32>
    %138 = vector.extract_strided_slice %133 {offsets = [4, 0], sizes = [1, 32], strides = [1, 1]} : vector<8x128xf32> to vector<1x32xf32>
    %139 = vector.extract_strided_slice %133 {offsets = [5, 0], sizes = [1, 32], strides = [1, 1]} : vector<8x128xf32> to vector<1x32xf32>
    %140 = vector.extract_strided_slice %133 {offsets = [6, 0], sizes = [1, 128], strides = [1, 1]} : vector<8x128xf32> to vector<1x128xf32>
    %cst_89 = arith.constant dense<0.000000e+00> : vector<16xf32>
    %141 = vector.multi_reduction <add>, %96, %cst_89 [1] : vector<16x32xf32> to vector<16xf32>
    %142 = vector.shape_cast %141 : vector<16xf32> to vector<16x1xf32>
    %cst_90 = arith.constant 3.200000e+01 : f32
    %143 = vector.broadcast %cst_90 : f32 to vector<16x1xf32>
    %144 = arith.divf %142, %143 : vector<16x1xf32>
    %145 = vector.broadcast %144 : vector<16x1xf32> to vector<16x32xf32>
    %146 = arith.subf %96, %145 : vector<16x32xf32>
    %147 = arith.mulf %146, %146 : vector<16x32xf32>
    %cst_91 = arith.constant dense<0.000000e+00> : vector<16xf32>
    %148 = vector.multi_reduction <add>, %147, %cst_91 [1] : vector<16x32xf32> to vector<16xf32>
    %149 = vector.shape_cast %148 : vector<16xf32> to vector<16x1xf32>
    %cst_92 = arith.constant 0.0322580636 : f32
    %150 = vector.broadcast %cst_92 : f32 to vector<16x1xf32>
    %151 = arith.mulf %149, %150 : vector<16x1xf32>
    %cst_93 = arith.constant 9.99999974E-6 : f32
    %152 = vector.broadcast %cst_93 : f32 to vector<16x1xf32>
    %153 = arith.addf %151, %152 : vector<16x1xf32>
    %154 = math.rsqrt %153 : vector<16x1xf32>
    %155 = vector.broadcast %154 : vector<16x1xf32> to vector<16x32xf32>
    %156 = arith.mulf %146, %155 : vector<16x32xf32>
    %157 = vector.broadcast %134 : vector<1x32xf32> to vector<16x32xf32>
    %158 = arith.mulf %157, %156 : vector<16x32xf32>
    %159 = vector.broadcast %135 : vector<1x32xf32> to vector<16x32xf32>
    %160 = arith.addf %158, %159 : vector<16x32xf32>
    %161 = arith.truncf %160 : vector<16x32xf32> to vector<16x32xbf16>
    %c0_94 = arith.constant 0 : index
    %c0_95 = arith.constant 0 : index
    %c0_96 = arith.constant 0 : index
    %162 = vector.load %arg4[%c0_94, %c0_95, %c0_96] : memref<2x32x96xbf16, #tpu.memory_space<vmem>>, vector<1x32x96xbf16>
    %163 = vector.shape_cast %162 : vector<1x32x96xbf16> to vector<32x96xbf16>
    %cst_97 = arith.constant dense<0.000000e+00> : vector<16x96xf32>
    %164 = tpu.matmul %161, %163, %cst_97 {dimension_numbers = #tpu.dot_dimension_numbers<[1], [0], [0], [1], [0, 0, 1, 1], [], []>} : vector<16x32xbf16>, vector<32x96xbf16>, vector<16x96xf32> -> vector<16x96xf32>
    %165 = vector.extract_strided_slice %164 {offsets = [0, 0], sizes = [16, 32], strides = [1, 1]} : vector<16x96xf32> to vector<16x32xf32>
    %166 = vector.shape_cast %165 : vector<16x32xf32> to vector<2x8x32xf32>
    %167 = vector.extract_strided_slice %164 {offsets = [0, 32], sizes = [16, 32], strides = [1, 1]} : vector<16x96xf32> to vector<16x32xf32>
    %168 = vector.shape_cast %167 : vector<16x32xf32> to vector<2x8x32xf32>
    %169 = vector.extract_strided_slice %164 {offsets = [0, 64], sizes = [16, 32], strides = [1, 1]} : vector<16x96xf32> to vector<16x32xf32>
    %170 = vector.shape_cast %169 : vector<16x32xf32> to vector<2x8x32xf32>
    %cst_98 = arith.constant 0.000000e+00 : f32
    %171 = vector.broadcast %cst_98 : f32 to vector<2x8x32xf32>
    %172 = vector.broadcast %110 : vector<1x1x32xf32> to vector<2x8x32xf32>
    %173 = arith.mulf %166, %172 : vector<2x8x32xf32>
    "tpu.trace_start"() <{level = 10 : i32, message = "bqd,bkd->bqk"}> : () -> ()
    %cst_99 = arith.constant dense<0.000000e+00> : vector<2x8x8xf32>
    %174 = tpu.matmul %173, %168, %cst_99 {dimension_numbers = #tpu.dot_dimension_numbers<[2], [2], [1], [1], [0, 0, 0, 1, 1, 1], [0], [0]>} : vector<2x8x32xf32>, vector<2x8x32xf32>, vector<2x8x8xf32> -> vector<2x8x8xf32>
    "tpu.trace_stop"() : () -> ()
    %cst_100 = arith.constant 0.353553385 : f32
    %175 = vector.broadcast %cst_100 : f32 to vector<2x8x8xf32>
    %176 = arith.mulf %174, %175 : vector<2x8x8xf32>
    %177 = vector.broadcast %102 : vector<1x8x8xf32> to vector<2x8x8xf32>
    %178 = arith.addf %176, %177 : vector<2x8x8xf32>
    %cst_101 = arith.constant dense<0xFF800000> : vector<2x8xf32>
    %179 = vector.multi_reduction <maximumf>, %178, %cst_101 [2] : vector<2x8x8xf32> to vector<2x8xf32>
    %180 = vector.shape_cast %179 : vector<2x8xf32> to vector<2x8x1xf32>
    %181 = vector.broadcast %180 : vector<2x8x1xf32> to vector<2x8x8xf32>
    %182 = arith.subf %178, %181 : vector<2x8x8xf32>
    %183 = math.exp %182 : vector<2x8x8xf32>
    %cst_102 = arith.constant dense<0.000000e+00> : vector<2x8xf32>
    %184 = vector.multi_reduction <add>, %183, %cst_102 [2] : vector<2x8x8xf32> to vector<2x8xf32>
    %185 = vector.shape_cast %184 : vector<2x8xf32> to vector<2x8x1xf32>
    %186 = tpu.reciprocal %185 {approx = true} : vector<2x8x1xf32> -> vector<2x8x1xf32>
    %187 = vector.broadcast %186 : vector<2x8x1xf32> to vector<2x8x8xf32>
    %188 = arith.mulf %183, %187 : vector<2x8x8xf32>
    %189 = vector.broadcast %110 : vector<1x1x32xf32> to vector<2x8x32xf32>
    %190 = arith.mulf %170, %189 : vector<2x8x32xf32>
    "tpu.trace_start"() <{level = 10 : i32, message = "bqk,bkd->bqd"}> : () -> ()
    %cst_103 = arith.constant dense<0.000000e+00> : vector<2x8x32xf32>
    %191 = tpu.matmul %188, %190, %cst_103 {dimension_numbers = #tpu.dot_dimension_numbers<[2], [1], [1], [2], [0, 0, 0, 1, 1, 2], [0], [0]>} : vector<2x8x8xf32>, vector<2x8x32xf32>, vector<2x8x32xf32> -> vector<2x8x32xf32>
    "tpu.trace_stop"() : () -> ()
    %192 = arith.addf %171, %191 : vector<2x8x32xf32>
    %193 = vector.broadcast %117 : vector<1x1x32xf32> to vector<2x8x32xf32>
    %194 = arith.mulf %166, %193 : vector<2x8x32xf32>
    "tpu.trace_start"() <{level = 10 : i32, message = "bqd,bkd->bqk"}> : () -> ()
    %cst_104 = arith.constant dense<0.000000e+00> : vector<2x8x8xf32>
    %195 = tpu.matmul %194, %168, %cst_104 {dimension_numbers = #tpu.dot_dimension_numbers<[2], [2], [1], [1], [0, 0, 0, 1, 1, 1], [0], [0]>} : vector<2x8x32xf32>, vector<2x8x32xf32>, vector<2x8x8xf32> -> vector<2x8x8xf32>
    "tpu.trace_stop"() : () -> ()
    %cst_105 = arith.constant 0.353553385 : f32
    %196 = vector.broadcast %cst_105 : f32 to vector<2x8x8xf32>
    %197 = arith.mulf %195, %196 : vector<2x8x8xf32>
    %198 = vector.broadcast %102 : vector<1x8x8xf32> to vector<2x8x8xf32>
    %199 = arith.addf %197, %198 : vector<2x8x8xf32>
    %cst_106 = arith.constant dense<0xFF800000> : vector<2x8xf32>
    %200 = vector.multi_reduction <maximumf>, %199, %cst_106 [2] : vector<2x8x8xf32> to vector<2x8xf32>
    %201 = vector.shape_cast %200 : vector<2x8xf32> to vector<2x8x1xf32>
    %202 = vector.broadcast %201 : vector<2x8x1xf32> to vector<2x8x8xf32>
    %203 = arith.subf %199, %202 : vector<2x8x8xf32>
    %204 = math.exp %203 : vector<2x8x8xf32>
    %cst_107 = arith.constant dense<0.000000e+00> : vector<2x8xf32>
    %205 = vector.multi_reduction <add>, %204, %cst_107 [2] : vector<2x8x8xf32> to vector<2x8xf32>
    %206 = vector.shape_cast %205 : vector<2x8xf32> to vector<2x8x1xf32>
    %207 = tpu.reciprocal %206 {approx = true} : vector<2x8x1xf32> -> vector<2x8x1xf32>
    %208 = vector.broadcast %207 : vector<2x8x1xf32> to vector<2x8x8xf32>
    %209 = arith.mulf %204, %208 : vector<2x8x8xf32>
    %210 = vector.broadcast %117 : vector<1x1x32xf32> to vector<2x8x32xf32>
    %211 = arith.mulf %170, %210 : vector<2x8x32xf32>
    "tpu.trace_start"() <{level = 10 : i32, message = "bqk,bkd->bqd"}> : () -> ()
    %cst_108 = arith.constant dense<0.000000e+00> : vector<2x8x32xf32>
    %212 = tpu.matmul %209, %211, %cst_108 {dimension_numbers = #tpu.dot_dimension_numbers<[2], [1], [1], [2], [0, 0, 0, 1, 1, 2], [0], [0]>} : vector<2x8x8xf32>, vector<2x8x32xf32>, vector<2x8x32xf32> -> vector<2x8x32xf32>
    "tpu.trace_stop"() : () -> ()
    %213 = arith.addf %192, %212 : vector<2x8x32xf32>
    %214 = vector.broadcast %124 : vector<1x1x32xf32> to vector<2x8x32xf32>
    %215 = arith.mulf %166, %214 : vector<2x8x32xf32>
    "tpu.trace_start"() <{level = 10 : i32, message = "bqd,bkd->bqk"}> : () -> ()
    %cst_109 = arith.constant dense<0.000000e+00> : vector<2x8x8xf32>
    %216 = tpu.matmul %215, %168, %cst_109 {dimension_numbers = #tpu.dot_dimension_numbers<[2], [2], [1], [1], [0, 0, 0, 1, 1, 1], [0], [0]>} : vector<2x8x32xf32>, vector<2x8x32xf32>, vector<2x8x8xf32> -> vector<2x8x8xf32>
    "tpu.trace_stop"() : () -> ()
    %cst_110 = arith.constant 0.353553385 : f32
    %217 = vector.broadcast %cst_110 : f32 to vector<2x8x8xf32>
    %218 = arith.mulf %216, %217 : vector<2x8x8xf32>
    %219 = vector.broadcast %102 : vector<1x8x8xf32> to vector<2x8x8xf32>
    %220 = arith.addf %218, %219 : vector<2x8x8xf32>
    %cst_111 = arith.constant dense<0xFF800000> : vector<2x8xf32>
    %221 = vector.multi_reduction <maximumf>, %220, %cst_111 [2] : vector<2x8x8xf32> to vector<2x8xf32>
    %222 = vector.shape_cast %221 : vector<2x8xf32> to vector<2x8x1xf32>
    %223 = vector.broadcast %222 : vector<2x8x1xf32> to vector<2x8x8xf32>
    %224 = arith.subf %220, %223 : vector<2x8x8xf32>
    %225 = math.exp %224 : vector<2x8x8xf32>
    %cst_112 = arith.constant dense<0.000000e+00> : vector<2x8xf32>
    %226 = vector.multi_reduction <add>, %225, %cst_112 [2] : vector<2x8x8xf32> to vector<2x8xf32>
    %227 = vector.shape_cast %226 : vector<2x8xf32> to vector<2x8x1xf32>
    %228 = tpu.reciprocal %227 {approx = true} : vector<2x8x1xf32> -> vector<2x8x1xf32>
    %229 = vector.broadcast %228 : vector<2x8x1xf32> to vector<2x8x8xf32>
    %230 = arith.mulf %225, %229 : vector<2x8x8xf32>
    %231 = vector.broadcast %124 : vector<1x1x32xf32> to vector<2x8x32xf32>
    %232 = arith.mulf %170, %231 : vector<2x8x32xf32>
    "tpu.trace_start"() <{level = 10 : i32, message = "bqk,bkd->bqd"}> : () -> ()
    %cst_113 = arith.constant dense<0.000000e+00> : vector<2x8x32xf32>
    %233 = tpu.matmul %230, %232, %cst_113 {dimension_numbers = #tpu.dot_dimension_numbers<[2], [1], [1], [2], [0, 0, 0, 1, 1, 2], [0], [0]>} : vector<2x8x8xf32>, vector<2x8x32xf32>, vector<2x8x32xf32> -> vector<2x8x32xf32>
    "tpu.trace_stop"() : () -> ()
    %234 = arith.addf %213, %233 : vector<2x8x32xf32>
    %235 = vector.broadcast %131 : vector<1x1x32xf32> to vector<2x8x32xf32>
    %236 = arith.mulf %166, %235 : vector<2x8x32xf32>
    "tpu.trace_start"() <{level = 10 : i32, message = "bqd,bkd->bqk"}> : () -> ()
    %cst_114 = arith.constant dense<0.000000e+00> : vector<2x8x8xf32>
    %237 = tpu.matmul %236, %168, %cst_114 {dimension_numbers = #tpu.dot_dimension_numbers<[2], [2], [1], [1], [0, 0, 0, 1, 1, 1], [0], [0]>} : vector<2x8x32xf32>, vector<2x8x32xf32>, vector<2x8x8xf32> -> vector<2x8x8xf32>
    "tpu.trace_stop"() : () -> ()
    %cst_115 = arith.constant 0.353553385 : f32
    %238 = vector.broadcast %cst_115 : f32 to vector<2x8x8xf32>
    %239 = arith.mulf %237, %238 : vector<2x8x8xf32>
    %240 = vector.broadcast %102 : vector<1x8x8xf32> to vector<2x8x8xf32>
    %241 = arith.addf %239, %240 : vector<2x8x8xf32>
    %cst_116 = arith.constant dense<0xFF800000> : vector<2x8xf32>
    %242 = vector.multi_reduction <maximumf>, %241, %cst_116 [2] : vector<2x8x8xf32> to vector<2x8xf32>
    %243 = vector.shape_cast %242 : vector<2x8xf32> to vector<2x8x1xf32>
    %244 = vector.broadcast %243 : vector<2x8x1xf32> to vector<2x8x8xf32>
    %245 = arith.subf %241, %244 : vector<2x8x8xf32>
    %246 = math.exp %245 : vector<2x8x8xf32>
    %cst_117 = arith.constant dense<0.000000e+00> : vector<2x8xf32>
    %247 = vector.multi_reduction <add>, %246, %cst_117 [2] : vector<2x8x8xf32> to vector<2x8xf32>
    %248 = vector.shape_cast %247 : vector<2x8xf32> to vector<2x8x1xf32>
    %249 = tpu.reciprocal %248 {approx = true} : vector<2x8x1xf32> -> vector<2x8x1xf32>
    %250 = vector.broadcast %249 : vector<2x8x1xf32> to vector<2x8x8xf32>
    %251 = arith.mulf %246, %250 : vector<2x8x8xf32>
    %252 = vector.broadcast %131 : vector<1x1x32xf32> to vector<2x8x32xf32>
    %253 = arith.mulf %170, %252 : vector<2x8x32xf32>
    "tpu.trace_start"() <{level = 10 : i32, message = "bqk,bkd->bqd"}> : () -> ()
    %cst_118 = arith.constant dense<0.000000e+00> : vector<2x8x32xf32>
    %254 = tpu.matmul %251, %253, %cst_118 {dimension_numbers = #tpu.dot_dimension_numbers<[2], [1], [1], [2], [0, 0, 0, 1, 1, 2], [0], [0]>} : vector<2x8x8xf32>, vector<2x8x32xf32>, vector<2x8x32xf32> -> vector<2x8x32xf32>
    "tpu.trace_stop"() : () -> ()
    %255 = arith.addf %234, %254 : vector<2x8x32xf32>
    %256 = vector.shape_cast %255 : vector<2x8x32xf32> to vector<16x32xf32>
    %257 = arith.truncf %256 : vector<16x32xf32> to vector<16x32xbf16>
    %c0_119 = arith.constant 0 : index
    %c0_120 = arith.constant 0 : index
    %c0_121 = arith.constant 0 : index
    %258 = vector.load %arg5[%c0_119, %c0_120, %c0_121] : memref<2x32x32xbf16, #tpu.memory_space<vmem>>, vector<1x32x32xbf16>
    %259 = vector.shape_cast %258 : vector<1x32x32xbf16> to vector<32x32xbf16>
    %cst_122 = arith.constant dense<0.000000e+00> : vector<16x32xf32>
    %260 = tpu.matmul %257, %259, %cst_122 {dimension_numbers = #tpu.dot_dimension_numbers<[1], [0], [0], [1], [0, 0, 1, 1], [], []>} : vector<16x32xbf16>, vector<32x32xbf16>, vector<16x32xf32> -> vector<16x32xf32>
    %261 = vector.broadcast %138 : vector<1x32xf32> to vector<16x32xf32>
    %262 = arith.addf %260, %261 : vector<16x32xf32>
    %263 = arith.addf %262, %96 : vector<16x32xf32>
    %cst_123 = arith.constant dense<0.000000e+00> : vector<16xf32>
    %264 = vector.multi_reduction <add>, %263, %cst_123 [1] : vector<16x32xf32> to vector<16xf32>
    %265 = vector.shape_cast %264 : vector<16xf32> to vector<16x1xf32>
    %cst_124 = arith.constant 3.200000e+01 : f32
    %266 = vector.broadcast %cst_124 : f32 to vector<16x1xf32>
    %267 = arith.divf %265, %266 : vector<16x1xf32>
    %268 = vector.broadcast %267 : vector<16x1xf32> to vector<16x32xf32>
    %269 = arith.subf %263, %268 : vector<16x32xf32>
    %270 = arith.mulf %269, %269 : vector<16x32xf32>
    %cst_125 = arith.constant dense<0.000000e+00> : vector<16xf32>
    %271 = vector.multi_reduction <add>, %270, %cst_125 [1] : vector<16x32xf32> to vector<16xf32>
    %272 = vector.shape_cast %271 : vector<16xf32> to vector<16x1xf32>
    %cst_126 = arith.constant 0.0322580636 : f32
    %273 = vector.broadcast %cst_126 : f32 to vector<16x1xf32>
    %274 = arith.mulf %272, %273 : vector<16x1xf32>
    %cst_127 = arith.constant 9.99999974E-6 : f32
    %275 = vector.broadcast %cst_127 : f32 to vector<16x1xf32>
    %276 = arith.addf %274, %275 : vector<16x1xf32>
    %277 = math.rsqrt %276 : vector<16x1xf32>
    %278 = vector.broadcast %277 : vector<16x1xf32> to vector<16x32xf32>
    %279 = arith.mulf %269, %278 : vector<16x32xf32>
    %280 = vector.broadcast %136 : vector<1x32xf32> to vector<16x32xf32>
    %281 = arith.mulf %280, %279 : vector<16x32xf32>
    %282 = vector.broadcast %137 : vector<1x32xf32> to vector<16x32xf32>
    %283 = arith.addf %281, %282 : vector<16x32xf32>
    %284 = arith.truncf %283 : vector<16x32xf32> to vector<16x32xbf16>
    %c0_128 = arith.constant 0 : index
    %c0_129 = arith.constant 0 : index
    %c0_130 = arith.constant 0 : index
    %285 = vector.load %arg6[%c0_128, %c0_129, %c0_130] : memref<2x32x128xbf16, #tpu.memory_space<vmem>>, vector<1x32x128xbf16>
    %286 = vector.shape_cast %285 : vector<1x32x128xbf16> to vector<32x128xbf16>
    %cst_131 = arith.constant dense<0.000000e+00> : vector<16x128xf32>
    %287 = tpu.matmul %284, %286, %cst_131 {dimension_numbers = #tpu.dot_dimension_numbers<[1], [0], [0], [1], [0, 0, 1, 1], [], []>} : vector<16x32xbf16>, vector<32x128xbf16>, vector<16x128xf32> -> vector<16x128xf32>
    %288 = vector.broadcast %140 : vector<1x128xf32> to vector<16x128xf32>
    %289 = arith.addf %287, %288 : vector<16x128xf32>
    %cst_132 = arith.constant 5.000000e-01 : f32
    %290 = vector.broadcast %cst_132 : f32 to vector<16x128xf32>
    %291 = arith.mulf %290, %289 : vector<16x128xf32>
    %cst_133 = arith.constant 4.471500e-02 : f32
    %292 = vector.broadcast %cst_133 : f32 to vector<16x128xf32>
    %293 = arith.mulf %292, %289 : vector<16x128xf32>
    %294 = arith.mulf %293, %289 : vector<16x128xf32>
    %295 = arith.mulf %294, %289 : vector<16x128xf32>
    %296 = arith.addf %289, %295 : vector<16x128xf32>
    %cst_134 = arith.constant 0.797884583 : f32
    %297 = vector.broadcast %cst_134 : f32 to vector<16x128xf32>
    %298 = arith.mulf %297, %296 : vector<16x128xf32>
    %299 = math.tanh %298 : vector<16x128xf32>
    %cst_135 = arith.constant 1.000000e+00 : f32
    %300 = vector.broadcast %cst_135 : f32 to vector<16x128xf32>
    %301 = arith.addf %300, %299 : vector<16x128xf32>
    %302 = arith.mulf %291, %301 : vector<16x128xf32>
    %303 = arith.truncf %302 : vector<16x128xf32> to vector<16x128xbf16>
    %c0_136 = arith.constant 0 : index
    %c0_137 = arith.constant 0 : index
    %c0_138 = arith.constant 0 : index
    %304 = vector.load %arg7[%c0_136, %c0_137, %c0_138] : memref<2x128x32xbf16, #tpu.memory_space<vmem>>, vector<1x128x32xbf16>
    %305 = vector.shape_cast %304 : vector<1x128x32xbf16> to vector<128x32xbf16>
    %cst_139 = arith.constant dense<0.000000e+00> : vector<16x32xf32>
    %306 = tpu.matmul %303, %305, %cst_139 {dimension_numbers = #tpu.dot_dimension_numbers<[1], [0], [0], [1], [0, 0, 1, 1], [], []>} : vector<16x128xbf16>, vector<128x32xbf16>, vector<16x32xf32> -> vector<16x32xf32>
    %307 = vector.broadcast %139 : vector<1x32xf32> to vector<16x32xf32>
    %308 = arith.addf %306, %307 : vector<16x32xf32>
    %309 = arith.addf %308, %263 : vector<16x32xf32>
    %c1_140 = arith.constant 1 : index
    %c0_141 = arith.constant 0 : index
    %c0_142 = arith.constant 0 : index
    %310 = vector.load %arg3[%c1_140, %c0_141, %c0_142] : memref<2x8x128xf32, #tpu.memory_space<vmem>>, vector<1x8x128xf32>
    %311 = vector.shape_cast %310 : vector<1x8x128xf32> to vector<8x128xf32>
    %312 = vector.extract_strided_slice %311 {offsets = [0, 0], sizes = [1, 32], strides = [1, 1]} : vector<8x128xf32> to vector<1x32xf32>
    %313 = vector.extract_strided_slice %311 {offsets = [1, 0], sizes = [1, 32], strides = [1, 1]} : vector<8x128xf32> to vector<1x32xf32>
    %314 = vector.extract_strided_slice %311 {offsets = [2, 0], sizes = [1, 32], strides = [1, 1]} : vector<8x128xf32> to vector<1x32xf32>
    %315 = vector.extract_strided_slice %311 {offsets = [3, 0], sizes = [1, 32], strides = [1, 1]} : vector<8x128xf32> to vector<1x32xf32>
    %316 = vector.extract_strided_slice %311 {offsets = [4, 0], sizes = [1, 32], strides = [1, 1]} : vector<8x128xf32> to vector<1x32xf32>
    %317 = vector.extract_strided_slice %311 {offsets = [5, 0], sizes = [1, 32], strides = [1, 1]} : vector<8x128xf32> to vector<1x32xf32>
    %318 = vector.extract_strided_slice %311 {offsets = [6, 0], sizes = [1, 128], strides = [1, 1]} : vector<8x128xf32> to vector<1x128xf32>
    %cst_143 = arith.constant dense<0.000000e+00> : vector<16xf32>
    %319 = vector.multi_reduction <add>, %309, %cst_143 [1] : vector<16x32xf32> to vector<16xf32>
    %320 = vector.shape_cast %319 : vector<16xf32> to vector<16x1xf32>
    %cst_144 = arith.constant 3.200000e+01 : f32
    %321 = vector.broadcast %cst_144 : f32 to vector<16x1xf32>
    %322 = arith.divf %320, %321 : vector<16x1xf32>
    %323 = vector.broadcast %322 : vector<16x1xf32> to vector<16x32xf32>
    %324 = arith.subf %309, %323 : vector<16x32xf32>
    %325 = arith.mulf %324, %324 : vector<16x32xf32>
    %cst_145 = arith.constant dense<0.000000e+00> : vector<16xf32>
    %326 = vector.multi_reduction <add>, %325, %cst_145 [1] : vector<16x32xf32> to vector<16xf32>
    %327 = vector.shape_cast %326 : vector<16xf32> to vector<16x1xf32>
    %cst_146 = arith.constant 0.0322580636 : f32
    %328 = vector.broadcast %cst_146 : f32 to vector<16x1xf32>
    %329 = arith.mulf %327, %328 : vector<16x1xf32>
    %cst_147 = arith.constant 9.99999974E-6 : f32
    %330 = vector.broadcast %cst_147 : f32 to vector<16x1xf32>
    %331 = arith.addf %329, %330 : vector<16x1xf32>
    %332 = math.rsqrt %331 : vector<16x1xf32>
    %333 = vector.broadcast %332 : vector<16x1xf32> to vector<16x32xf32>
    %334 = arith.mulf %324, %333 : vector<16x32xf32>
    %335 = vector.broadcast %312 : vector<1x32xf32> to vector<16x32xf32>
    %336 = arith.mulf %335, %334 : vector<16x32xf32>
    %337 = vector.broadcast %313 : vector<1x32xf32> to vector<16x32xf32>
    %338 = arith.addf %336, %337 : vector<16x32xf32>
    %339 = arith.truncf %338 : vector<16x32xf32> to vector<16x32xbf16>
    %c1_148 = arith.constant 1 : index
    %c0_149 = arith.constant 0 : index
    %c0_150 = arith.constant 0 : index
    %340 = vector.load %arg4[%c1_148, %c0_149, %c0_150] : memref<2x32x96xbf16, #tpu.memory_space<vmem>>, vector<1x32x96xbf16>
    %341 = vector.shape_cast %340 : vector<1x32x96xbf16> to vector<32x96xbf16>
    %cst_151 = arith.constant dense<0.000000e+00> : vector<16x96xf32>
    %342 = tpu.matmul %339, %341, %cst_151 {dimension_numbers = #tpu.dot_dimension_numbers<[1], [0], [0], [1], [0, 0, 1, 1], [], []>} : vector<16x32xbf16>, vector<32x96xbf16>, vector<16x96xf32> -> vector<16x96xf32>
    %343 = vector.extract_strided_slice %342 {offsets = [0, 0], sizes = [16, 32], strides = [1, 1]} : vector<16x96xf32> to vector<16x32xf32>
    %344 = vector.shape_cast %343 : vector<16x32xf32> to vector<2x8x32xf32>
    %345 = vector.extract_strided_slice %342 {offsets = [0, 32], sizes = [16, 32], strides = [1, 1]} : vector<16x96xf32> to vector<16x32xf32>
    %346 = vector.shape_cast %345 : vector<16x32xf32> to vector<2x8x32xf32>
    %347 = vector.extract_strided_slice %342 {offsets = [0, 64], sizes = [16, 32], strides = [1, 1]} : vector<16x96xf32> to vector<16x32xf32>
    %348 = vector.shape_cast %347 : vector<16x32xf32> to vector<2x8x32xf32>
    %cst_152 = arith.constant 0.000000e+00 : f32
    %349 = vector.broadcast %cst_152 : f32 to vector<2x8x32xf32>
    %350 = vector.broadcast %110 : vector<1x1x32xf32> to vector<2x8x32xf32>
    %351 = arith.mulf %344, %350 : vector<2x8x32xf32>
    "tpu.trace_start"() <{level = 10 : i32, message = "bqd,bkd->bqk"}> : () -> ()
    %cst_153 = arith.constant dense<0.000000e+00> : vector<2x8x8xf32>
    %352 = tpu.matmul %351, %346, %cst_153 {dimension_numbers = #tpu.dot_dimension_numbers<[2], [2], [1], [1], [0, 0, 0, 1, 1, 1], [0], [0]>} : vector<2x8x32xf32>, vector<2x8x32xf32>, vector<2x8x8xf32> -> vector<2x8x8xf32>
    "tpu.trace_stop"() : () -> ()
    %cst_154 = arith.constant 0.353553385 : f32
    %353 = vector.broadcast %cst_154 : f32 to vector<2x8x8xf32>
    %354 = arith.mulf %352, %353 : vector<2x8x8xf32>
    %355 = vector.broadcast %102 : vector<1x8x8xf32> to vector<2x8x8xf32>
    %356 = arith.addf %354, %355 : vector<2x8x8xf32>
    %cst_155 = arith.constant dense<0xFF800000> : vector<2x8xf32>
    %357 = vector.multi_reduction <maximumf>, %356, %cst_155 [2] : vector<2x8x8xf32> to vector<2x8xf32>
    %358 = vector.shape_cast %357 : vector<2x8xf32> to vector<2x8x1xf32>
    %359 = vector.broadcast %358 : vector<2x8x1xf32> to vector<2x8x8xf32>
    %360 = arith.subf %356, %359 : vector<2x8x8xf32>
    %361 = math.exp %360 : vector<2x8x8xf32>
    %cst_156 = arith.constant dense<0.000000e+00> : vector<2x8xf32>
    %362 = vector.multi_reduction <add>, %361, %cst_156 [2] : vector<2x8x8xf32> to vector<2x8xf32>
    %363 = vector.shape_cast %362 : vector<2x8xf32> to vector<2x8x1xf32>
    %364 = tpu.reciprocal %363 {approx = true} : vector<2x8x1xf32> -> vector<2x8x1xf32>
    %365 = vector.broadcast %364 : vector<2x8x1xf32> to vector<2x8x8xf32>
    %366 = arith.mulf %361, %365 : vector<2x8x8xf32>
    %367 = vector.broadcast %110 : vector<1x1x32xf32> to vector<2x8x32xf32>
    %368 = arith.mulf %348, %367 : vector<2x8x32xf32>
    "tpu.trace_start"() <{level = 10 : i32, message = "bqk,bkd->bqd"}> : () -> ()
    %cst_157 = arith.constant dense<0.000000e+00> : vector<2x8x32xf32>
    %369 = tpu.matmul %366, %368, %cst_157 {dimension_numbers = #tpu.dot_dimension_numbers<[2], [1], [1], [2], [0, 0, 0, 1, 1, 2], [0], [0]>} : vector<2x8x8xf32>, vector<2x8x32xf32>, vector<2x8x32xf32> -> vector<2x8x32xf32>
    "tpu.trace_stop"() : () -> ()
    %370 = arith.addf %349, %369 : vector<2x8x32xf32>
    %371 = vector.broadcast %117 : vector<1x1x32xf32> to vector<2x8x32xf32>
    %372 = arith.mulf %344, %371 : vector<2x8x32xf32>
    "tpu.trace_start"() <{level = 10 : i32, message = "bqd,bkd->bqk"}> : () -> ()
    %cst_158 = arith.constant dense<0.000000e+00> : vector<2x8x8xf32>
    %373 = tpu.matmul %372, %346, %cst_158 {dimension_numbers = #tpu.dot_dimension_numbers<[2], [2], [1], [1], [0, 0, 0, 1, 1, 1], [0], [0]>} : vector<2x8x32xf32>, vector<2x8x32xf32>, vector<2x8x8xf32> -> vector<2x8x8xf32>
    "tpu.trace_stop"() : () -> ()
    %cst_159 = arith.constant 0.353553385 : f32
    %374 = vector.broadcast %cst_159 : f32 to vector<2x8x8xf32>
    %375 = arith.mulf %373, %374 : vector<2x8x8xf32>
    %376 = vector.broadcast %102 : vector<1x8x8xf32> to vector<2x8x8xf32>
    %377 = arith.addf %375, %376 : vector<2x8x8xf32>
    %cst_160 = arith.constant dense<0xFF800000> : vector<2x8xf32>
    %378 = vector.multi_reduction <maximumf>, %377, %cst_160 [2] : vector<2x8x8xf32> to vector<2x8xf32>
    %379 = vector.shape_cast %378 : vector<2x8xf32> to vector<2x8x1xf32>
    %380 = vector.broadcast %379 : vector<2x8x1xf32> to vector<2x8x8xf32>
    %381 = arith.subf %377, %380 : vector<2x8x8xf32>
    %382 = math.exp %381 : vector<2x8x8xf32>
    %cst_161 = arith.constant dense<0.000000e+00> : vector<2x8xf32>
    %383 = vector.multi_reduction <add>, %382, %cst_161 [2] : vector<2x8x8xf32> to vector<2x8xf32>
    %384 = vector.shape_cast %383 : vector<2x8xf32> to vector<2x8x1xf32>
    %385 = tpu.reciprocal %384 {approx = true} : vector<2x8x1xf32> -> vector<2x8x1xf32>
    %386 = vector.broadcast %385 : vector<2x8x1xf32> to vector<2x8x8xf32>
    %387 = arith.mulf %382, %386 : vector<2x8x8xf32>
    %388 = vector.broadcast %117 : vector<1x1x32xf32> to vector<2x8x32xf32>
    %389 = arith.mulf %348, %388 : vector<2x8x32xf32>
    "tpu.trace_start"() <{level = 10 : i32, message = "bqk,bkd->bqd"}> : () -> ()
    %cst_162 = arith.constant dense<0.000000e+00> : vector<2x8x32xf32>
    %390 = tpu.matmul %387, %389, %cst_162 {dimension_numbers = #tpu.dot_dimension_numbers<[2], [1], [1], [2], [0, 0, 0, 1, 1, 2], [0], [0]>} : vector<2x8x8xf32>, vector<2x8x32xf32>, vector<2x8x32xf32> -> vector<2x8x32xf32>
    "tpu.trace_stop"() : () -> ()
    %391 = arith.addf %370, %390 : vector<2x8x32xf32>
    %392 = vector.broadcast %124 : vector<1x1x32xf32> to vector<2x8x32xf32>
    %393 = arith.mulf %344, %392 : vector<2x8x32xf32>
    "tpu.trace_start"() <{level = 10 : i32, message = "bqd,bkd->bqk"}> : () -> ()
    %cst_163 = arith.constant dense<0.000000e+00> : vector<2x8x8xf32>
    %394 = tpu.matmul %393, %346, %cst_163 {dimension_numbers = #tpu.dot_dimension_numbers<[2], [2], [1], [1], [0, 0, 0, 1, 1, 1], [0], [0]>} : vector<2x8x32xf32>, vector<2x8x32xf32>, vector<2x8x8xf32> -> vector<2x8x8xf32>
    "tpu.trace_stop"() : () -> ()
    %cst_164 = arith.constant 0.353553385 : f32
    %395 = vector.broadcast %cst_164 : f32 to vector<2x8x8xf32>
    %396 = arith.mulf %394, %395 : vector<2x8x8xf32>
    %397 = vector.broadcast %102 : vector<1x8x8xf32> to vector<2x8x8xf32>
    %398 = arith.addf %396, %397 : vector<2x8x8xf32>
    %cst_165 = arith.constant dense<0xFF800000> : vector<2x8xf32>
    %399 = vector.multi_reduction <maximumf>, %398, %cst_165 [2] : vector<2x8x8xf32> to vector<2x8xf32>
    %400 = vector.shape_cast %399 : vector<2x8xf32> to vector<2x8x1xf32>
    %401 = vector.broadcast %400 : vector<2x8x1xf32> to vector<2x8x8xf32>
    %402 = arith.subf %398, %401 : vector<2x8x8xf32>
    %403 = math.exp %402 : vector<2x8x8xf32>
    %cst_166 = arith.constant dense<0.000000e+00> : vector<2x8xf32>
    %404 = vector.multi_reduction <add>, %403, %cst_166 [2] : vector<2x8x8xf32> to vector<2x8xf32>
    %405 = vector.shape_cast %404 : vector<2x8xf32> to vector<2x8x1xf32>
    %406 = tpu.reciprocal %405 {approx = true} : vector<2x8x1xf32> -> vector<2x8x1xf32>
    %407 = vector.broadcast %406 : vector<2x8x1xf32> to vector<2x8x8xf32>
    %408 = arith.mulf %403, %407 : vector<2x8x8xf32>
    %409 = vector.broadcast %124 : vector<1x1x32xf32> to vector<2x8x32xf32>
    %410 = arith.mulf %348, %409 : vector<2x8x32xf32>
    "tpu.trace_start"() <{level = 10 : i32, message = "bqk,bkd->bqd"}> : () -> ()
    %cst_167 = arith.constant dense<0.000000e+00> : vector<2x8x32xf32>
    %411 = tpu.matmul %408, %410, %cst_167 {dimension_numbers = #tpu.dot_dimension_numbers<[2], [1], [1], [2], [0, 0, 0, 1, 1, 2], [0], [0]>} : vector<2x8x8xf32>, vector<2x8x32xf32>, vector<2x8x32xf32> -> vector<2x8x32xf32>
    "tpu.trace_stop"() : () -> ()
    %412 = arith.addf %391, %411 : vector<2x8x32xf32>
    %413 = vector.broadcast %131 : vector<1x1x32xf32> to vector<2x8x32xf32>
    %414 = arith.mulf %344, %413 : vector<2x8x32xf32>
    "tpu.trace_start"() <{level = 10 : i32, message = "bqd,bkd->bqk"}> : () -> ()
    %cst_168 = arith.constant dense<0.000000e+00> : vector<2x8x8xf32>
    %415 = tpu.matmul %414, %346, %cst_168 {dimension_numbers = #tpu.dot_dimension_numbers<[2], [2], [1], [1], [0, 0, 0, 1, 1, 1], [0], [0]>} : vector<2x8x32xf32>, vector<2x8x32xf32>, vector<2x8x8xf32> -> vector<2x8x8xf32>
    "tpu.trace_stop"() : () -> ()
    %cst_169 = arith.constant 0.353553385 : f32
    %416 = vector.broadcast %cst_169 : f32 to vector<2x8x8xf32>
    %417 = arith.mulf %415, %416 : vector<2x8x8xf32>
    %418 = vector.broadcast %102 : vector<1x8x8xf32> to vector<2x8x8xf32>
    %419 = arith.addf %417, %418 : vector<2x8x8xf32>
    %cst_170 = arith.constant dense<0xFF800000> : vector<2x8xf32>
    %420 = vector.multi_reduction <maximumf>, %419, %cst_170 [2] : vector<2x8x8xf32> to vector<2x8xf32>
    %421 = vector.shape_cast %420 : vector<2x8xf32> to vector<2x8x1xf32>
    %422 = vector.broadcast %421 : vector<2x8x1xf32> to vector<2x8x8xf32>
    %423 = arith.subf %419, %422 : vector<2x8x8xf32>
    %424 = math.exp %423 : vector<2x8x8xf32>
    %cst_171 = arith.constant dense<0.000000e+00> : vector<2x8xf32>
    %425 = vector.multi_reduction <add>, %424, %cst_171 [2] : vector<2x8x8xf32> to vector<2x8xf32>
    %426 = vector.shape_cast %425 : vector<2x8xf32> to vector<2x8x1xf32>
    %427 = tpu.reciprocal %426 {approx = true} : vector<2x8x1xf32> -> vector<2x8x1xf32>
    %428 = vector.broadcast %427 : vector<2x8x1xf32> to vector<2x8x8xf32>
    %429 = arith.mulf %424, %428 : vector<2x8x8xf32>
    %430 = vector.broadcast %131 : vector<1x1x32xf32> to vector<2x8x32xf32>
    %431 = arith.mulf %348, %430 : vector<2x8x32xf32>
    "tpu.trace_start"() <{level = 10 : i32, message = "bqk,bkd->bqd"}> : () -> ()
    %cst_172 = arith.constant dense<0.000000e+00> : vector<2x8x32xf32>
    %432 = tpu.matmul %429, %431, %cst_172 {dimension_numbers = #tpu.dot_dimension_numbers<[2], [1], [1], [2], [0, 0, 0, 1, 1, 2], [0], [0]>} : vector<2x8x8xf32>, vector<2x8x32xf32>, vector<2x8x32xf32> -> vector<2x8x32xf32>
    "tpu.trace_stop"() : () -> ()
    %433 = arith.addf %412, %432 : vector<2x8x32xf32>
    %434 = vector.shape_cast %433 : vector<2x8x32xf32> to vector<16x32xf32>
    %435 = arith.truncf %434 : vector<16x32xf32> to vector<16x32xbf16>
    %c1_173 = arith.constant 1 : index
    %c0_174 = arith.constant 0 : index
    %c0_175 = arith.constant 0 : index
    %436 = vector.load %arg5[%c1_173, %c0_174, %c0_175] : memref<2x32x32xbf16, #tpu.memory_space<vmem>>, vector<1x32x32xbf16>
    %437 = vector.shape_cast %436 : vector<1x32x32xbf16> to vector<32x32xbf16>
    %cst_176 = arith.constant dense<0.000000e+00> : vector<16x32xf32>
    %438 = tpu.matmul %435, %437, %cst_176 {dimension_numbers = #tpu.dot_dimension_numbers<[1], [0], [0], [1], [0, 0, 1, 1], [], []>} : vector<16x32xbf16>, vector<32x32xbf16>, vector<16x32xf32> -> vector<16x32xf32>
    %439 = vector.broadcast %316 : vector<1x32xf32> to vector<16x32xf32>
    %440 = arith.addf %438, %439 : vector<16x32xf32>
    %441 = arith.addf %440, %309 : vector<16x32xf32>
    %cst_177 = arith.constant dense<0.000000e+00> : vector<16xf32>
    %442 = vector.multi_reduction <add>, %441, %cst_177 [1] : vector<16x32xf32> to vector<16xf32>
    %443 = vector.shape_cast %442 : vector<16xf32> to vector<16x1xf32>
    %cst_178 = arith.constant 3.200000e+01 : f32
    %444 = vector.broadcast %cst_178 : f32 to vector<16x1xf32>
    %445 = arith.divf %443, %444 : vector<16x1xf32>
    %446 = vector.broadcast %445 : vector<16x1xf32> to vector<16x32xf32>
    %447 = arith.subf %441, %446 : vector<16x32xf32>
    %448 = arith.mulf %447, %447 : vector<16x32xf32>
    %cst_179 = arith.constant dense<0.000000e+00> : vector<16xf32>
    %449 = vector.multi_reduction <add>, %448, %cst_179 [1] : vector<16x32xf32> to vector<16xf32>
    %450 = vector.shape_cast %449 : vector<16xf32> to vector<16x1xf32>
    %cst_180 = arith.constant 0.0322580636 : f32
    %451 = vector.broadcast %cst_180 : f32 to vector<16x1xf32>
    %452 = arith.mulf %450, %451 : vector<16x1xf32>
    %cst_181 = arith.constant 9.99999974E-6 : f32
    %453 = vector.broadcast %cst_181 : f32 to vector<16x1xf32>
    %454 = arith.addf %452, %453 : vector<16x1xf32>
    %455 = math.rsqrt %454 : vector<16x1xf32>
    %456 = vector.broadcast %455 : vector<16x1xf32> to vector<16x32xf32>
    %457 = arith.mulf %447, %456 : vector<16x32xf32>
    %458 = vector.broadcast %314 : vector<1x32xf32> to vector<16x32xf32>
    %459 = arith.mulf %458, %457 : vector<16x32xf32>
    %460 = vector.broadcast %315 : vector<1x32xf32> to vector<16x32xf32>
    %461 = arith.addf %459, %460 : vector<16x32xf32>
    %462 = arith.truncf %461 : vector<16x32xf32> to vector<16x32xbf16>
    %c1_182 = arith.constant 1 : index
    %c0_183 = arith.constant 0 : index
    %c0_184 = arith.constant 0 : index
    %463 = vector.load %arg6[%c1_182, %c0_183, %c0_184] : memref<2x32x128xbf16, #tpu.memory_space<vmem>>, vector<1x32x128xbf16>
    %464 = vector.shape_cast %463 : vector<1x32x128xbf16> to vector<32x128xbf16>
    %cst_185 = arith.constant dense<0.000000e+00> : vector<16x128xf32>
    %465 = tpu.matmul %462, %464, %cst_185 {dimension_numbers = #tpu.dot_dimension_numbers<[1], [0], [0], [1], [0, 0, 1, 1], [], []>} : vector<16x32xbf16>, vector<32x128xbf16>, vector<16x128xf32> -> vector<16x128xf32>
    %466 = vector.broadcast %318 : vector<1x128xf32> to vector<16x128xf32>
    %467 = arith.addf %465, %466 : vector<16x128xf32>
    %cst_186 = arith.constant 5.000000e-01 : f32
    %468 = vector.broadcast %cst_186 : f32 to vector<16x128xf32>
    %469 = arith.mulf %468, %467 : vector<16x128xf32>
    %cst_187 = arith.constant 4.471500e-02 : f32
    %470 = vector.broadcast %cst_187 : f32 to vector<16x128xf32>
    %471 = arith.mulf %470, %467 : vector<16x128xf32>
    %472 = arith.mulf %471, %467 : vector<16x128xf32>
    %473 = arith.mulf %472, %467 : vector<16x128xf32>
    %474 = arith.addf %467, %473 : vector<16x128xf32>
    %cst_188 = arith.constant 0.797884583 : f32
    %475 = vector.broadcast %cst_188 : f32 to vector<16x128xf32>
    %476 = arith.mulf %475, %474 : vector<16x128xf32>
    %477 = math.tanh %476 : vector<16x128xf32>
    %cst_189 = arith.constant 1.000000e+00 : f32
    %478 = vector.broadcast %cst_189 : f32 to vector<16x128xf32>
    %479 = arith.addf %478, %477 : vector<16x128xf32>
    %480 = arith.mulf %469, %479 : vector<16x128xf32>
    %481 = arith.truncf %480 : vector<16x128xf32> to vector<16x128xbf16>
    %c1_190 = arith.constant 1 : index
    %c0_191 = arith.constant 0 : index
    %c0_192 = arith.constant 0 : index
    %482 = vector.load %arg7[%c1_190, %c0_191, %c0_192] : memref<2x128x32xbf16, #tpu.memory_space<vmem>>, vector<1x128x32xbf16>
    %483 = vector.shape_cast %482 : vector<1x128x32xbf16> to vector<128x32xbf16>
    %cst_193 = arith.constant dense<0.000000e+00> : vector<16x32xf32>
    %484 = tpu.matmul %481, %483, %cst_193 {dimension_numbers = #tpu.dot_dimension_numbers<[1], [0], [0], [1], [0, 0, 1, 1], [], []>} : vector<16x128xbf16>, vector<128x32xbf16>, vector<16x32xf32> -> vector<16x32xf32>
    %485 = vector.broadcast %317 : vector<1x32xf32> to vector<16x32xf32>
    %486 = arith.addf %484, %485 : vector<16x32xf32>
    %487 = arith.addf %486, %441 : vector<16x32xf32>
    %c0_194 = arith.constant 0 : index
    %c0_195 = arith.constant 0 : index
    %488 = vector.load %arg8[%c0_194, %c0_195] : memref<2x32xf32, #tpu.memory_space<vmem>>, vector<1x32xf32>
    %c1_196 = arith.constant 1 : index
    %c0_197 = arith.constant 0 : index
    %489 = vector.load %arg8[%c1_196, %c0_197] : memref<2x32xf32, #tpu.memory_space<vmem>>, vector<1x32xf32>
    %cst_198 = arith.constant dense<0.000000e+00> : vector<16xf32>
    %490 = vector.multi_reduction <add>, %487, %cst_198 [1] : vector<16x32xf32> to vector<16xf32>
    %491 = vector.shape_cast %490 : vector<16xf32> to vector<16x1xf32>
    %cst_199 = arith.constant 3.200000e+01 : f32
    %492 = vector.broadcast %cst_199 : f32 to vector<16x1xf32>
    %493 = arith.divf %491, %492 : vector<16x1xf32>
    %494 = vector.broadcast %493 : vector<16x1xf32> to vector<16x32xf32>
    %495 = arith.subf %487, %494 : vector<16x32xf32>
    %496 = arith.mulf %495, %495 : vector<16x32xf32>
    %cst_200 = arith.constant dense<0.000000e+00> : vector<16xf32>
    %497 = vector.multi_reduction <add>, %496, %cst_200 [1] : vector<16x32xf32> to vector<16xf32>
    %498 = vector.shape_cast %497 : vector<16xf32> to vector<16x1xf32>
    %cst_201 = arith.constant 0.0322580636 : f32
    %499 = vector.broadcast %cst_201 : f32 to vector<16x1xf32>
    %500 = arith.mulf %498, %499 : vector<16x1xf32>
    %cst_202 = arith.constant 9.99999974E-6 : f32
    %501 = vector.broadcast %cst_202 : f32 to vector<16x1xf32>
    %502 = arith.addf %500, %501 : vector<16x1xf32>
    %503 = math.rsqrt %502 : vector<16x1xf32>
    %504 = vector.broadcast %503 : vector<16x1xf32> to vector<16x32xf32>
    %505 = arith.mulf %495, %504 : vector<16x32xf32>
    %506 = vector.broadcast %488 : vector<1x32xf32> to vector<16x32xf32>
    %507 = arith.mulf %506, %505 : vector<16x32xf32>
    %508 = vector.broadcast %489 : vector<1x32xf32> to vector<16x32xf32>
    %509 = arith.addf %507, %508 : vector<16x32xf32>
    %510 = arith.truncf %509 : vector<16x32xf32> to vector<16x32xbf16>
    %c0_203 = arith.constant 0 : index
    %c0_204 = arith.constant 0 : index
    %511 = vector.load %arg9[%c0_203, %c0_204] : memref<32x128xbf16, #tpu.memory_space<vmem>>, vector<32x128xbf16>
    %cst_205 = arith.constant dense<0.000000e+00> : vector<16x128xf32>
    %512 = tpu.matmul %510, %511, %cst_205 {dimension_numbers = #tpu.dot_dimension_numbers<[1], [0], [0], [1], [0, 0, 1, 1], [], []>} : vector<16x32xbf16>, vector<32x128xbf16>, vector<16x128xf32> -> vector<16x128xf32>
    %c0_206 = arith.constant 0 : index
    %c0_207 = arith.constant 0 : index
    %513 = vector.load %arg10[%c0_206, %c0_207] : memref<16x128xf32, #tpu.memory_space<vmem>>, vector<16x128xf32>
    tpu.vector_store %arg10[%c0_206, %c0_207], %512 {strides = array<i32>} : memref<16x128xf32, #tpu.memory_space<vmem>>, vector<16x128xf32>,
    return
  }
}

</mosaic_0001>

<llo_original>
// kernel: tpu_custom_call.1
$region0: #{tpu_custom_call.1}
  #allocation0 [shape = 'u32[]', space=smem, size = 0x4, offset = 0x4, fixed_abs, tag = 'smem constant byte address 0x4 - core index']
  #allocation1 [shape = 'u32[144,128]{1,0:T(1,128)}', space=vmem, size = 0x12000, scoped, tag = 'internal scratch']
  #allocation2 [shape = 'f32[16,32]{1,0:T(8,128)}', space=vmem, size = 0x2000, scoped, tag = 'scratch operand']
  %s0 = inlined_call_operand.vmem [shape: s32[16], index: 0, kind: input, shape index: {}]
  %s1 = inlined_call_operand.vmem [shape: f32[64,32], index: 1, kind: input, shape index: {}]
  %s2 = inlined_call_operand.vmem [shape: f32[8,32], index: 2, kind: input, shape index: {}]
  %s3 = inlined_call_operand.vmem [shape: f32[2,8,128], index: 3, kind: input, shape index: {}]
  %s4 = inlined_call_operand.vmem [shape: bf16[2,32,96], index: 4, kind: input, shape index: {}]
  %s5 = inlined_call_operand.vmem [shape: bf16[2,32,32], index: 5, kind: input, shape index: {}]
  %s6 = inlined_call_operand.vmem [shape: bf16[2,32,128], index: 6, kind: input, shape index: {}]
  %s7 = inlined_call_operand.vmem [shape: bf16[2,128,32], index: 7, kind: input, shape index: {}]
  %s8 = inlined_call_operand.vmem [shape: f32[2,32], index: 8, kind: input, shape index: {}]
  %s9 = inlined_call_operand.vmem [shape: bf16[32,128], index: 9, kind: input, shape index: {}]
  %s10 = inlined_call_operand.hbm [shape: f32[16,128], index: 10, kind: output, shape index: {}]
  %s11 = sld [smem:[#allocation0]]
  $region54: #{tpu_custom_call.1} parent=0
    _
  %s13 = ssub.s32 1, %s11
  %s14 = scalar_select 0, %s13, %s11
  $region1: #{tpu_custom_call.1} parent=0
    #allocation3 [shape = 'u8[512]{0}', space=smem, size = 0x200, scoped, tag = 'input window, operand 0, single buffered']
    #allocation4 [shape = 's32[1]{0}', space=sflag, size = 0x4, scoped, tag = 'scoped memory for tpu_custom_call.1']
    #allocation5 [shape = 's32[1]{0}', space=sflag, size = 0x4, scoped, tag = 'scoped memory for tpu_custom_call.1']
    #allocation6 [shape = 'u8[8192]{0}', space=vmem, size = 0x2000, scoped, tag = 'output window, operand 0, single buffered']
    %15 = vsyncpa [#allocation5], 0
    %16 = vsyncpa [#allocation4], 0
    // Predicated region
    $region2: #{tpu_custom_call.1} parent=1 // pred_check
      _
    $region3: #{tpu_custom_call.1} parent=1 // pred_check_branch
      %18 = sbr.rel (0) target = $region5
    $region4: #{tpu_custom_call.1} parent=1 // pred_region
      %s20 = ssub.s32 16, 16
      %21 = vsyncadd [#allocation5], %s20
      %s23 = sshll.u32 %s0, 4
      %s24 = int_to_ptr.vmem [resolvable:$true] %s23
      %26 = dma.vmem_to_smem %s24, 16, [#allocation3], [#allocation5]
    $region5: #{tpu_custom_call.1} parent=1 // pred_fallthru
      _
    // Predicated region
    $region6: #{tpu_custom_call.1} parent=1 // pred_check
      _
    $region7: #{tpu_custom_call.1} parent=1 // pred_check_branch
      %28 = sbr.rel (0) target = $region9
    $region8: #{tpu_custom_call.1} parent=1 // pred_region
      _
    $region9: #{tpu_custom_call.1} parent=1 // pred_fallthru
      _
    // Predicated region
    $region10: #{tpu_custom_call.1} parent=1 // pred_check
      _
    $region11: #{tpu_custom_call.1} parent=1 // pred_check_branch
      %30 = sbr.rel (0) target = $region13
    $region12: #{tpu_custom_call.1} parent=1 // pred_region
      _
    $region13: #{tpu_custom_call.1} parent=1 // pred_fallthru
      _
    // Predicated region
    $region14: #{tpu_custom_call.1} parent=1 // pred_check
      _
    $region15: #{tpu_custom_call.1} parent=1 // pred_check_branch
      %32 = sbr.rel (0) target = $region17
    $region16: #{tpu_custom_call.1} parent=1 // pred_region
      _
    $region17: #{tpu_custom_call.1} parent=1 // pred_fallthru
      _
    // Predicated region
    $region18: #{tpu_custom_call.1} parent=1 // pred_check
      _
    $region19: #{tpu_custom_call.1} parent=1 // pred_check_branch
      %34 = sbr.rel (0) target = $region21
    $region20: #{tpu_custom_call.1} parent=1 // pred_region
      _
    $region21: #{tpu_custom_call.1} parent=1 // pred_fallthru
      _
    // Predicated region
    $region22: #{tpu_custom_call.1} parent=1 // pred_check
      _
    $region23: #{tpu_custom_call.1} parent=1 // pred_check_branch
      %36 = sbr.rel (0) target = $region25
    $region24: #{tpu_custom_call.1} parent=1 // pred_region
      _
    $region25: #{tpu_custom_call.1} parent=1 // pred_fallthru
      _
    // Predicated region
    $region26: #{tpu_custom_call.1} parent=1 // pred_check
      _
    $region27: #{tpu_custom_call.1} parent=1 // pred_check_branch
      %38 = sbr.rel (0) target = $region29
    $region28: #{tpu_custom_call.1} parent=1 // pred_region
      _
    $region29: #{tpu_custom_call.1} parent=1 // pred_fallthru
      _
    // Predicated region
    $region30: #{tpu_custom_call.1} parent=1 // pred_check
      _
    $region31: #{tpu_custom_call.1} parent=1 // pred_check_branch
      %40 = sbr.rel (0) target = $region33
    $region32: #{tpu_custom_call.1} parent=1 // pred_region
      _
    $region33: #{tpu_custom_call.1} parent=1 // pred_fallthru
      _
    // Predicated region
    $region34: #{tpu_custom_call.1} parent=1 // pred_check
      _
    $region35: #{tpu_custom_call.1} parent=1 // pred_check_branch
      %42 = sbr.rel (0) target = $region37
    $region36: #{tpu_custom_call.1} parent=1 // pred_region
      _
    $region37: #{tpu_custom_call.1} parent=1 // pred_fallthru
      _
    // Predicated region
    $region38: #{tpu_custom_call.1} parent=1 // pred_check
      _
    $region39: #{tpu_custom_call.1} parent=1 // pred_check_branch
      %44 = sbr.rel (0) target = $region41
    $region40: #{tpu_custom_call.1} parent=1 // pred_region
      _
    $region41: #{tpu_custom_call.1} parent=1 // pred_fallthru
      _
    // Predicated region
    $region42: #{tpu_custom_call.1} parent=1 // pred_check
      _
    $region43: #{tpu_custom_call.1} parent=1 // pred_check_branch
      %46 = sbr.rel (0) target = $region45
    $region44: #{tpu_custom_call.1} parent=1 // pred_region
      %47 = dma.done [#allocation5], 16
    $region45: #{tpu_custom_call.1} parent=1 // pred_fallthru
      _
    %48 = sfence
    %s50 = sld [smem:[#allocation3]]
    %s51 = scalar_lea.vmem %s1, %s50
    %v52 = vld [vmem:[%s51] sm:$0x1]
    %v53 = vld [vmem:[%s2] sm:$0x1]
    %v54 = vadd.f32 %v52, %v53
    %vm55 = vcmask 253952
    %56 = vst.msk [vmem:[#allocation2] sm:$0x1] %vm55, %v54
    %s57 = sld [smem:[#allocation3 + $0x1]]
    %s58 = scalar_lea.vmem %s1, %s57
    %v59 = vld [vmem:[%s58] sm:$0x1]
    %v60 = vld [vmem:[%s2 + $0x1] sm:$0x1]
    %v61 = vadd.f32 %v59, %v60
    %62 = vst.msk [vmem:[#allocation2 + $0x1] sm:$0x1] %vm55, %v61
    %s63 = sld [smem:[#allocation3 + $0x2]]
    %s64 = scalar_lea.vmem %s1, %s63
    %v65 = vld [vmem:[%s64] sm:$0x1]
    %v66 = vld [vmem:[%s2 + $0x2] sm:$0x1]
    %v67 = vadd.f32 %v65, %v66
    %68 = vst.msk [vmem:[#allocation2 + $0x2] sm:$0x1] %vm55, %v67
    %s69 = sld [smem:[#allocation3 + $0x3]]
    %s70 = scalar_lea.vmem %s1, %s69
    %v71 = vld [vmem:[%s70] sm:$0x1]
    %v72 = vld [vmem:[%s2 + $0x3] sm:$0x1]
    %v73 = vadd.f32 %v71, %v72
    %74 = vst.msk [vmem:[#allocation2 + $0x3] sm:$0x1] %vm55, %v73
    %s75 = sld [smem:[#allocation3 + $0x4]]
    %s76 = scalar_lea.vmem %s1, %s75
    %v77 = vld [vmem:[%s76] sm:$0x1]
    %v78 = vld [vmem:[%s2 + $0x4] sm:$0x1]
    %v79 = vadd.f32 %v77, %v78
    %80 = vst.msk [vmem:[#allocation2 + $0x4] sm:$0x1] %vm55, %v79
    %s81 = sld [smem:[#allocation3 + $0x5]]
    %s82 = scalar_lea.vmem %s1, %s81
    %v83 = vld [vmem:[%s82] sm:$0x1]
    %v84 = vld [vmem:[%s2 + $0x5] sm:$0x1]
    %v85 = vadd.f32 %v83, %v84
    %86 = vst.msk [vmem:[#allocation2 + $0x5] sm:$0x1] %vm55, %v85
    %s87 = sld [smem:[#allocation3 + $0x6]]
    %s88 = scalar_lea.vmem %s1, %s87
    %v89 = vld [vmem:[%s88] sm:$0x1]
    %v90 = vld [vmem:[%s2 + $0x6] sm:$0x1]
    %v91 = vadd.f32 %v89, %v90
    %92 = vst.msk [vmem:[#allocation2 + $0x6] sm:$0x1] %vm55, %v91
    %s93 = sld [smem:[#allocation3 + $0x7]]
    %s94 = scalar_lea.vmem %s1, %s93
    %v95 = vld [vmem:[%s94] sm:$0x1]
    %v96 = vld [vmem:[%s2 + $0x7] sm:$0x1]
    %v97 = vadd.f32 %v95, %v96
    %98 = vst.msk [vmem:[#allocation2 + $0x7] sm:$0x1] %vm55, %v97
    %s99 = sld [smem:[#allocation3 + $0x8]]
    %s100 = scalar_lea.vmem %s1, %s99
    %v101 = vld [vmem:[%s100] sm:$0x1]
    %v102 = vld [vmem:[%s2] sm:$0x1]
    %v103 = vadd.f32 %v101, %v102
    %104 = vst.msk [vmem:[#allocation2 + $0x8] sm:$0x1] %vm55, %v103
    %s105 = sld [smem:[#allocation3 + $0x9]]
    %s106 = scalar_lea.vmem %s1, %s105
    %v107 = vld [vmem:[%s106] sm:$0x1]
    %v108 = vld [vmem:[%s2 + $0x1] sm:$0x1]
    %v109 = vadd.f32 %v107, %v108
    %110 = vst.msk [vmem:[#allocation2 + $0x9] sm:$0x1] %vm55, %v109
    %s111 = sld [smem:[#allocation3 + $0xa]]
    %s112 = scalar_lea.vmem %s1, %s111
    %v113 = vld [vmem:[%s112] sm:$0x1]
    %v114 = vld [vmem:[%s2 + $0x2] sm:$0x1]
    %v115 = vadd.f32 %v113, %v114
    %116 = vst.msk [vmem:[#allocation2 + $0xa] sm:$0x1] %vm55, %v115
    %s117 = sld [smem:[#allocation3 + $0xb]]
    %s118 = scalar_lea.vmem %s1, %s117
    %v119 = vld [vmem:[%s118] sm:$0x1]
    %v120 = vld [vmem:[%s2 + $0x3] sm:$0x1]
    %v121 = vadd.f32 %v119, %v120
    %122 = vst.msk [vmem:[#allocation2 + $0xb] sm:$0x1] %vm55, %v121
    %s123 = sld [smem:[#allocation3 + $0xc]]
    %s124 = scalar_lea.vmem %s1, %s123
    %v125 = vld [vmem:[%s124] sm:$0x1]
    %v126 = vld [vmem:[%s2 + $0x4] sm:$0x1]
    %v127 = vadd.f32 %v125, %v126
    %128 = vst.msk [vmem:[#allocation2 + $0xc] sm:$0x1] %vm55, %v127
    %s129 = sld [smem:[#allocation3 + $0xd]]
    %s130 = scalar_lea.vmem %s1, %s129
    %v131 = vld [vmem:[%s130] sm:$0x1]
    %v132 = vld [vmem:[%s2 + $0x5] sm:$0x1]
    %v133 = vadd.f32 %v131, %v132
    %134 = vst.msk [vmem:[#allocation2 + $0xd] sm:$0x1] %vm55, %v133
    %s135 = sld [smem:[#allocation3 + $0xe]]
    %s136 = scalar_lea.vmem %s1, %s135
    %v137 = vld [vmem:[%s136] sm:$0x1]
    %v138 = vld [vmem:[%s2 + $0x6] sm:$0x1]
    %v139 = vadd.f32 %v137, %v138
    %140 = vst.msk [vmem:[#allocation2 + $0xe] sm:$0x1] %vm55, %v139
    %s141 = sld [smem:[#allocation3 + $0xf]]
    %s142 = scalar_lea.vmem %s1, %s141
    %v143 = vld [vmem:[%s142] sm:$0x1]
    %v144 = vld [vmem:[%s2 + $0x7] sm:$0x1]
    %v145 = vadd.f32 %v143, %v144
    %146 = vst.msk [vmem:[#allocation2 + $0xf] sm:$0x1] %vm55, %v145
    %v147 = vld [vmem:[#allocation2] sm:$0xff]
    %v148 = vld [vmem:[#allocation2 + $0x8] sm:$0xff]
    %v149 = vlaneseq
    %v150 = vshrl.u32 %v149, 7
    %v151 = vlaneseq
    %v152 = vand.u32 %v151, 127
    %vm153 = vcmp.ge.s32.totalorder %v150, %v152
    %v154 = vsel %vm153, 0.0, -1e+30
    %vm155 = vcmp.ge.s32.totalorder %v152, 0
    %vm156 = vcmp.lt.s32.totalorder %v152, 8
    %vm157 = vmand %vm155, %vm156
    %v158 = vsel %vm157, 1, 0
    %v159 = vcvt.s32.f32 %v158
    %vm160 = vcmp.ge.s32.totalorder %v152, 8
    %vm161 = vcmp.lt.s32.totalorder %v152, 16
    %vm162 = vmand %vm160, %vm161
    %v163 = vsel %vm162, 1, 0
    %v164 = vcvt.s32.f32 %v163
    %vm165 = vcmp.ge.s32.totalorder %v152, 16
    %vm166 = vcmp.lt.s32.totalorder %v152, 24
    %vm167 = vmand %vm165, %vm166
    %v168 = vsel %vm167, 1, 0
    %v169 = vcvt.s32.f32 %v168
    %vm170 = vcmp.ge.s32.totalorder %v152, 24
    %vm171 = vcmp.lt.s32.totalorder %v152, 32
    %vm172 = vmand %vm170, %vm171
    %v173 = vsel %vm172, 1, 0
    %v174 = vcvt.s32.f32 %v173
    %v175 = vld [vmem:[%s3] sm:$0xff]
    %vm176 = vcmask 261120
    %v177 = vsel %vm176, %v147, 0.0
    %178 = vadd.xlane.f32.xlu0 %v177
    %v179 = vpop.xlane.xlu0 %178
    %v180 = vsel %vm176, %v148, 0.0
    %181 = vadd.xlane.f32.xlu0 %v180
    %v182 = vpop.xlane.xlu0 %181
    %v183 = vrcp.pop 32.0
    %v184 = vmul.f32 %v179, %v183
    %v185 = vmul.f32 %v182, %v183
    %v186 = vsub.f32 %v147, %v184
    %v187 = vsub.f32 %v148, %v185
    %v188 = vmul.f32 %v186, %v186
    %v189 = vmul.f32 %v187, %v187
    %v190 = vsel %vm176, %v188, 0.0
    %191 = vadd.xlane.f32.xlu0 %v190
    %v192 = vpop.xlane.xlu0 %191
    %v193 = vsel %vm176, %v189, 0.0
    %194 = vadd.xlane.f32.xlu0 %v193
    %v195 = vpop.xlane.xlu0 %194
    %v196 = vmul.f32 %v192, 0.032258064
    %v197 = vmul.f32 %v195, 0.032258064
    %v198 = vadd.f32 %v196, 1e-05
    %v199 = vadd.f32 %v197, 1e-05
    %v200 = vrsqrt.pop %v198
    %v201 = vrsqrt.pop %v199
    %v202 = vmul.f32 %v186, %v200
    %v203 = vmul.f32 %v187, %v201
    %v204 = vlaneseq
    %v205 = vshrl.u32 %v204, 7
    %v206 = vsub.s32 0, %v205
    %v207 = vrot.slane %v175, %v206
    %v208 = vmul.f32 %v207, %v202
    %v209 = vmul.f32 %v207, %v203
    %v210 = vlaneseq
    %v211 = vshrl.u32 %v210, 7
    %v212 = vsub.s32 1, %v211
    %v213 = vrot.slane %v175, %v212
    %v214 = vadd.f32 %v208, %v213
    %v215 = vadd.f32 %v209, %v213
    %v216 = vpack.c.bf16 %v215, %v214
    %v217 = vld [vmem:[%s4] sm:$0xf]
    %v218 = vld [vmem:[%s4 + $0x4] sm:$0xf]
    %v219 = vld [vmem:[%s4 + $0x8] sm:$0xf]
    %v220 = vld [vmem:[%s4 + $0xc] sm:$0xf]
    %v225 = vunpack.c.l.b16 %v217
    %v226 = vunpack.c.l.b16 %v218
    %v227 = vunpack.c.l.b16 %v219
    %v228 = vunpack.c.l.b16 %v220
    %v229 = vpack.c.b16 %v226, %v225
    %v230 = vpack.c.b16 %v228, %v227
    %v234 = vsel %vm176, %v216, 0
    %236 = vmatprep.subr.bf16.mxu0 0
    %237 = vmatpush1.bf16.msra.mxu0 %v229
    %238 = vmatprep.subr.bf16.mxu0 0
    %239 = vmatpush1.bf16.msra.mxu0 %v230
    %240 = vmatprep.subr.bf16.mxu0 0
    %241 = vmatpush1.bf16.msra.mxu0 0
    %242 = vmatprep.subr.bf16.mxu0 0
    %243 = vmatpush1.bf16.msra.mxu0 0
    %244 = vmatprep.subr.bf16.mxu0 0
    %245 = vmatpush1.bf16.msra.mxu0 0
    %246 = vmatprep.subr.bf16.mxu0 0
    %247 = vmatpush1.bf16.msra.mxu0 0
    %248 = vmatprep.subr.bf16.mxu0 0
    %249 = vmatpush1.bf16.msra.mxu0 0
    %250 = vmatprep.subr.bf16.mxu0 0
    %251 = vmatpush1.bf16.msra.mxu0 0
    %252 = vmatprep.subr.bf16.mxu0 0
    %253 = vmatpush1.bf16.msra.mxu0 0
    %254 = vmatprep.subr.bf16.mxu0 0
    %255 = vmatpush1.bf16.msra.mxu0 0
    %256 = vmatprep.subr.bf16.mxu0 0
    %257 = vmatpush1.bf16.msra.mxu0 0
    %258 = vmatprep.subr.bf16.mxu0 0
    %259 = vmatpush1.bf16.msra.mxu0 0
    %260 = vmatprep.subr.bf16.mxu0 0
    %261 = vmatpush1.bf16.msra.mxu0 0
    %262 = vmatprep.subr.bf16.mxu0 0
    %263 = vmatpush1.bf16.msra.mxu0 0
    %264 = vmatprep.subr.bf16.mxu0 0
    %265 = vmatpush1.bf16.msra.mxu0 0
    %266 = vmatprep.subr.bf16.mxu0 0
    %267 = vmatpush1.bf16.msra.mxu0 0
    %268 = vmatprep.mubr.bf16.mxu0 0
    %269 = vmatmul.mubr.bf16.gmra.mrb[0].mxu0 %v234
    %v270 = vpop.f32.mrb[0].mxu0
    %v271 = vadd.f32 0.0, %v270
    %v272 = vpop.f32.mrb[0].mxu0
    %v273 = vpop.f32.mrb[0].mxu0
    %v274 = vadd.f32 0.0, %v273
    %v275 = vpop.f32.mrb[0].mxu0
    %276 = vdwg.mxu0
    %v277 = vmul.f32 %v271, %v159
    %v278 = vmul.f32 %v274, %v159
    %280 = vrot.lane.b32.xlu0 %v271, 96
    %v281 = vpop.permute.xlu0 %280
    %v283 = vsel %vm176, %v277, 0
    %v285 = vsel %vm176, %v281, 0
    %287 = vmatprep.subr.mxu0 0.0
    %288 = vmatpush1.xpose.msra.mxu0 %v285
    %289 = vmatprep.subr.mxu0 0.0
    %290 = vmatpush1.xpose.msra.mxu0 0.0
    %291 = vmatprep.subr.mxu0 0.0
    %292 = vmatpush1.xpose.msra.mxu0 0.0
    %293 = vmatprep.subr.mxu0 0.0
    %294 = vmatpush1.xpose.msra.mxu0 0.0
    %295 = vmatprep.subr.mxu0 0.0
    %296 = vmatpush1.xpose.msra.mxu0 0.0
    %297 = vmatprep.subr.mxu0 0.0
    %298 = vmatpush1.xpose.msra.mxu0 0.0
    %299 = vmatprep.subr.mxu0 0.0
    %300 = vmatpush1.xpose.msra.mxu0 0.0
    %301 = vmatprep.subr.mxu0 0.0
    %302 = vmatpush1.xpose.msra.mxu0 0.0
    %303 = vmatprep.subr.mxu0 0.0
    %304 = vmatpush1.xpose.msra.mxu0 0.0
    %305 = vmatprep.subr.mxu0 0.0
    %306 = vmatpush1.xpose.msra.mxu0 0.0
    %307 = vmatprep.subr.mxu0 0.0
    %308 = vmatpush1.xpose.msra.mxu0 0.0
    %309 = vmatprep.subr.mxu0 0.0
    %310 = vmatpush1.xpose.msra.mxu0 0.0
    %311 = vmatprep.subr.mxu0 0.0
    %312 = vmatpush1.xpose.msra.mxu0 0.0
    %313 = vmatprep.subr.mxu0 0.0
    %314 = vmatpush1.xpose.msra.mxu0 0.0
    %315 = vmatprep.subr.mxu0 0.0
    %316 = vmatpush1.xpose.msra.mxu0 0.0
    %317 = vmatprep.subr.mxu0 0.0
    %318 = vmatpush1.xpose.msra.mxu0 0.0
    %319 = vmatprep.subr.mxu0 0.0
    %320 = vmatpush1.xpose.msra.mxu0 0.0
    %321 = vmatprep.subr.mxu0 0.0
    %322 = vmatpush1.xpose.msra.mxu0 0.0
    %323 = vmatprep.subr.mxu0 0.0
    %324 = vmatpush1.xpose.msra.mxu0 0.0
    %325 = vmatprep.subr.mxu0 0.0
    %326 = vmatpush1.xpose.msra.mxu0 0.0
    %327 = vmatprep.subr.mxu0 0.0
    %328 = vmatpush1.xpose.msra.mxu0 0.0
    %329 = vmatprep.subr.mxu0 0.0
    %330 = vmatpush1.xpose.msra.mxu0 0.0
    %331 = vmatprep.subr.mxu0 0.0
    %332 = vmatpush1.xpose.msra.mxu0 0.0
    %333 = vmatprep.subr.mxu0 0.0
    %334 = vmatpush1.xpose.msra.mxu0 0.0
    %335 = vmatprep.subr.mxu0 0.0
    %336 = vmatpush1.xpose.msra.mxu0 0.0
    %337 = vmatprep.subr.mxu0 0.0
    %338 = vmatpush1.xpose.msra.mxu0 0.0
    %339 = vmatprep.subr.mxu0 0.0
    %340 = vmatpush1.xpose.msra.mxu0 0.0
    %341 = vmatprep.subr.mxu0 0.0
    %342 = vmatpush1.xpose.msra.mxu0 0.0
    %343 = vmatprep.subr.mxu0 0.0
    %344 = vmatpush1.xpose.msra.mxu0 0.0
    %345 = vmatprep.subr.mxu0 0.0
    %346 = vmatpush1.xpose.msra.mxu0 0.0
    %347 = vmatprep.subr.mxu0 0.0
    %348 = vmatpush1.xpose.msra.mxu0 0.0
    %349 = vmatprep.subr.mxu0 0.0
    %350 = vmatpush1.xpose.msra.mxu0 0.0
    %351 = vmatprep.mubr.f32.mxu0 0.0
    %352 = vmatmul.mubr.f32.gmra.mrb[0].mxu0 %v283
    %v353 = vpop.f32.mrb[0].mxu0
    %v354 = vadd.f32 0.0, %v353
    %v355 = vpop.f32.mrb[0].mxu0
    %356 = vdwg.mxu0
    %358 = vrot.lane.b32.xlu0 %v274, 96
    %v359 = vpop.permute.xlu0 %358
    %v361 = vsel %vm176, %v278, 0
    %v363 = vsel %vm176, %v359, 0
    %365 = vmatprep.subr.mxu0 0.0
    %366 = vmatpush1.xpose.msra.mxu0 %v363
    %367 = vmatprep.subr.mxu0 0.0
    %368 = vmatpush1.xpose.msra.mxu0 0.0
    %369 = vmatprep.subr.mxu0 0.0
    %370 = vmatpush1.xpose.msra.mxu0 0.0
    %371 = vmatprep.subr.mxu0 0.0
    %372 = vmatpush1.xpose.msra.mxu0 0.0
    %373 = vmatprep.subr.mxu0 0.0
    %374 = vmatpush1.xpose.msra.mxu0 0.0
    %375 = vmatprep.subr.mxu0 0.0
    %376 = vmatpush1.xpose.msra.mxu0 0.0
    %377 = vmatprep.subr.mxu0 0.0
    %378 = vmatpush1.xpose.msra.mxu0 0.0
    %379 = vmatprep.subr.mxu0 0.0
    %380 = vmatpush1.xpose.msra.mxu0 0.0
    %381 = vmatprep.subr.mxu0 0.0
    %382 = vmatpush1.xpose.msra.mxu0 0.0
    %383 = vmatprep.subr.mxu0 0.0
    %384 = vmatpush1.xpose.msra.mxu0 0.0
    %385 = vmatprep.subr.mxu0 0.0
    %386 = vmatpush1.xpose.msra.mxu0 0.0
    %387 = vmatprep.subr.mxu0 0.0
    %388 = vmatpush1.xpose.msra.mxu0 0.0
    %389 = vmatprep.subr.mxu0 0.0
    %390 = vmatpush1.xpose.msra.mxu0 0.0
    %391 = vmatprep.subr.mxu0 0.0
    %392 = vmatpush1.xpose.msra.mxu0 0.0
    %393 = vmatprep.subr.mxu0 0.0
    %394 = vmatpush1.xpose.msra.mxu0 0.0
    %395 = vmatprep.subr.mxu0 0.0
    %396 = vmatpush1.xpose.msra.mxu0 0.0
    %397 = vmatprep.subr.mxu0 0.0
    %398 = vmatpush1.xpose.msra.mxu0 0.0
    %399 = vmatprep.subr.mxu0 0.0
    %400 = vmatpush1.xpose.msra.mxu0 0.0
    %401 = vmatprep.subr.mxu0 0.0
    %402 = vmatpush1.xpose.msra.mxu0 0.0
    %403 = vmatprep.subr.mxu0 0.0
    %404 = vmatpush1.xpose.msra.mxu0 0.0
    %405 = vmatprep.subr.mxu0 0.0
    %406 = vmatpush1.xpose.msra.mxu0 0.0
    %407 = vmatprep.subr.mxu0 0.0
    %408 = vmatpush1.xpose.msra.mxu0 0.0
    %409 = vmatprep.subr.mxu0 0.0
    %410 = vmatpush1.xpose.msra.mxu0 0.0
    %411 = vmatprep.subr.mxu0 0.0
    %412 = vmatpush1.xpose.msra.mxu0 0.0
    %413 = vmatprep.subr.mxu0 0.0
    %414 = vmatpush1.xpose.msra.mxu0 0.0
    %415 = vmatprep.subr.mxu0 0.0
    %416 = vmatpush1.xpose.msra.mxu0 0.0
    %417 = vmatprep.subr.mxu0 0.0
    %418 = vmatpush1.xpose.msra.mxu0 0.0
    %419 = vmatprep.subr.mxu0 0.0
    %420 = vmatpush1.xpose.msra.mxu0 0.0
    %421 = vmatprep.subr.mxu0 0.0
    %422 = vmatpush1.xpose.msra.mxu0 0.0
    %423 = vmatprep.subr.mxu0 0.0
    %424 = vmatpush1.xpose.msra.mxu0 0.0
    %425 = vmatprep.subr.mxu0 0.0
    %426 = vmatpush1.xpose.msra.mxu0 0.0
    %427 = vmatprep.subr.mxu0 0.0
    %428 = vmatpush1.xpose.msra.mxu0 0.0
    %429 = vmatprep.mubr.f32.mxu0 0.0
    %430 = vmatmul.mubr.f32.gmra.mrb[0].mxu0 %v361
    %v431 = vpop.f32.mrb[0].mxu0
    %v432 = vadd.f32 0.0, %v431
    %v433 = vpop.f32.mrb[0].mxu0
    %434 = vdwg.mxu0
    %v435 = vmul.f32 %v354, 0.35355338
    %v436 = vmul.f32 %v432, 0.35355338
    %v437 = vadd.f32 %v435, %v154
    %v438 = vadd.f32 %v436, %v154
    %vm439 = vcmask 64512
    %v440 = vsel %vm439, %v437, -inf
    %441 = vmax.xlane.f32.xlu0 %v440
    %v442 = vpop.xlane.xlu0 %441
    %v443 = vsel %vm439, %v438, -inf
    %444 = vmax.xlane.f32.xlu0 %v443
    %v445 = vpop.xlane.xlu0 %444
    %v446 = vsub.f32 %v437, %v442
    %v447 = vsub.f32 %v438, %v445
    %v448 = vmul.f32 %v446, 1.442695
    %v449 = vpow.pop %v448
    %v450 = vmul.f32 %v447, 1.442695
    %v451 = vpow.pop %v450
    %v452 = vsel %vm439, %v449, 0.0
    %453 = vadd.xlane.f32.xlu0 %v452
    %v454 = vpop.xlane.xlu0 %453
    %v455 = vsel %vm439, %v451, 0.0
    %456 = vadd.xlane.f32.xlu0 %v455
    %v457 = vpop.xlane.xlu0 %456
    %v458 = vrcp.pop %v454
    %v459 = vrcp.pop %v457
    %v460 = vmul.f32 %v449, %v458
    %v461 = vmul.f32 %v451, %v459
    %463 = vrot.lane.b32.xlu0 %v159, 64
    %v464 = vpop.permute.xlu0 %463
    %v466 = vmul.f32 %v271, %v464
    %v467 = vmul.f32 %v274, %v464
    %v468 = vmul.f32 %v271, %v164
    %v469 = vmul.f32 %v274, %v164
    %v471 = vsel %vm176, %v468, 0
    %473 = vmatprep.subr.mxu0 0.0
    %474 = vmatpush1.xpose.msra.mxu0 %v285
    %475 = vmatprep.subr.mxu0 0.0
    %476 = vmatpush1.xpose.msra.mxu0 0.0
    %477 = vmatprep.subr.mxu0 0.0
    %478 = vmatpush1.xpose.msra.mxu0 0.0
    %479 = vmatprep.subr.mxu0 0.0
    %480 = vmatpush1.xpose.msra.mxu0 0.0
    %481 = vmatprep.subr.mxu0 0.0
    %482 = vmatpush1.xpose.msra.mxu0 0.0
    %483 = vmatprep.subr.mxu0 0.0
    %484 = vmatpush1.xpose.msra.mxu0 0.0
    %485 = vmatprep.subr.mxu0 0.0
    %486 = vmatpush1.xpose.msra.mxu0 0.0
    %487 = vmatprep.subr.mxu0 0.0
    %488 = vmatpush1.xpose.msra.mxu0 0.0
    %489 = vmatprep.subr.mxu0 0.0
    %490 = vmatpush1.xpose.msra.mxu0 0.0
    %491 = vmatprep.subr.mxu0 0.0
    %492 = vmatpush1.xpose.msra.mxu0 0.0
    %493 = vmatprep.subr.mxu0 0.0
    %494 = vmatpush1.xpose.msra.mxu0 0.0
    %495 = vmatprep.subr.mxu0 0.0
    %496 = vmatpush1.xpose.msra.mxu0 0.0
    %497 = vmatprep.subr.mxu0 0.0
    %498 = vmatpush1.xpose.msra.mxu0 0.0
    %499 = vmatprep.subr.mxu0 0.0
    %500 = vmatpush1.xpose.msra.mxu0 0.0
    %501 = vmatprep.subr.mxu0 0.0
    %502 = vmatpush1.xpose.msra.mxu0 0.0
    %503 = vmatprep.subr.mxu0 0.0
    %504 = vmatpush1.xpose.msra.mxu0 0.0
    %505 = vmatprep.subr.mxu0 0.0
    %506 = vmatpush1.xpose.msra.mxu0 0.0
    %507 = vmatprep.subr.mxu0 0.0
    %508 = vmatpush1.xpose.msra.mxu0 0.0
    %509 = vmatprep.subr.mxu0 0.0
    %510 = vmatpush1.xpose.msra.mxu0 0.0
    %511 = vmatprep.subr.mxu0 0.0
    %512 = vmatpush1.xpose.msra.mxu0 0.0
    %513 = vmatprep.subr.mxu0 0.0
    %514 = vmatpush1.xpose.msra.mxu0 0.0
    %515 = vmatprep.subr.mxu0 0.0
    %516 = vmatpush1.xpose.msra.mxu0 0.0
    %517 = vmatprep.subr.mxu0 0.0
    %518 = vmatpush1.xpose.msra.mxu0 0.0
    %519 = vmatprep.subr.mxu0 0.0
    %520 = vmatpush1.xpose.msra.mxu0 0.0
    %521 = vmatprep.subr.mxu0 0.0
    %522 = vmatpush1.xpose.msra.mxu0 0.0
    %523 = vmatprep.subr.mxu0 0.0
    %524 = vmatpush1.xpose.msra.mxu0 0.0
    %525 = vmatprep.subr.mxu0 0.0
    %526 = vmatpush1.xpose.msra.mxu0 0.0
    %527 = vmatprep.subr.mxu0 0.0
    %528 = vmatpush1.xpose.msra.mxu0 0.0
    %529 = vmatprep.subr.mxu0 0.0
    %530 = vmatpush1.xpose.msra.mxu0 0.0
    %531 = vmatprep.subr.mxu0 0.0
    %532 = vmatpush1.xpose.msra.mxu0 0.0
    %533 = vmatprep.subr.mxu0 0.0
    %534 = vmatpush1.xpose.msra.mxu0 0.0
    %535 = vmatprep.subr.mxu0 0.0
    %536 = vmatpush1.xpose.msra.mxu0 0.0
    %537 = vmatprep.mubr.f32.mxu0 0.0
    %538 = vmatmul.mubr.f32.gmra.mrb[0].mxu0 %v471
    %v539 = vpop.f32.mrb[0].mxu0
    %v540 = vadd.f32 0.0, %v539
    %v541 = vpop.f32.mrb[0].mxu0
    %542 = vdwg.mxu0
    %v544 = vsel %vm176, %v469, 0
    %546 = vmatprep.subr.mxu0 0.0
    %547 = vmatpush1.xpose.msra.mxu0 %v363
    %548 = vmatprep.subr.mxu0 0.0
    %549 = vmatpush1.xpose.msra.mxu0 0.0
    %550 = vmatprep.subr.mxu0 0.0
    %551 = vmatpush1.xpose.msra.mxu0 0.0
    %552 = vmatprep.subr.mxu0 0.0
    %553 = vmatpush1.xpose.msra.mxu0 0.0
    %554 = vmatprep.subr.mxu0 0.0
    %555 = vmatpush1.xpose.msra.mxu0 0.0
    %556 = vmatprep.subr.mxu0 0.0
    %557 = vmatpush1.xpose.msra.mxu0 0.0
    %558 = vmatprep.subr.mxu0 0.0
    %559 = vmatpush1.xpose.msra.mxu0 0.0
    %560 = vmatprep.subr.mxu0 0.0
    %561 = vmatpush1.xpose.msra.mxu0 0.0
    %562 = vmatprep.subr.mxu0 0.0
    %563 = vmatpush1.xpose.msra.mxu0 0.0
    %564 = vmatprep.subr.mxu0 0.0
    %565 = vmatpush1.xpose.msra.mxu0 0.0
    %566 = vmatprep.subr.mxu0 0.0
    %567 = vmatpush1.xpose.msra.mxu0 0.0
    %568 = vmatprep.subr.mxu0 0.0
    %569 = vmatpush1.xpose.msra.mxu0 0.0
    %570 = vmatprep.subr.mxu0 0.0
    %571 = vmatpush1.xpose.msra.mxu0 0.0
    %572 = vmatprep.subr.mxu0 0.0
    %573 = vmatpush1.xpose.msra.mxu0 0.0
    %574 = vmatprep.subr.mxu0 0.0
    %575 = vmatpush1.xpose.msra.mxu0 0.0
    %576 = vmatprep.subr.mxu0 0.0
    %577 = vmatpush1.xpose.msra.mxu0 0.0
    %578 = vmatprep.subr.mxu0 0.0
    %579 = vmatpush1.xpose.msra.mxu0 0.0
    %580 = vmatprep.subr.mxu0 0.0
    %581 = vmatpush1.xpose.msra.mxu0 0.0
    %582 = vmatprep.subr.mxu0 0.0
    %583 = vmatpush1.xpose.msra.mxu0 0.0
    %584 = vmatprep.subr.mxu0 0.0
    %585 = vmatpush1.xpose.msra.mxu0 0.0
    %586 = vmatprep.subr.mxu0 0.0
    %587 = vmatpush1.xpose.msra.mxu0 0.0
    %588 = vmatprep.subr.mxu0 0.0
    %589 = vmatpush1.xpose.msra.mxu0 0.0
    %590 = vmatprep.subr.mxu0 0.0
    %591 = vmatpush1.xpose.msra.mxu0 0.0
    %592 = vmatprep.subr.mxu0 0.0
    %593 = vmatpush1.xpose.msra.mxu0 0.0
    %594 = vmatprep.subr.mxu0 0.0
    %595 = vmatpush1.xpose.msra.mxu0 0.0
    %596 = vmatprep.subr.mxu0 0.0
    %597 = vmatpush1.xpose.msra.mxu0 0.0
    %598 = vmatprep.subr.mxu0 0.0
    %599 = vmatpush1.xpose.msra.mxu0 0.0
    %600 = vmatprep.subr.mxu0 0.0
    %601 = vmatpush1.xpose.msra.mxu0 0.0
    %602 = vmatprep.subr.mxu0 0.0
    %603 = vmatpush1.xpose.msra.mxu0 0.0
    %604 = vmatprep.subr.mxu0 0.0
    %605 = vmatpush1.xpose.msra.mxu0 0.0
    %606 = vmatprep.subr.mxu0 0.0
    %607 = vmatpush1.xpose.msra.mxu0 0.0
    %608 = vmatprep.subr.mxu0 0.0
    %609 = vmatpush1.xpose.msra.mxu0 0.0
    %610 = vmatprep.mubr.f32.mxu0 0.0
    %611 = vmatmul.mubr.f32.gmra.mrb[0].mxu0 %v544
    %v612 = vpop.f32.mrb[0].mxu0
    %v613 = vadd.f32 0.0, %v612
    %v614 = vpop.f32.mrb[0].mxu0
    %615 = vdwg.mxu0
    %v616 = vmul.f32 %v540, 0.35355338
    %v617 = vmul.f32 %v613, 0.35355338
    %v618 = vadd.f32 %v616, %v154
    %v619 = vadd.f32 %v617, %v154
    %v620 = vsel %vm439, %v618, -inf
    %621 = vmax.xlane.f32.xlu0 %v620
    %v622 = vpop.xlane.xlu0 %621
    %v623 = vsel %vm439, %v619, -inf
    %624 = vmax.xlane.f32.xlu0 %v623
    %v625 = vpop.xlane.xlu0 %624
    %v626 = vsub.f32 %v618, %v622
    %v627 = vsub.f32 %v619, %v625
    %v628 = vmul.f32 %v626, 1.442695
    %v629 = vpow.pop %v628
    %v630 = vmul.f32 %v627, 1.442695
    %v631 = vpow.pop %v630
    %v632 = vsel %vm439, %v629, 0.0
    %633 = vadd.xlane.f32.xlu0 %v632
    %v634 = vpop.xlane.xlu0 %633
    %v635 = vsel %vm439, %v631, 0.0
    %636 = vadd.xlane.f32.xlu0 %v635
    %v637 = vpop.xlane.xlu0 %636
    %v638 = vrcp.pop %v634
    %v639 = vrcp.pop %v637
    %v640 = vmul.f32 %v629, %v638
    %v641 = vmul.f32 %v631, %v639
    %643 = vrot.lane.b32.xlu0 %v164, 64
    %v644 = vpop.permute.xlu0 %643
    %v646 = vmul.f32 %v271, %v644
    %v647 = vmul.f32 %v274, %v644
    %649 = vrot.lane.b32.xlu0 %v646, 64
    %v650 = vpop.permute.xlu0 %649
    %v653 = vsel %vm439, %v640, 0
    %655 = vmatprep.subr.mxu0 0.0
    %656 = vmatpush1.msra.mxu0 %v650
    %657 = vmatprep.subr.mxu0 0.0
    %658 = vmatpush1.msra.mxu0 0.0
    %659 = vmatprep.subr.mxu0 0.0
    %660 = vmatpush1.msra.mxu0 0.0
    %661 = vmatprep.subr.mxu0 0.0
    %662 = vmatpush1.msra.mxu0 0.0
    %663 = vmatprep.subr.mxu0 0.0
    %664 = vmatpush1.msra.mxu0 0.0
    %665 = vmatprep.subr.mxu0 0.0
    %666 = vmatpush1.msra.mxu0 0.0
    %667 = vmatprep.subr.mxu0 0.0
    %668 = vmatpush1.msra.mxu0 0.0
    %669 = vmatprep.subr.mxu0 0.0
    %670 = vmatpush1.msra.mxu0 0.0
    %671 = vmatprep.subr.mxu0 0.0
    %672 = vmatpush1.msra.mxu0 0.0
    %673 = vmatprep.subr.mxu0 0.0
    %674 = vmatpush1.msra.mxu0 0.0
    %675 = vmatprep.subr.mxu0 0.0
    %676 = vmatpush1.msra.mxu0 0.0
    %677 = vmatprep.subr.mxu0 0.0
    %678 = vmatpush1.msra.mxu0 0.0
    %679 = vmatprep.subr.mxu0 0.0
    %680 = vmatpush1.msra.mxu0 0.0
    %681 = vmatprep.subr.mxu0 0.0
    %682 = vmatpush1.msra.mxu0 0.0
    %683 = vmatprep.subr.mxu0 0.0
    %684 = vmatpush1.msra.mxu0 0.0
    %685 = vmatprep.subr.mxu0 0.0
    %686 = vmatpush1.msra.mxu0 0.0
    %687 = vmatprep.subr.mxu0 0.0
    %688 = vmatpush1.msra.mxu0 0.0
    %689 = vmatprep.subr.mxu0 0.0
    %690 = vmatpush1.msra.mxu0 0.0
    %691 = vmatprep.subr.mxu0 0.0
    %692 = vmatpush1.msra.mxu0 0.0
    %693 = vmatprep.subr.mxu0 0.0
    %694 = vmatpush1.msra.mxu0 0.0
    %695 = vmatprep.subr.mxu0 0.0
    %696 = vmatpush1.msra.mxu0 0.0
    %697 = vmatprep.subr.mxu0 0.0
    %698 = vmatpush1.msra.mxu0 0.0
    %699 = vmatprep.subr.mxu0 0.0
    %700 = vmatpush1.msra.mxu0 0.0
    %701 = vmatprep.subr.mxu0 0.0
    %702 = vmatpush1.msra.mxu0 0.0
    %703 = vmatprep.subr.mxu0 0.0
    %704 = vmatpush1.msra.mxu0 0.0
    %705 = vmatprep.subr.mxu0 0.0
    %706 = vmatpush1.msra.mxu0 0.0
    %707 = vmatprep.subr.mxu0 0.0
    %708 = vmatpush1.msra.mxu0 0.0
    %709 = vmatprep.subr.mxu0 0.0
    %710 = vmatpush1.msra.mxu0 0.0
    %711 = vmatprep.subr.mxu0 0.0
    %712 = vmatpush1.msra.mxu0 0.0
    %713 = vmatprep.subr.mxu0 0.0
    %714 = vmatpush1.msra.mxu0 0.0
    %715 = vmatprep.subr.mxu0 0.0
    %716 = vmatpush1.msra.mxu0 0.0
    %717 = vmatprep.subr.mxu0 0.0
    %718 = vmatpush1.msra.mxu0 0.0
    %719 = vmatprep.mubr.f32.mxu0 0.0
    %720 = vmatmul.mubr.f32.gmra.mrb[0].mxu0 %v653
    %v721 = vpop.f32.mrb[0].mxu0
    %v722 = vadd.f32 0.0, %v721
    %v723 = vpop.f32.mrb[0].mxu0
    %724 = vdwg.mxu0
    %726 = vrot.lane.b32.xlu0 %v647, 64
    %v727 = vpop.permute.xlu0 %726
    %v730 = vsel %vm439, %v641, 0
    %732 = vmatprep.subr.mxu0 0.0
    %733 = vmatpush1.msra.mxu0 %v727
    %734 = vmatprep.subr.mxu0 0.0
    %735 = vmatpush1.msra.mxu0 0.0
    %736 = vmatprep.subr.mxu0 0.0
    %737 = vmatpush1.msra.mxu0 0.0
    %738 = vmatprep.subr.mxu0 0.0
    %739 = vmatpush1.msra.mxu0 0.0
    %740 = vmatprep.subr.mxu0 0.0
    %741 = vmatpush1.msra.mxu0 0.0
    %742 = vmatprep.subr.mxu0 0.0
    %743 = vmatpush1.msra.mxu0 0.0
    %744 = vmatprep.subr.mxu0 0.0
    %745 = vmatpush1.msra.mxu0 0.0
    %746 = vmatprep.subr.mxu0 0.0
    %747 = vmatpush1.msra.mxu0 0.0
    %748 = vmatprep.subr.mxu0 0.0
    %749 = vmatpush1.msra.mxu0 0.0
    %750 = vmatprep.subr.mxu0 0.0
    %751 = vmatpush1.msra.mxu0 0.0
    %752 = vmatprep.subr.mxu0 0.0
    %753 = vmatpush1.msra.mxu0 0.0
    %754 = vmatprep.subr.mxu0 0.0
    %755 = vmatpush1.msra.mxu0 0.0
    %756 = vmatprep.subr.mxu0 0.0
    %757 = vmatpush1.msra.mxu0 0.0
    %758 = vmatprep.subr.mxu0 0.0
    %759 = vmatpush1.msra.mxu0 0.0
    %760 = vmatprep.subr.mxu0 0.0
    %761 = vmatpush1.msra.mxu0 0.0
    %762 = vmatprep.subr.mxu0 0.0
    %763 = vmatpush1.msra.mxu0 0.0
    %764 = vmatprep.subr.mxu0 0.0
    %765 = vmatpush1.msra.mxu0 0.0
    %766 = vmatprep.subr.mxu0 0.0
    %767 = vmatpush1.msra.mxu0 0.0
    %768 = vmatprep.subr.mxu0 0.0
    %769 = vmatpush1.msra.mxu0 0.0
    %770 = vmatprep.subr.mxu0 0.0
    %771 = vmatpush1.msra.mxu0 0.0
    %772 = vmatprep.subr.mxu0 0.0
    %773 = vmatpush1.msra.mxu0 0.0
    %774 = vmatprep.subr.mxu0 0.0
    %775 = vmatpush1.msra.mxu0 0.0
    %776 = vmatprep.subr.mxu0 0.0
    %777 = vmatpush1.msra.mxu0 0.0
    %778 = vmatprep.subr.mxu0 0.0
    %779 = vmatpush1.msra.mxu0 0.0
    %780 = vmatprep.subr.mxu0 0.0
    %781 = vmatpush1.msra.mxu0 0.0
    %782 = vmatprep.subr.mxu0 0.0
    %783 = vmatpush1.msra.mxu0 0.0
    %784 = vmatprep.subr.mxu0 0.0
    %785 = vmatpush1.msra.mxu0 0.0
    %786 = vmatprep.subr.mxu0 0.0
    %787 = vmatpush1.msra.mxu0 0.0
    %788 = vmatprep.subr.mxu0 0.0
    %789 = vmatpush1.msra.mxu0 0.0
    %790 = vmatprep.subr.mxu0 0.0
    %791 = vmatpush1.msra.mxu0 0.0
    %792 = vmatprep.subr.mxu0 0.0
    %793 = vmatpush1.msra.mxu0 0.0
    %794 = vmatprep.subr.mxu0 0.0
    %795 = vmatpush1.msra.mxu0 0.0
    %796 = vmatprep.mubr.f32.mxu0 0.0
    %797 = vmatmul.mubr.f32.gmra.mrb[0].mxu0 %v730
    %v798 = vpop.f32.mrb[0].mxu0
    %v799 = vadd.f32 0.0, %v798
    %v800 = vpop.f32.mrb[0].mxu0
    %801 = vdwg.mxu0
    %803 = vrot.lane.b32.xlu0 %v466, 64
    %v804 = vpop.permute.xlu0 %803
    %v807 = vsel %vm439, %v460, 0
    %809 = vmatprep.subr.mxu0 0.0
    %810 = vmatpush1.msra.mxu0 %v804
    %811 = vmatprep.subr.mxu0 0.0
    %812 = vmatpush1.msra.mxu0 0.0
    %813 = vmatprep.subr.mxu0 0.0
    %814 = vmatpush1.msra.mxu0 0.0
    %815 = vmatprep.subr.mxu0 0.0
    %816 = vmatpush1.msra.mxu0 0.0
    %817 = vmatprep.subr.mxu0 0.0
    %818 = vmatpush1.msra.mxu0 0.0
    %819 = vmatprep.subr.mxu0 0.0
    %820 = vmatpush1.msra.mxu0 0.0
    %821 = vmatprep.subr.mxu0 0.0
    %822 = vmatpush1.msra.mxu0 0.0
    %823 = vmatprep.subr.mxu0 0.0
    %824 = vmatpush1.msra.mxu0 0.0
    %825 = vmatprep.subr.mxu0 0.0
    %826 = vmatpush1.msra.mxu0 0.0
    %827 = vmatprep.subr.mxu0 0.0
    %828 = vmatpush1.msra.mxu0 0.0
    %829 = vmatprep.subr.mxu0 0.0
    %830 = vmatpush1.msra.mxu0 0.0
    %831 = vmatprep.subr.mxu0 0.0
    %832 = vmatpush1.msra.mxu0 0.0
    %833 = vmatprep.subr.mxu0 0.0
    %834 = vmatpush1.msra.mxu0 0.0
    %835 = vmatprep.subr.mxu0 0.0
    %836 = vmatpush1.msra.mxu0 0.0
    %837 = vmatprep.subr.mxu0 0.0
    %838 = vmatpush1.msra.mxu0 0.0
    %839 = vmatprep.subr.mxu0 0.0
    %840 = vmatpush1.msra.mxu0 0.0
    %841 = vmatprep.subr.mxu0 0.0
    %842 = vmatpush1.msra.mxu0 0.0
    %843 = vmatprep.subr.mxu0 0.0
    %844 = vmatpush1.msra.mxu0 0.0
    %845 = vmatprep.subr.mxu0 0.0
    %846 = vmatpush1.msra.mxu0 0.0
    %847 = vmatprep.subr.mxu0 0.0
    %848 = vmatpush1.msra.mxu0 0.0
    %849 = vmatprep.subr.mxu0 0.0
    %850 = vmatpush1.msra.mxu0 0.0
    %851 = vmatprep.subr.mxu0 0.0
    %852 = vmatpush1.msra.mxu0 0.0
    %853 = vmatprep.subr.mxu0 0.0
    %854 = vmatpush1.msra.mxu0 0.0
    %855 = vmatprep.subr.mxu0 0.0
    %856 = vmatpush1.msra.mxu0 0.0
    %857 = vmatprep.subr.mxu0 0.0
    %858 = vmatpush1.msra.mxu0 0.0
    %859 = vmatprep.subr.mxu0 0.0
    %860 = vmatpush1.msra.mxu0 0.0
    %861 = vmatprep.subr.mxu0 0.0
    %862 = vmatpush1.msra.mxu0 0.0
    %863 = vmatprep.subr.mxu0 0.0
    %864 = vmatpush1.msra.mxu0 0.0
    %865 = vmatprep.subr.mxu0 0.0
    %866 = vmatpush1.msra.mxu0 0.0
    %867 = vmatprep.subr.mxu0 0.0
    %868 = vmatpush1.msra.mxu0 0.0
    %869 = vmatprep.subr.mxu0 0.0
    %870 = vmatpush1.msra.mxu0 0.0
    %871 = vmatprep.subr.mxu0 0.0
    %872 = vmatpush1.msra.mxu0 0.0
    %873 = vmatprep.mubr.f32.mxu0 0.0
    %874 = vmatmul.mubr.f32.gmra.mrb[0].mxu0 %v807
    %v875 = vpop.f32.mrb[0].mxu0
    %v876 = vadd.f32 %v722, %v875
    %v877 = vpop.f32.mrb[0].mxu0
    %878 = vdwg.mxu0
    %880 = vrot.lane.b32.xlu0 %v467, 64
    %v881 = vpop.permute.xlu0 %880
    %v884 = vsel %vm439, %v461, 0
    %886 = vmatprep.subr.mxu0 0.0
    %887 = vmatpush1.msra.mxu0 %v881
    %888 = vmatprep.subr.mxu0 0.0
    %889 = vmatpush1.msra.mxu0 0.0
    %890 = vmatprep.subr.mxu0 0.0
    %891 = vmatpush1.msra.mxu0 0.0
    %892 = vmatprep.subr.mxu0 0.0
    %893 = vmatpush1.msra.mxu0 0.0
    %894 = vmatprep.subr.mxu0 0.0
    %895 = vmatpush1.msra.mxu0 0.0
    %896 = vmatprep.subr.mxu0 0.0
    %897 = vmatpush1.msra.mxu0 0.0
    %898 = vmatprep.subr.mxu0 0.0
    %899 = vmatpush1.msra.mxu0 0.0
    %900 = vmatprep.subr.mxu0 0.0
    %901 = vmatpush1.msra.mxu0 0.0
    %902 = vmatprep.subr.mxu0 0.0
    %903 = vmatpush1.msra.mxu0 0.0
    %904 = vmatprep.subr.mxu0 0.0
    %905 = vmatpush1.msra.mxu0 0.0
    %906 = vmatprep.subr.mxu0 0.0
    %907 = vmatpush1.msra.mxu0 0.0
    %908 = vmatprep.subr.mxu0 0.0
    %909 = vmatpush1.msra.mxu0 0.0
    %910 = vmatprep.subr.mxu0 0.0
    %911 = vmatpush1.msra.mxu0 0.0
    %912 = vmatprep.subr.mxu0 0.0
    %913 = vmatpush1.msra.mxu0 0.0
    %914 = vmatprep.subr.mxu0 0.0
    %915 = vmatpush1.msra.mxu0 0.0
    %916 = vmatprep.subr.mxu0 0.0
    %917 = vmatpush1.msra.mxu0 0.0
    %918 = vmatprep.subr.mxu0 0.0
    %919 = vmatpush1.msra.mxu0 0.0
    %920 = vmatprep.subr.mxu0 0.0
    %921 = vmatpush1.msra.mxu0 0.0
    %922 = vmatprep.subr.mxu0 0.0
    %923 = vmatpush1.msra.mxu0 0.0
    %924 = vmatprep.subr.mxu0 0.0
    %925 = vmatpush1.msra.mxu0 0.0
    %926 = vmatprep.subr.mxu0 0.0
    %927 = vmatpush1.msra.mxu0 0.0
    %928 = vmatprep.subr.mxu0 0.0
    %929 = vmatpush1.msra.mxu0 0.0
    %930 = vmatprep.subr.mxu0 0.0
    %931 = vmatpush1.msra.mxu0 0.0
    %932 = vmatprep.subr.mxu0 0.0
    %933 = vmatpush1.msra.mxu0 0.0
    %934 = vmatprep.subr.mxu0 0.0
    %935 = vmatpush1.msra.mxu0 0.0
    %936 = vmatprep.subr.mxu0 0.0
    %937 = vmatpush1.msra.mxu0 0.0
    %938 = vmatprep.subr.mxu0 0.0
    %939 = vmatpush1.msra.mxu0 0.0
    %940 = vmatprep.subr.mxu0 0.0
    %941 = vmatpush1.msra.mxu0 0.0
    %942 = vmatprep.subr.mxu0 0.0
    %943 = vmatpush1.msra.mxu0 0.0
    %944 = vmatprep.subr.mxu0 0.0
    %945 = vmatpush1.msra.mxu0 0.0
    %946 = vmatprep.subr.mxu0 0.0
    %947 = vmatpush1.msra.mxu0 0.0
    %948 = vmatprep.subr.mxu0 0.0
    %949 = vmatpush1.msra.mxu0 0.0
    %950 = vmatprep.mubr.f32.mxu0 0.0
    %951 = vmatmul.mubr.f32.gmra.mrb[0].mxu0 %v884
    %v952 = vpop.f32.mrb[0].mxu0
    %v953 = vadd.f32 %v799, %v952
    %v954 = vpop.f32.mrb[0].mxu0
    %955 = vdwg.mxu0
    %v956 = vmul.f32 %v271, %v169
    %v957 = vmul.f32 %v274, %v169
    %v959 = vsel %vm176, %v956, 0
    %961 = vmatprep.subr.mxu0 0.0
    %962 = vmatpush1.xpose.msra.mxu0 %v285
    %963 = vmatprep.subr.mxu0 0.0
    %964 = vmatpush1.xpose.msra.mxu0 0.0
    %965 = vmatprep.subr.mxu0 0.0
    %966 = vmatpush1.xpose.msra.mxu0 0.0
    %967 = vmatprep.subr.mxu0 0.0
    %968 = vmatpush1.xpose.msra.mxu0 0.0
    %969 = vmatprep.subr.mxu0 0.0
    %970 = vmatpush1.xpose.msra.mxu0 0.0
    %971 = vmatprep.subr.mxu0 0.0
    %972 = vmatpush1.xpose.msra.mxu0 0.0
    %973 = vmatprep.subr.mxu0 0.0
    %974 = vmatpush1.xpose.msra.mxu0 0.0
    %975 = vmatprep.subr.mxu0 0.0
    %976 = vmatpush1.xpose.msra.mxu0 0.0
    %977 = vmatprep.subr.mxu0 0.0
    %978 = vmatpush1.xpose.msra.mxu0 0.0
    %979 = vmatprep.subr.mxu0 0.0
    %980 = vmatpush1.xpose.msra.mxu0 0.0
    %981 = vmatprep.subr.mxu0 0.0
    %982 = vmatpush1.xpose.msra.mxu0 0.0
    %983 = vmatprep.subr.mxu0 0.0
    %984 = vmatpush1.xpose.msra.mxu0 0.0
    %985 = vmatprep.subr.mxu0 0.0
    %986 = vmatpush1.xpose.msra.mxu0 0.0
    %987 = vmatprep.subr.mxu0 0.0
    %988 = vmatpush1.xpose.msra.mxu0 0.0
    %989 = vmatprep.subr.mxu0 0.0
    %990 = vmatpush1.xpose.msra.mxu0 0.0
    %991 = vmatprep.subr.mxu0 0.0
    %992 = vmatpush1.xpose.msra.mxu0 0.0
    %993 = vmatprep.subr.mxu0 0.0
    %994 = vmatpush1.xpose.msra.mxu0 0.0
    %995 = vmatprep.subr.mxu0 0.0
    %996 = vmatpush1.xpose.msra.mxu0 0.0
    %997 = vmatprep.subr.mxu0 0.0
    %998 = vmatpush1.xpose.msra.mxu0 0.0
    %999 = vmatprep.subr.mxu0 0.0
    %1000 = vmatpush1.xpose.msra.mxu0 0.0
    %1001 = vmatprep.subr.mxu0 0.0
    %1002 = vmatpush1.xpose.msra.mxu0 0.0
    %1003 = vmatprep.subr.mxu0 0.0
    %1004 = vmatpush1.xpose.msra.mxu0 0.0
    %1005 = vmatprep.subr.mxu0 0.0
    %1006 = vmatpush1.xpose.msra.mxu0 0.0
    %1007 = vmatprep.subr.mxu0 0.0
    %1008 = vmatpush1.xpose.msra.mxu0 0.0
    %1009 = vmatprep.subr.mxu0 0.0
    %1010 = vmatpush1.xpose.msra.mxu0 0.0
    %1011 = vmatprep.subr.mxu0 0.0
    %1012 = vmatpush1.xpose.msra.mxu0 0.0
    %1013 = vmatprep.subr.mxu0 0.0
    %1014 = vmatpush1.xpose.msra.mxu0 0.0
    %1015 = vmatprep.subr.mxu0 0.0
    %1016 = vmatpush1.xpose.msra.mxu0 0.0
    %1017 = vmatprep.subr.mxu0 0.0
    %1018 = vmatpush1.xpose.msra.mxu0 0.0
    %1019 = vmatprep.subr.mxu0 0.0
    %1020 = vmatpush1.xpose.msra.mxu0 0.0
    %1021 = vmatprep.subr.mxu0 0.0
    %1022 = vmatpush1.xpose.msra.mxu0 0.0
    %1023 = vmatprep.subr.mxu0 0.0
    %1024 = vmatpush1.xpose.msra.mxu0 0.0
    %1025 = vmatprep.mubr.f32.mxu0 0.0
    %1026 = vmatmul.mubr.f32.gmra.mrb[0].mxu0 %v959
    %v1027 = vpop.f32.mrb[0].mxu0
    %v1028 = vadd.f32 0.0, %v1027
    %v1029 = vpop.f32.mrb[0].mxu0
    %1030 = vdwg.mxu0
    %v1032 = vsel %vm176, %v957, 0
    %1034 = vmatprep.subr.mxu0 0.0
    %1035 = vmatpush1.xpose.msra.mxu0 %v363
    %1036 = vmatprep.subr.mxu0 0.0
    %1037 = vmatpush1.xpose.msra.mxu0 0.0
    %1038 = vmatprep.subr.mxu0 0.0
    %1039 = vmatpush1.xpose.msra.mxu0 0.0
    %1040 = vmatprep.subr.mxu0 0.0
    %1041 = vmatpush1.xpose.msra.mxu0 0.0
    %1042 = vmatprep.subr.mxu0 0.0
    %1043 = vmatpush1.xpose.msra.mxu0 0.0
    %1044 = vmatprep.subr.mxu0 0.0
    %1045 = vmatpush1.xpose.msra.mxu0 0.0
    %1046 = vmatprep.subr.mxu0 0.0
    %1047 = vmatpush1.xpose.msra.mxu0 0.0
    %1048 = vmatprep.subr.mxu0 0.0
    %1049 = vmatpush1.xpose.msra.mxu0 0.0
    %1050 = vmatprep.subr.mxu0 0.0
    %1051 = vmatpush1.xpose.msra.mxu0 0.0
    %1052 = vmatprep.subr.mxu0 0.0
    %1053 = vmatpush1.xpose.msra.mxu0 0.0
    %1054 = vmatprep.subr.mxu0 0.0
    %1055 = vmatpush1.xpose.msra.mxu0 0.0
    %1056 = vmatprep.subr.mxu0 0.0
    %1057 = vmatpush1.xpose.msra.mxu0 0.0
    %1058 = vmatprep.subr.mxu0 0.0
    %1059 = vmatpush1.xpose.msra.mxu0 0.0
    %1060 = vmatprep.subr.mxu0 0.0
    %1061 = vmatpush1.xpose.msra.mxu0 0.0
    %1062 = vmatprep.subr.mxu0 0.0
    %1063 = vmatpush1.xpose.msra.mxu0 0.0
    %1064 = vmatprep.subr.mxu0 0.0
    %1065 = vmatpush1.xpose.msra.mxu0 0.0
    %1066 = vmatprep.subr.mxu0 0.0
    %1067 = vmatpush1.xpose.msra.mxu0 0.0
    %1068 = vmatprep.subr.mxu0 0.0
    %1069 = vmatpush1.xpose.msra.mxu0 0.0
    %1070 = vmatprep.subr.mxu0 0.0
    %1071 = vmatpush1.xpose.msra.mxu0 0.0
    %1072 = vmatprep.subr.mxu0 0.0
    %1073 = vmatpush1.xpose.msra.mxu0 0.0
    %1074 = vmatprep.subr.mxu0 0.0
    %1075 = vmatpush1.xpose.msra.mxu0 0.0
    %1076 = vmatprep.subr.mxu0 0.0
    %1077 = vmatpush1.xpose.msra.mxu0 0.0
    %1078 = vmatprep.subr.mxu0 0.0
    %1079 = vmatpush1.xpose.msra.mxu0 0.0
    %1080 = vmatprep.subr.mxu0 0.0
    %1081 = vmatpush1.xpose.msra.mxu0 0.0
    %1082 = vmatprep.subr.mxu0 0.0
    %1083 = vmatpush1.xpose.msra.mxu0 0.0
    %1084 = vmatprep.subr.mxu0 0.0
    %1085 = vmatpush1.xpose.msra.mxu0 0.0
    %1086 = vmatprep.subr.mxu0 0.0
    %1087 = vmatpush1.xpose.msra.mxu0 0.0
    %1088 = vmatprep.subr.mxu0 0.0
    %1089 = vmatpush1.xpose.msra.mxu0 0.0
    %1090 = vmatprep.subr.mxu0 0.0
    %1091 = vmatpush1.xpose.msra.mxu0 0.0
    %1092 = vmatprep.subr.mxu0 0.0
    %1093 = vmatpush1.xpose.msra.mxu0 0.0
    %1094 = vmatprep.subr.mxu0 0.0
    %1095 = vmatpush1.xpose.msra.mxu0 0.0
    %1096 = vmatprep.subr.mxu0 0.0
    %1097 = vmatpush1.xpose.msra.mxu0 0.0
    %1098 = vmatprep.mubr.f32.mxu0 0.0
    %1099 = vmatmul.mubr.f32.gmra.mrb[0].mxu0 %v1032
    %v1100 = vpop.f32.mrb[0].mxu0
    %v1101 = vadd.f32 0.0, %v1100
    %v1102 = vpop.f32.mrb[0].mxu0
    %1103 = vdwg.mxu0
    %v1104 = vmul.f32 %v1028, 0.35355338
    %v1105 = vmul.f32 %v1101, 0.35355338
    %v1106 = vadd.f32 %v1104, %v154
    %v1107 = vadd.f32 %v1105, %v154
    %v1108 = vsel %vm439, %v1106, -inf
    %1109 = vmax.xlane.f32.xlu0 %v1108
    %v1110 = vpop.xlane.xlu0 %1109
    %v1111 = vsel %vm439, %v1107, -inf
    %1112 = vmax.xlane.f32.xlu0 %v1111
    %v1113 = vpop.xlane.xlu0 %1112
    %v1114 = vsub.f32 %v1106, %v1110
    %v1115 = vsub.f32 %v1107, %v1113
    %v1116 = vmul.f32 %v1114, 1.442695
    %v1117 = vpow.pop %v1116
    %v1118 = vmul.f32 %v1115, 1.442695
    %v1119 = vpow.pop %v1118
    %v1120 = vsel %vm439, %v1117, 0.0
    %1121 = vadd.xlane.f32.xlu0 %v1120
    %v1122 = vpop.xlane.xlu0 %1121
    %v1123 = vsel %vm439, %v1119, 0.0
    %1124 = vadd.xlane.f32.xlu0 %v1123
    %v1125 = vpop.xlane.xlu0 %1124
    %v1126 = vrcp.pop %v1122
    %v1127 = vrcp.pop %v1125
    %v1128 = vmul.f32 %v1117, %v1126
    %v1129 = vmul.f32 %v1119, %v1127
    %1131 = vrot.lane.b32.xlu0 %v169, 64
    %v1132 = vpop.permute.xlu0 %1131
    %v1134 = vmul.f32 %v271, %v1132
    %v1135 = vmul.f32 %v274, %v1132
    %1137 = vrot.lane.b32.xlu0 %v1134, 64
    %v1138 = vpop.permute.xlu0 %1137
    %v1141 = vsel %vm439, %v1128, 0
    %1143 = vmatprep.subr.mxu0 0.0
    %1144 = vmatpush1.msra.mxu0 %v1138
    %1145 = vmatprep.subr.mxu0 0.0
    %1146 = vmatpush1.msra.mxu0 0.0
    %1147 = vmatprep.subr.mxu0 0.0
    %1148 = vmatpush1.msra.mxu0 0.0
    %1149 = vmatprep.subr.mxu0 0.0
    %1150 = vmatpush1.msra.mxu0 0.0
    %1151 = vmatprep.subr.mxu0 0.0
    %1152 = vmatpush1.msra.mxu0 0.0
    %1153 = vmatprep.subr.mxu0 0.0
    %1154 = vmatpush1.msra.mxu0 0.0
    %1155 = vmatprep.subr.mxu0 0.0
    %1156 = vmatpush1.msra.mxu0 0.0
    %1157 = vmatprep.subr.mxu0 0.0
    %1158 = vmatpush1.msra.mxu0 0.0
    %1159 = vmatprep.subr.mxu0 0.0
    %1160 = vmatpush1.msra.mxu0 0.0
    %1161 = vmatprep.subr.mxu0 0.0
    %1162 = vmatpush1.msra.mxu0 0.0
    %1163 = vmatprep.subr.mxu0 0.0
    %1164 = vmatpush1.msra.mxu0 0.0
    %1165 = vmatprep.subr.mxu0 0.0
    %1166 = vmatpush1.msra.mxu0 0.0
    %1167 = vmatprep.subr.mxu0 0.0
    %1168 = vmatpush1.msra.mxu0 0.0
    %1169 = vmatprep.subr.mxu0 0.0
    %1170 = vmatpush1.msra.mxu0 0.0
    %1171 = vmatprep.subr.mxu0 0.0
    %1172 = vmatpush1.msra.mxu0 0.0
    %1173 = vmatprep.subr.mxu0 0.0
    %1174 = vmatpush1.msra.mxu0 0.0
    %1175 = vmatprep.subr.mxu0 0.0
    %1176 = vmatpush1.msra.mxu0 0.0
    %1177 = vmatprep.subr.mxu0 0.0
    %1178 = vmatpush1.msra.mxu0 0.0
    %1179 = vmatprep.subr.mxu0 0.0
    %1180 = vmatpush1.msra.mxu0 0.0
    %1181 = vmatprep.subr.mxu0 0.0
    %1182 = vmatpush1.msra.mxu0 0.0
    %1183 = vmatprep.subr.mxu0 0.0
    %1184 = vmatpush1.msra.mxu0 0.0
    %1185 = vmatprep.subr.mxu0 0.0
    %1186 = vmatpush1.msra.mxu0 0.0
    %1187 = vmatprep.subr.mxu0 0.0
    %1188 = vmatpush1.msra.mxu0 0.0
    %1189 = vmatprep.subr.mxu0 0.0
    %1190 = vmatpush1.msra.mxu0 0.0
    %1191 = vmatprep.subr.mxu0 0.0
    %1192 = vmatpush1.msra.mxu0 0.0
    %1193 = vmatprep.subr.mxu0 0.0
    %1194 = vmatpush1.msra.mxu0 0.0
    %1195 = vmatprep.subr.mxu0 0.0
    %1196 = vmatpush1.msra.mxu0 0.0
    %1197 = vmatprep.subr.mxu0 0.0
    %1198 = vmatpush1.msra.mxu0 0.0
    %1199 = vmatprep.subr.mxu0 0.0
    %1200 = vmatpush1.msra.mxu0 0.0
    %1201 = vmatprep.subr.mxu0 0.0
    %1202 = vmatpush1.msra.mxu0 0.0
    %1203 = vmatprep.subr.mxu0 0.0
    %1204 = vmatpush1.msra.mxu0 0.0
    %1205 = vmatprep.subr.mxu0 0.0
    %1206 = vmatpush1.msra.mxu0 0.0
    %1207 = vmatprep.mubr.f32.mxu0 0.0
    %1208 = vmatmul.mubr.f32.gmra.mrb[0].mxu0 %v1141
    %v1209 = vpop.f32.mrb[0].mxu0
    %v1210 = vadd.f32 0.0, %v1209
    %v1211 = vpop.f32.mrb[0].mxu0
    %1212 = vdwg.mxu0
    %1214 = vrot.lane.b32.xlu0 %v1135, 64
    %v1215 = vpop.permute.xlu0 %1214
    %v1218 = vsel %vm439, %v1129, 0
    %1220 = vmatprep.subr.mxu0 0.0
    %1221 = vmatpush1.msra.mxu0 %v1215
    %1222 = vmatprep.subr.mxu0 0.0
    %1223 = vmatpush1.msra.mxu0 0.0
    %1224 = vmatprep.subr.mxu0 0.0
    %1225 = vmatpush1.msra.mxu0 0.0
    %1226 = vmatprep.subr.mxu0 0.0
    %1227 = vmatpush1.msra.mxu0 0.0
    %1228 = vmatprep.subr.mxu0 0.0
    %1229 = vmatpush1.msra.mxu0 0.0
    %1230 = vmatprep.subr.mxu0 0.0
    %1231 = vmatpush1.msra.mxu0 0.0
    %1232 = vmatprep.subr.mxu0 0.0
    %1233 = vmatpush1.msra.mxu0 0.0
    %1234 = vmatprep.subr.mxu0 0.0
    %1235 = vmatpush1.msra.mxu0 0.0
    %1236 = vmatprep.subr.mxu0 0.0
    %1237 = vmatpush1.msra.mxu0 0.0
    %1238 = vmatprep.subr.mxu0 0.0
    %1239 = vmatpush1.msra.mxu0 0.0
    %1240 = vmatprep.subr.mxu0 0.0
    %1241 = vmatpush1.msra.mxu0 0.0
    %1242 = vmatprep.subr.mxu0 0.0
    %1243 = vmatpush1.msra.mxu0 0.0
    %1244 = vmatprep.subr.mxu0 0.0
    %1245 = vmatpush1.msra.mxu0 0.0
    %1246 = vmatprep.subr.mxu0 0.0
    %1247 = vmatpush1.msra.mxu0 0.0
    %1248 = vmatprep.subr.mxu0 0.0
    %1249 = vmatpush1.msra.mxu0 0.0
    %1250 = vmatprep.subr.mxu0 0.0
    %1251 = vmatpush1.msra.mxu0 0.0
    %1252 = vmatprep.subr.mxu0 0.0
    %1253 = vmatpush1.msra.mxu0 0.0
    %1254 = vmatprep.subr.mxu0 0.0
    %1255 = vmatpush1.msra.mxu0 0.0
    %1256 = vmatprep.subr.mxu0 0.0
    %1257 = vmatpush1.msra.mxu0 0.0
    %1258 = vmatprep.subr.mxu0 0.0
    %1259 = vmatpush1.msra.mxu0 0.0
    %1260 = vmatprep.subr.mxu0 0.0
    %1261 = vmatpush1.msra.mxu0 0.0
    %1262 = vmatprep.subr.mxu0 0.0
    %1263 = vmatpush1.msra.mxu0 0.0
    %1264 = vmatprep.subr.mxu0 0.0
    %1265 = vmatpush1.msra.mxu0 0.0
    %1266 = vmatprep.subr.mxu0 0.0
    %1267 = vmatpush1.msra.mxu0 0.0
    %1268 = vmatprep.subr.mxu0 0.0
    %1269 = vmatpush1.msra.mxu0 0.0
    %1270 = vmatprep.subr.mxu0 0.0
    %1271 = vmatpush1.msra.mxu0 0.0
    %1272 = vmatprep.subr.mxu0 0.0
    %1273 = vmatpush1.msra.mxu0 0.0
    %1274 = vmatprep.subr.mxu0 0.0
    %1275 = vmatpush1.msra.mxu0 0.0
    %1276 = vmatprep.subr.mxu0 0.0
    %1277 = vmatpush1.msra.mxu0 0.0
    %1278 = vmatprep.subr.mxu0 0.0
    %1279 = vmatpush1.msra.mxu0 0.0
    %1280 = vmatprep.subr.mxu0 0.0
    %1281 = vmatpush1.msra.mxu0 0.0
    %1282 = vmatprep.subr.mxu0 0.0
    %1283 = vmatpush1.msra.mxu0 0.0
    %1284 = vmatprep.mubr.f32.mxu0 0.0
    %1285 = vmatmul.mubr.f32.gmra.mrb[0].mxu0 %v1218
    %v1286 = vpop.f32.mrb[0].mxu0
    %v1287 = vadd.f32 0.0, %v1286
    %v1288 = vpop.f32.mrb[0].mxu0
    %1289 = vdwg.mxu0
    %v1290 = vadd.f32 %v876, %v1210
    %v1291 = vadd.f32 %v953, %v1287
    %v1292 = vmul.f32 %v271, %v174
    %v1293 = vmul.f32 %v274, %v174
    %v1295 = vsel %vm176, %v1292, 0
    %1297 = vmatprep.subr.mxu0 0.0
    %1298 = vmatpush1.xpose.msra.mxu0 %v285
    %1299 = vmatprep.subr.mxu0 0.0
    %1300 = vmatpush1.xpose.msra.mxu0 0.0
    %1301 = vmatprep.subr.mxu0 0.0
    %1302 = vmatpush1.xpose.msra.mxu0 0.0
    %1303 = vmatprep.subr.mxu0 0.0
    %1304 = vmatpush1.xpose.msra.mxu0 0.0
    %1305 = vmatprep.subr.mxu0 0.0
    %1306 = vmatpush1.xpose.msra.mxu0 0.0
    %1307 = vmatprep.subr.mxu0 0.0
    %1308 = vmatpush1.xpose.msra.mxu0 0.0
    %1309 = vmatprep.subr.mxu0 0.0
    %1310 = vmatpush1.xpose.msra.mxu0 0.0
    %1311 = vmatprep.subr.mxu0 0.0
    %1312 = vmatpush1.xpose.msra.mxu0 0.0
    %1313 = vmatprep.subr.mxu0 0.0
    %1314 = vmatpush1.xpose.msra.mxu0 0.0
    %1315 = vmatprep.subr.mxu0 0.0
    %1316 = vmatpush1.xpose.msra.mxu0 0.0
    %1317 = vmatprep.subr.mxu0 0.0
    %1318 = vmatpush1.xpose.msra.mxu0 0.0
    %1319 = vmatprep.subr.mxu0 0.0
    %1320 = vmatpush1.xpose.msra.mxu0 0.0
    %1321 = vmatprep.subr.mxu0 0.0
    %1322 = vmatpush1.xpose.msra.mxu0 0.0
    %1323 = vmatprep.subr.mxu0 0.0
    %1324 = vmatpush1.xpose.msra.mxu0 0.0
    %1325 = vmatprep.subr.mxu0 0.0
    %1326 = vmatpush1.xpose.msra.mxu0 0.0
    %1327 = vmatprep.subr.mxu0 0.0
    %1328 = vmatpush1.xpose.msra.mxu0 0.0
    %1329 = vmatprep.subr.mxu0 0.0
    %1330 = vmatpush1.xpose.msra.mxu0 0.0
    %1331 = vmatprep.subr.mxu0 0.0
    %1332 = vmatpush1.xpose.msra.mxu0 0.0
    %1333 = vmatprep.subr.mxu0 0.0
    %1334 = vmatpush1.xpose.msra.mxu0 0.0
    %1335 = vmatprep.subr.mxu0 0.0
    %1336 = vmatpush1.xpose.msra.mxu0 0.0
    %1337 = vmatprep.subr.mxu0 0.0
    %1338 = vmatpush1.xpose.msra.mxu0 0.0
    %1339 = vmatprep.subr.mxu0 0.0
    %1340 = vmatpush1.xpose.msra.mxu0 0.0
    %1341 = vmatprep.subr.mxu0 0.0
    %1342 = vmatpush1.xpose.msra.mxu0 0.0
    %1343 = vmatprep.subr.mxu0 0.0
    %1344 = vmatpush1.xpose.msra.mxu0 0.0
    %1345 = vmatprep.subr.mxu0 0.0
    %1346 = vmatpush1.xpose.msra.mxu0 0.0
    %1347 = vmatprep.subr.mxu0 0.0
    %1348 = vmatpush1.xpose.msra.mxu0 0.0
    %1349 = vmatprep.subr.mxu0 0.0
    %1350 = vmatpush1.xpose.msra.mxu0 0.0
    %1351 = vmatprep.subr.mxu0 0.0
    %1352 = vmatpush1.xpose.msra.mxu0 0.0
    %1353 = vmatprep.subr.mxu0 0.0
    %1354 = vmatpush1.xpose.msra.mxu0 0.0
    %1355 = vmatprep.subr.mxu0 0.0
    %1356 = vmatpush1.xpose.msra.mxu0 0.0
    %1357 = vmatprep.subr.mxu0 0.0
    %1358 = vmatpush1.xpose.msra.mxu0 0.0
    %1359 = vmatprep.subr.mxu0 0.0
    %1360 = vmatpush1.xpose.msra.mxu0 0.0
    %1361 = vmatprep.mubr.f32.mxu0 0.0
    %1362 = vmatmul.mubr.f32.gmra.mrb[0].mxu0 %v1295
    %v1363 = vpop.f32.mrb[0].mxu0
    %v1364 = vadd.f32 0.0, %v1363
    %v1365 = vpop.f32.mrb[0].mxu0
    %1366 = vdwg.mxu0
    %v1368 = vsel %vm176, %v1293, 0
    %1370 = vmatprep.subr.mxu0 0.0
    %1371 = vmatpush1.xpose.msra.mxu0 %v363
    %1372 = vmatprep.subr.mxu0 0.0
    %1373 = vmatpush1.xpose.msra.mxu0 0.0
    %1374 = vmatprep.subr.mxu0 0.0
    %1375 = vmatpush1.xpose.msra.mxu0 0.0
    %1376 = vmatprep.subr.mxu0 0.0
    %1377 = vmatpush1.xpose.msra.mxu0 0.0
    %1378 = vmatprep.subr.mxu0 0.0
    %1379 = vmatpush1.xpose.msra.mxu0 0.0
    %1380 = vmatprep.subr.mxu0 0.0
    %1381 = vmatpush1.xpose.msra.mxu0 0.0
    %1382 = vmatprep.subr.mxu0 0.0
    %1383 = vmatpush1.xpose.msra.mxu0 0.0
    %1384 = vmatprep.subr.mxu0 0.0
    %1385 = vmatpush1.xpose.msra.mxu0 0.0
    %1386 = vmatprep.subr.mxu0 0.0
    %1387 = vmatpush1.xpose.msra.mxu0 0.0
    %1388 = vmatprep.subr.mxu0 0.0
    %1389 = vmatpush1.xpose.msra.mxu0 0.0
    %1390 = vmatprep.subr.mxu0 0.0
    %1391 = vmatpush1.xpose.msra.mxu0 0.0
    %1392 = vmatprep.subr.mxu0 0.0
    %1393 = vmatpush1.xpose.msra.mxu0 0.0
    %1394 = vmatprep.subr.mxu0 0.0
    %1395 = vmatpush1.xpose.msra.mxu0 0.0
    %1396 = vmatprep.subr.mxu0 0.0
    %1397 = vmatpush1.xpose.msra.mxu0 0.0
    %1398 = vmatprep.subr.mxu0 0.0
    %1399 = vmatpush1.xpose.msra.mxu0 0.0
    %1400 = vmatprep.subr.mxu0 0.0
    %1401 = vmatpush1.xpose.msra.mxu0 0.0
    %1402 = vmatprep.subr.mxu0 0.0
    %1403 = vmatpush1.xpose.msra.mxu0 0.0
    %1404 = vmatprep.subr.mxu0 0.0
    %1405 = vmatpush1.xpose.msra.mxu0 0.0
    %1406 = vmatprep.subr.mxu0 0.0
    %1407 = vmatpush1.xpose.msra.mxu0 0.0
    %1408 = vmatprep.subr.mxu0 0.0
    %1409 = vmatpush1.xpose.msra.mxu0 0.0
    %1410 = vmatprep.subr.mxu0 0.0
    %1411 = vmatpush1.xpose.msra.mxu0 0.0
    %1412 = vmatprep.subr.mxu0 0.0
    %1413 = vmatpush1.xpose.msra.mxu0 0.0
    %1414 = vmatprep.subr.mxu0 0.0
    %1415 = vmatpush1.xpose.msra.mxu0 0.0
    %1416 = vmatprep.subr.mxu0 0.0
    %1417 = vmatpush1.xpose.msra.mxu0 0.0
    %1418 = vmatprep.subr.mxu0 0.0
    %1419 = vmatpush1.xpose.msra.mxu0 0.0
    %1420 = vmatprep.subr.mxu0 0.0
    %1421 = vmatpush1.xpose.msra.mxu0 0.0
    %1422 = vmatprep.subr.mxu0 0.0
    %1423 = vmatpush1.xpose.msra.mxu0 0.0
    %1424 = vmatprep.subr.mxu0 0.0
    %1425 = vmatpush1.xpose.msra.mxu0 0.0
    %1426 = vmatprep.subr.mxu0 0.0
    %1427 = vmatpush1.xpose.msra.mxu0 0.0
    %1428 = vmatprep.subr.mxu0 0.0
    %1429 = vmatpush1.xpose.msra.mxu0 0.0
    %1430 = vmatprep.subr.mxu0 0.0
    %1431 = vmatpush1.xpose.msra.mxu0 0.0
    %1432 = vmatprep.subr.mxu0 0.0
    %1433 = vmatpush1.xpose.msra.mxu0 0.0
    %1434 = vmatprep.mubr.f32.mxu0 0.0
    %1435 = vmatmul.mubr.f32.gmra.mrb[0].mxu0 %v1368
    %v1436 = vpop.f32.mrb[0].mxu0
    %v1437 = vadd.f32 0.0, %v1436
    %v1438 = vpop.f32.mrb[0].mxu0
    %1439 = vdwg.mxu0
    %v1440 = vmul.f32 %v1364, 0.35355338
    %v1441 = vmul.f32 %v1437, 0.35355338
    %v1442 = vadd.f32 %v1440, %v154
    %v1443 = vadd.f32 %v1441, %v154
    %v1444 = vsel %vm439, %v1442, -inf
    %1445 = vmax.xlane.f32.xlu0 %v1444
    %v1446 = vpop.xlane.xlu0 %1445
    %v1447 = vsel %vm439, %v1443, -inf
    %1448 = vmax.xlane.f32.xlu0 %v1447
    %v1449 = vpop.xlane.xlu0 %1448
    %v1450 = vsub.f32 %v1442, %v1446
    %v1451 = vsub.f32 %v1443, %v1449
    %v1452 = vmul.f32 %v1450, 1.442695
    %v1453 = vpow.pop %v1452
    %v1454 = vmul.f32 %v1451, 1.442695
    %v1455 = vpow.pop %v1454
    %v1456 = vsel %vm439, %v1453, 0.0
    %1457 = vadd.xlane.f32.xlu0 %v1456
    %v1458 = vpop.xlane.xlu0 %1457
    %v1459 = vsel %vm439, %v1455, 0.0
    %1460 = vadd.xlane.f32.xlu0 %v1459
    %v1461 = vpop.xlane.xlu0 %1460
    %v1462 = vrcp.pop %v1458
    %v1463 = vrcp.pop %v1461
    %v1464 = vmul.f32 %v1453, %v1462
    %v1465 = vmul.f32 %v1455, %v1463
    %1467 = vrot.lane.b32.xlu0 %v174, 64
    %v1468 = vpop.permute.xlu0 %1467
    %v1470 = vmul.f32 %v271, %v1468
    %v1471 = vmul.f32 %v274, %v1468
    %1473 = vrot.lane.b32.xlu0 %v1470, 64
    %v1474 = vpop.permute.xlu0 %1473
    %v1477 = vsel %vm439, %v1464, 0
    %1479 = vmatprep.subr.mxu0 0.0
    %1480 = vmatpush1.msra.mxu0 %v1474
    %1481 = vmatprep.subr.mxu0 0.0
    %1482 = vmatpush1.msra.mxu0 0.0
    %1483 = vmatprep.subr.mxu0 0.0
    %1484 = vmatpush1.msra.mxu0 0.0
    %1485 = vmatprep.subr.mxu0 0.0
    %1486 = vmatpush1.msra.mxu0 0.0
    %1487 = vmatprep.subr.mxu0 0.0
    %1488 = vmatpush1.msra.mxu0 0.0
    %1489 = vmatprep.subr.mxu0 0.0
    %1490 = vmatpush1.msra.mxu0 0.0
    %1491 = vmatprep.subr.mxu0 0.0
    %1492 = vmatpush1.msra.mxu0 0.0
    %1493 = vmatprep.subr.mxu0 0.0
    %1494 = vmatpush1.msra.mxu0 0.0
    %1495 = vmatprep.subr.mxu0 0.0
    %1496 = vmatpush1.msra.mxu0 0.0
    %1497 = vmatprep.subr.mxu0 0.0
    %1498 = vmatpush1.msra.mxu0 0.0
    %1499 = vmatprep.subr.mxu0 0.0
    %1500 = vmatpush1.msra.mxu0 0.0
    %1501 = vmatprep.subr.mxu0 0.0
    %1502 = vmatpush1.msra.mxu0 0.0
    %1503 = vmatprep.subr.mxu0 0.0
    %1504 = vmatpush1.msra.mxu0 0.0
    %1505 = vmatprep.subr.mxu0 0.0
    %1506 = vmatpush1.msra.mxu0 0.0
    %1507 = vmatprep.subr.mxu0 0.0
    %1508 = vmatpush1.msra.mxu0 0.0
    %1509 = vmatprep.subr.mxu0 0.0
    %1510 = vmatpush1.msra.mxu0 0.0
    %1511 = vmatprep.subr.mxu0 0.0
    %1512 = vmatpush1.msra.mxu0 0.0
    %1513 = vmatprep.subr.mxu0 0.0
    %1514 = vmatpush1.msra.mxu0 0.0
    %1515 = vmatprep.subr.mxu0 0.0
    %1516 = vmatpush1.msra.mxu0 0.0
    %1517 = vmatprep.subr.mxu0 0.0
    %1518 = vmatpush1.msra.mxu0 0.0
    %1519 = vmatprep.subr.mxu0 0.0
    %1520 = vmatpush1.msra.mxu0 0.0
    %1521 = vmatprep.subr.mxu0 0.0
    %1522 = vmatpush1.msra.mxu0 0.0
    %1523 = vmatprep.subr.mxu0 0.0
    %1524 = vmatpush1.msra.mxu0 0.0
    %1525 = vmatprep.subr.mxu0 0.0
    %1526 = vmatpush1.msra.mxu0 0.0
    %1527 = vmatprep.subr.mxu0 0.0
    %1528 = vmatpush1.msra.mxu0 0.0
    %1529 = vmatprep.subr.mxu0 0.0
    %1530 = vmatpush1.msra.mxu0 0.0
    %1531 = vmatprep.subr.mxu0 0.0
    %1532 = vmatpush1.msra.mxu0 0.0
    %1533 = vmatprep.subr.mxu0 0.0
    %1534 = vmatpush1.msra.mxu0 0.0
    %1535 = vmatprep.subr.mxu0 0.0
    %1536 = vmatpush1.msra.mxu0 0.0
    %1537 = vmatprep.subr.mxu0 0.0
    %1538 = vmatpush1.msra.mxu0 0.0
    %1539 = vmatprep.subr.mxu0 0.0
    %1540 = vmatpush1.msra.mxu0 0.0
    %1541 = vmatprep.subr.mxu0 0.0
    %1542 = vmatpush1.msra.mxu0 0.0
    %1543 = vmatprep.mubr.f32.mxu0 0.0
    %1544 = vmatmul.mubr.f32.gmra.mrb[0].mxu0 %v1477
    %v1545 = vpop.f32.mrb[0].mxu0
    %v1546 = vadd.f32 0.0, %v1545
    %v1547 = vpop.f32.mrb[0].mxu0
    %1548 = vdwg.mxu0
    %1550 = vrot.lane.b32.xlu0 %v1471, 64
    %v1551 = vpop.permute.xlu0 %1550
    %v1554 = vsel %vm439, %v1465, 0
    %1556 = vmatprep.subr.mxu0 0.0
    %1557 = vmatpush1.msra.mxu0 %v1551
    %1558 = vmatprep.subr.mxu0 0.0
    %1559 = vmatpush1.msra.mxu0 0.0
    %1560 = vmatprep.subr.mxu0 0.0
    %1561 = vmatpush1.msra.mxu0 0.0
    %1562 = vmatprep.subr.mxu0 0.0
    %1563 = vmatpush1.msra.mxu0 0.0
    %1564 = vmatprep.subr.mxu0 0.0
    %1565 = vmatpush1.msra.mxu0 0.0
    %1566 = vmatprep.subr.mxu0 0.0
    %1567 = vmatpush1.msra.mxu0 0.0
    %1568 = vmatprep.subr.mxu0 0.0
    %1569 = vmatpush1.msra.mxu0 0.0
    %1570 = vmatprep.subr.mxu0 0.0
    %1571 = vmatpush1.msra.mxu0 0.0
    %1572 = vmatprep.subr.mxu0 0.0
    %1573 = vmatpush1.msra.mxu0 0.0
    %1574 = vmatprep.subr.mxu0 0.0
    %1575 = vmatpush1.msra.mxu0 0.0
    %1576 = vmatprep.subr.mxu0 0.0
    %1577 = vmatpush1.msra.mxu0 0.0
    %1578 = vmatprep.subr.mxu0 0.0
    %1579 = vmatpush1.msra.mxu0 0.0
    %1580 = vmatprep.subr.mxu0 0.0
    %1581 = vmatpush1.msra.mxu0 0.0
    %1582 = vmatprep.subr.mxu0 0.0
    %1583 = vmatpush1.msra.mxu0 0.0
    %1584 = vmatprep.subr.mxu0 0.0
    %1585 = vmatpush1.msra.mxu0 0.0
    %1586 = vmatprep.subr.mxu0 0.0
    %1587 = vmatpush1.msra.mxu0 0.0
    %1588 = vmatprep.subr.mxu0 0.0
    %1589 = vmatpush1.msra.mxu0 0.0
    %1590 = vmatprep.subr.mxu0 0.0
    %1591 = vmatpush1.msra.mxu0 0.0
    %1592 = vmatprep.subr.mxu0 0.0
    %1593 = vmatpush1.msra.mxu0 0.0
    %1594 = vmatprep.subr.mxu0 0.0
    %1595 = vmatpush1.msra.mxu0 0.0
    %1596 = vmatprep.subr.mxu0 0.0
    %1597 = vmatpush1.msra.mxu0 0.0
    %1598 = vmatprep.subr.mxu0 0.0
    %1599 = vmatpush1.msra.mxu0 0.0
    %1600 = vmatprep.subr.mxu0 0.0
    %1601 = vmatpush1.msra.mxu0 0.0
    %1602 = vmatprep.subr.mxu0 0.0
    %1603 = vmatpush1.msra.mxu0 0.0
    %1604 = vmatprep.subr.mxu0 0.0
    %1605 = vmatpush1.msra.mxu0 0.0
    %1606 = vmatprep.subr.mxu0 0.0
    %1607 = vmatpush1.msra.mxu0 0.0
    %1608 = vmatprep.subr.mxu0 0.0
    %1609 = vmatpush1.msra.mxu0 0.0
    %1610 = vmatprep.subr.mxu0 0.0
    %1611 = vmatpush1.msra.mxu0 0.0
    %1612 = vmatprep.subr.mxu0 0.0
    %1613 = vmatpush1.msra.mxu0 0.0
    %1614 = vmatprep.subr.mxu0 0.0
    %1615 = vmatpush1.msra.mxu0 0.0
    %1616 = vmatprep.subr.mxu0 0.0
    %1617 = vmatpush1.msra.mxu0 0.0
    %1618 = vmatprep.subr.mxu0 0.0
    %1619 = vmatpush1.msra.mxu0 0.0
    %1620 = vmatprep.mubr.f32.mxu0 0.0
    %1621 = vmatmul.mubr.f32.gmra.mrb[0].mxu0 %v1554
    %v1622 = vpop.f32.mrb[0].mxu0
    %v1623 = vadd.f32 0.0, %v1622
    %v1624 = vpop.f32.mrb[0].mxu0
    %1625 = vdwg.mxu0
    %v1626 = vadd.f32 %v1290, %v1546
    %v1627 = vadd.f32 %v1291, %v1623
    %v1628 = vpack.c.bf16 %v1627, %v1626
    %v1629 = vld [vmem:[%s5] sm:$0xf]
    %v1630 = vld [vmem:[%s5 + $0x4] sm:$0xf]
    %v1631 = vld [vmem:[%s5 + $0x8] sm:$0xf]
    %v1632 = vld [vmem:[%s5 + $0xc] sm:$0xf]
    %v1633 = vlaneseq
    %v1634 = vshrl.u32 %v1633, 7
    %v1635 = vsub.s32 4, %v1634
    %v1636 = vrot.slane %v175, %v1635
    %v1641 = vunpack.c.l.b16 %v1629
    %v1642 = vunpack.c.l.b16 %v1630
    %v1643 = vunpack.c.l.b16 %v1631
    %v1644 = vunpack.c.l.b16 %v1632
    %v1645 = vpack.c.b16 %v1642, %v1641
    %v1646 = vpack.c.b16 %v1644, %v1643
    %v1650 = vsel %vm176, %v1628, 0
    %1652 = vmatprep.subr.bf16.mxu0 0
    %1653 = vmatpush1.bf16.msra.mxu0 %v1645
    %1654 = vmatprep.subr.bf16.mxu0 0
    %1655 = vmatpush1.bf16.msra.mxu0 %v1646
    %1656 = vmatprep.subr.bf16.mxu0 0
    %1657 = vmatpush1.bf16.msra.mxu0 0
    %1658 = vmatprep.subr.bf16.mxu0 0
    %1659 = vmatpush1.bf16.msra.mxu0 0
    %1660 = vmatprep.subr.bf16.mxu0 0
    %1661 = vmatpush1.bf16.msra.mxu0 0
    %1662 = vmatprep.subr.bf16.mxu0 0
    %1663 = vmatpush1.bf16.msra.mxu0 0
    %1664 = vmatprep.subr.bf16.mxu0 0
    %1665 = vmatpush1.bf16.msra.mxu0 0
    %1666 = vmatprep.subr.bf16.mxu0 0
    %1667 = vmatpush1.bf16.msra.mxu0 0
    %1668 = vmatprep.subr.bf16.mxu0 0
    %1669 = vmatpush1.bf16.msra.mxu0 0
    %1670 = vmatprep.subr.bf16.mxu0 0
    %1671 = vmatpush1.bf16.msra.mxu0 0
    %1672 = vmatprep.subr.bf16.mxu0 0
    %1673 = vmatpush1.bf16.msra.mxu0 0
    %1674 = vmatprep.subr.bf16.mxu0 0
    %1675 = vmatpush1.bf16.msra.mxu0 0
    %1676 = vmatprep.subr.bf16.mxu0 0
    %1677 = vmatpush1.bf16.msra.mxu0 0
    %1678 = vmatprep.subr.bf16.mxu0 0
    %1679 = vmatpush1.bf16.msra.mxu0 0
    %1680 = vmatprep.subr.bf16.mxu0 0
    %1681 = vmatpush1.bf16.msra.mxu0 0
    %1682 = vmatprep.subr.bf16.mxu0 0
    %1683 = vmatpush1.bf16.msra.mxu0 0
    %1684 = vmatprep.mubr.bf16.mxu0 0
    %1685 = vmatmul.mubr.bf16.gmra.mrb[0].mxu0 %v1650
    %v1686 = vpop.f32.mrb[0].mxu0
    %v1687 = vadd.f32 %v1636, %v1686
    %v1688 = vpop.f32.mrb[0].mxu0
    %v1689 = vpop.f32.mrb[0].mxu0
    %v1690 = vadd.f32 %v1636, %v1689
    %v1691 = vpop.f32.mrb[0].mxu0
    %1692 = vdwg.mxu0
    %v1693 = vadd.f32 %v1687, %v147
    %v1694 = vadd.f32 %v1690, %v148
    %v1695 = vsel %vm176, %v1693, 0.0
    %1696 = vadd.xlane.f32.xlu0 %v1695
    %v1697 = vpop.xlane.xlu0 %1696
    %v1698 = vsel %vm176, %v1694, 0.0
    %1699 = vadd.xlane.f32.xlu0 %v1698
    %v1700 = vpop.xlane.xlu0 %1699
    %v1701 = vmul.f32 %v1697, %v183
    %v1702 = vmul.f32 %v1700, %v183
    %v1703 = vsub.f32 %v1693, %v1701
    %v1704 = vsub.f32 %v1694, %v1702
    %v1705 = vmul.f32 %v1703, %v1703
    %v1706 = vmul.f32 %v1704, %v1704
    %v1707 = vsel %vm176, %v1705, 0.0
    %1708 = vadd.xlane.f32.xlu0 %v1707
    %v1709 = vpop.xlane.xlu0 %1708
    %v1710 = vsel %vm176, %v1706, 0.0
    %1711 = vadd.xlane.f32.xlu0 %v1710
    %v1712 = vpop.xlane.xlu0 %1711
    %v1713 = vmul.f32 %v1709, 0.032258064
    %v1714 = vmul.f32 %v1712, 0.032258064
    %v1715 = vadd.f32 %v1713, 1e-05
    %v1716 = vadd.f32 %v1714, 1e-05
    %v1717 = vrsqrt.pop %v1715
    %v1718 = vrsqrt.pop %v1716
    %v1719 = vmul.f32 %v1703, %v1717
    %v1720 = vmul.f32 %v1704, %v1718
    %v1721 = vlaneseq
    %v1722 = vshrl.u32 %v1721, 7
    %v1723 = vsub.s32 2, %v1722
    %v1724 = vrot.slane %v175, %v1723
    %v1725 = vmul.f32 %v1724, %v1719
    %v1726 = vmul.f32 %v1724, %v1720
    %v1727 = vlaneseq
    %v1728 = vshrl.u32 %v1727, 7
    %v1729 = vsub.s32 3, %v1728
    %v1730 = vrot.slane %v175, %v1729
    %v1731 = vadd.f32 %v1725, %v1730
    %v1732 = vadd.f32 %v1726, %v1730
    %v1733 = vpack.c.bf16 %v1732, %v1731
    %v1734 = vld [vmem:[%s6] sm:$0xf]
    %v1735 = vld [vmem:[%s6 + $0x4] sm:$0xf]
    %v1736 = vld [vmem:[%s6 + $0x8] sm:$0xf]
    %v1737 = vld [vmem:[%s6 + $0xc] sm:$0xf]
    %v1738 = vlaneseq
    %v1739 = vshrl.u32 %v1738, 7
    %v1740 = vsub.s32 6, %v1739
    %v1741 = vrot.slane %v175, %v1740
    %v1746 = vunpack.c.l.b16 %v1734
    %v1747 = vunpack.c.l.b16 %v1735
    %v1748 = vunpack.c.l.b16 %v1736
    %v1749 = vunpack.c.l.b16 %v1737
    %v1750 = vpack.c.b16 %v1747, %v1746
    %v1751 = vpack.c.b16 %v1749, %v1748
    %v1755 = vsel %vm176, %v1733, 0
    %1757 = vmatprep.subr.bf16.mxu0 0
    %1758 = vmatpush1.bf16.msra.mxu0 %v1750
    %1759 = vmatprep.subr.bf16.mxu0 0
    %1760 = vmatpush1.bf16.msra.mxu0 %v1751
    %1761 = vmatprep.subr.bf16.mxu0 0
    %1762 = vmatpush1.bf16.msra.mxu0 0
    %1763 = vmatprep.subr.bf16.mxu0 0
    %1764 = vmatpush1.bf16.msra.mxu0 0
    %1765 = vmatprep.subr.bf16.mxu0 0
    %1766 = vmatpush1.bf16.msra.mxu0 0
    %1767 = vmatprep.subr.bf16.mxu0 0
    %1768 = vmatpush1.bf16.msra.mxu0 0
    %1769 = vmatprep.subr.bf16.mxu0 0
    %1770 = vmatpush1.bf16.msra.mxu0 0
    %1771 = vmatprep.subr.bf16.mxu0 0
    %1772 = vmatpush1.bf16.msra.mxu0 0
    %1773 = vmatprep.subr.bf16.mxu0 0
    %1774 = vmatpush1.bf16.msra.mxu0 0
    %1775 = vmatprep.subr.bf16.mxu0 0
    %1776 = vmatpush1.bf16.msra.mxu0 0
    %1777 = vmatprep.subr.bf16.mxu0 0
    %1778 = vmatpush1.bf16.msra.mxu0 0
    %1779 = vmatprep.subr.bf16.mxu0 0
    %1780 = vmatpush1.bf16.msra.mxu0 0
    %1781 = vmatprep.subr.bf16.mxu0 0
    %1782 = vmatpush1.bf16.msra.mxu0 0
    %1783 = vmatprep.subr.bf16.mxu0 0
    %1784 = vmatpush1.bf16.msra.mxu0 0
    %1785 = vmatprep.subr.bf16.mxu0 0
    %1786 = vmatpush1.bf16.msra.mxu0 0
    %1787 = vmatprep.subr.bf16.mxu0 0
    %1788 = vmatpush1.bf16.msra.mxu0 0
    %1789 = vmatprep.mubr.bf16.mxu0 0
    %1790 = vmatmul.mubr.bf16.gmra.mrb[0].mxu0 %v1755
    %v1791 = vpop.f32.mrb[0].mxu0
    %v1792 = vadd.f32 %v1741, %v1791
    %v1793 = vpop.f32.mrb[0].mxu0
    %v1794 = vpop.f32.mrb[0].mxu0
    %v1795 = vadd.f32 %v1741, %v1794
    %v1796 = vpop.f32.mrb[0].mxu0
    %1797 = vdwg.mxu0
    %v1798 = vmul.f32 %v1792, 0.5
    %v1799 = vmul.f32 %v1795, 0.5
    %v1800 = vmul.f32 %v1792, 0.044715
    %v1801 = vmul.f32 %v1795, 0.044715
    %v1802 = vmul.f32 %v1800, %v1792
    %v1803 = vmul.f32 %v1801, %v1795
    %v1804 = vmul.f32 %v1802, %v1792
    %v1805 = vmul.f32 %v1803, %v1795
    %v1806 = vadd.f32 %v1792, %v1804
    %v1807 = vadd.f32 %v1795, %v1805
    %v1808 = vmul.f32 %v1806, 0.7978846
    %v1809 = vmul.f32 %v1807, 0.7978846
    %v1810 = vtanh.pop %v1808
    %v1811 = vtanh.pop %v1809
    %v1812 = vadd.f32 %v1810, 1.0
    %v1813 = vadd.f32 %v1811, 1.0
    %v1814 = vmul.f32 %v1798, %v1812
    %v1815 = vmul.f32 %v1799, %v1813
    %v1816 = vpack.c.bf16 %v1815, %v1814
    %v1817 = vld [vmem:[%s7] sm:$0xf]
    %v1818 = vld [vmem:[%s7 + $0x4] sm:$0xf]
    %v1819 = vld [vmem:[%s7 + $0x8] sm:$0xf]
    %v1820 = vld [vmem:[%s7 + $0xc] sm:$0xf]
    %v1821 = vld [vmem:[%s7 + $0x10] sm:$0xf]
    %v1822 = vld [vmem:[%s7 + $0x14] sm:$0xf]
    %v1823 = vld [vmem:[%s7 + $0x18] sm:$0xf]
    %v1824 = vld [vmem:[%s7 + $0x1c] sm:$0xf]
    %v1825 = vld [vmem:[%s7 + $0x20] sm:$0xf]
    %v1826 = vld [vmem:[%s7 + $0x24] sm:$0xf]
    %v1827 = vld [vmem:[%s7 + $0x28] sm:$0xf]
    %v1828 = vld [vmem:[%s7 + $0x2c] sm:$0xf]
    %v1829 = vld [vmem:[%s7 + $0x30] sm:$0xf]
    %v1830 = vld [vmem:[%s7 + $0x34] sm:$0xf]
    %v1831 = vld [vmem:[%s7 + $0x38] sm:$0xf]
    %v1832 = vld [vmem:[%s7 + $0x3c] sm:$0xf]
    %v1833 = vlaneseq
    %v1834 = vshrl.u32 %v1833, 7
    %v1835 = vsub.s32 5, %v1834
    %v1836 = vrot.slane %v175, %v1835
    %v1853 = vunpack.c.l.b16 %v1817
    %v1854 = vunpack.c.l.b16 %v1818
    %v1855 = vunpack.c.l.b16 %v1819
    %v1856 = vunpack.c.l.b16 %v1820
    %v1857 = vunpack.c.l.b16 %v1821
    %v1858 = vunpack.c.l.b16 %v1822
    %v1859 = vunpack.c.l.b16 %v1823
    %v1860 = vunpack.c.l.b16 %v1824
    %v1861 = vunpack.c.l.b16 %v1825
    %v1862 = vunpack.c.l.b16 %v1826
    %v1863 = vunpack.c.l.b16 %v1827
    %v1864 = vunpack.c.l.b16 %v1828
    %v1865 = vunpack.c.l.b16 %v1829
    %v1866 = vunpack.c.l.b16 %v1830
    %v1867 = vunpack.c.l.b16 %v1831
    %v1868 = vunpack.c.l.b16 %v1832
    %v1869 = vpack.c.b16 %v1854, %v1853
    %v1870 = vpack.c.b16 %v1856, %v1855
    %v1871 = vpack.c.b16 %v1858, %v1857
    %v1872 = vpack.c.b16 %v1860, %v1859
    %v1873 = vpack.c.b16 %v1862, %v1861
    %v1874 = vpack.c.b16 %v1864, %v1863
    %v1875 = vpack.c.b16 %v1866, %v1865
    %v1876 = vpack.c.b16 %v1868, %v1867
    %1885 = vmatprep.subr.bf16.mxu0 0
    %1886 = vmatpush1.bf16.msra.mxu0 %v1869
    %1887 = vmatprep.subr.bf16.mxu0 0
    %1888 = vmatpush1.bf16.msra.mxu0 %v1870
    %1889 = vmatprep.subr.bf16.mxu0 0
    %1890 = vmatpush1.bf16.msra.mxu0 %v1871
    %1891 = vmatprep.subr.bf16.mxu0 0
    %1892 = vmatpush1.bf16.msra.mxu0 %v1872
    %1893 = vmatprep.subr.bf16.mxu0 0
    %1894 = vmatpush1.bf16.msra.mxu0 %v1873
    %1895 = vmatprep.subr.bf16.mxu0 0
    %1896 = vmatpush1.bf16.msra.mxu0 %v1874
    %1897 = vmatprep.subr.bf16.mxu0 0
    %1898 = vmatpush1.bf16.msra.mxu0 %v1875
    %1899 = vmatprep.subr.bf16.mxu0 0
    %1900 = vmatpush1.bf16.msra.mxu0 %v1876
    %1901 = vmatprep.subr.bf16.mxu0 0
    %1902 = vmatpush1.bf16.msra.mxu0 0
    %1903 = vmatprep.subr.bf16.mxu0 0
    %1904 = vmatpush1.bf16.msra.mxu0 0
    %1905 = vmatprep.subr.bf16.mxu0 0
    %1906 = vmatpush1.bf16.msra.mxu0 0
    %1907 = vmatprep.subr.bf16.mxu0 0
    %1908 = vmatpush1.bf16.msra.mxu0 0
    %1909 = vmatprep.subr.bf16.mxu0 0
    %1910 = vmatpush1.bf16.msra.mxu0 0
    %1911 = vmatprep.subr.bf16.mxu0 0
    %1912 = vmatpush1.bf16.msra.mxu0 0
    %1913 = vmatprep.subr.bf16.mxu0 0
    %1914 = vmatpush1.bf16.msra.mxu0 0
    %1915 = vmatprep.subr.bf16.mxu0 0
    %1916 = vmatpush1.bf16.msra.mxu0 0
    %1917 = vmatprep.mubr.bf16.mxu0 0
    %1918 = vmatmul.mubr.bf16.gmra.mrb[0].mxu0 %v1816
    %v1919 = vpop.f32.mrb[0].mxu0
    %v1920 = vadd.f32 %v1836, %v1919
    %v1921 = vpop.f32.mrb[0].mxu0
    %v1922 = vpop.f32.mrb[0].mxu0
    %v1923 = vadd.f32 %v1836, %v1922
    %v1924 = vpop.f32.mrb[0].mxu0
    %1925 = vdwg.mxu0
    %v1926 = vadd.f32 %v1920, %v1693
    %v1927 = vadd.f32 %v1923, %v1694
    %s1928 = scalar_lea.vmem %s3, 8
    %v1929 = vld [vmem:[%s1928] sm:$0xff]
    %v1930 = vsel %vm176, %v1926, 0.0
    %1931 = vadd.xlane.f32.xlu0 %v1930
    %v1932 = vpop.xlane.xlu0 %1931
    %v1933 = vsel %vm176, %v1927, 0.0
    %1934 = vadd.xlane.f32.xlu0 %v1933
    %v1935 = vpop.xlane.xlu0 %1934
    %v1936 = vmul.f32 %v1932, %v183
    %v1937 = vmul.f32 %v1935, %v183
    %v1938 = vsub.f32 %v1926, %v1936
    %v1939 = vsub.f32 %v1927, %v1937
    %v1940 = vmul.f32 %v1938, %v1938
    %v1941 = vmul.f32 %v1939, %v1939
    %v1942 = vsel %vm176, %v1940, 0.0
    %1943 = vadd.xlane.f32.xlu0 %v1942
    %v1944 = vpop.xlane.xlu0 %1943
    %v1945 = vsel %vm176, %v1941, 0.0
    %1946 = vadd.xlane.f32.xlu0 %v1945
    %v1947 = vpop.xlane.xlu0 %1946
    %v1948 = vmul.f32 %v1944, 0.032258064
    %v1949 = vmul.f32 %v1947, 0.032258064
    %v1950 = vadd.f32 %v1948, 1e-05
    %v1951 = vadd.f32 %v1949, 1e-05
    %v1952 = vrsqrt.pop %v1950
    %v1953 = vrsqrt.pop %v1951
    %v1954 = vmul.f32 %v1938, %v1952
    %v1955 = vmul.f32 %v1939, %v1953
    %v1956 = vlaneseq
    %v1957 = vshrl.u32 %v1956, 7
    %v1958 = vsub.s32 0, %v1957
    %v1959 = vrot.slane %v1929, %v1958
    %v1960 = vmul.f32 %v1959, %v1954
    %v1961 = vmul.f32 %v1959, %v1955
    %v1962 = vlaneseq
    %v1963 = vshrl.u32 %v1962, 7
    %v1964 = vsub.s32 1, %v1963
    %v1965 = vrot.slane %v1929, %v1964
    %v1966 = vadd.f32 %v1960, %v1965
    %v1967 = vadd.f32 %v1961, %v1965
    %v1968 = vpack.c.bf16 %v1967, %v1966
    %s1969 = scalar_lea.vmem %s4, 16
    %v1970 = vld [vmem:[%s1969] sm:$0xf]
    %v1971 = vld [vmem:[%s1969 + $0x4] sm:$0xf]
    %v1972 = vld [vmem:[%s1969 + $0x8] sm:$0xf]
    %v1973 = vld [vmem:[%s1969 + $0xc] sm:$0xf]
    %v1978 = vunpack.c.l.b16 %v1970
    %v1979 = vunpack.c.l.b16 %v1971
    %v1980 = vunpack.c.l.b16 %v1972
    %v1981 = vunpack.c.l.b16 %v1973
    %v1982 = vpack.c.b16 %v1979, %v1978
    %v1983 = vpack.c.b16 %v1981, %v1980
    %v1987 = vsel %vm176, %v1968, 0
    %1989 = vmatprep.subr.bf16.mxu0 0
    %1990 = vmatpush1.bf16.msra.mxu0 %v1982
    %1991 = vmatprep.subr.bf16.mxu0 0
    %1992 = vmatpush1.bf16.msra.mxu0 %v1983
    %1993 = vmatprep.subr.bf16.mxu0 0
    %1994 = vmatpush1.bf16.msra.mxu0 0
    %1995 = vmatprep.subr.bf16.mxu0 0
    %1996 = vmatpush1.bf16.msra.mxu0 0
    %1997 = vmatprep.subr.bf16.mxu0 0
    %1998 = vmatpush1.bf16.msra.mxu0 0
    %1999 = vmatprep.subr.bf16.mxu0 0
    %2000 = vmatpush1.bf16.msra.mxu0 0
    %2001 = vmatprep.subr.bf16.mxu0 0
    %2002 = vmatpush1.bf16.msra.mxu0 0
    %2003 = vmatprep.subr.bf16.mxu0 0
    %2004 = vmatpush1.bf16.msra.mxu0 0
    %2005 = vmatprep.subr.bf16.mxu0 0
    %2006 = vmatpush1.bf16.msra.mxu0 0
    %2007 = vmatprep.subr.bf16.mxu0 0
    %2008 = vmatpush1.bf16.msra.mxu0 0
    %2009 = vmatprep.subr.bf16.mxu0 0
    %2010 = vmatpush1.bf16.msra.mxu0 0
    %2011 = vmatprep.subr.bf16.mxu0 0
    %2012 = vmatpush1.bf16.msra.mxu0 0
    %2013 = vmatprep.subr.bf16.mxu0 0
    %2014 = vmatpush1.bf16.msra.mxu0 0
    %2015 = vmatprep.subr.bf16.mxu0 0
    %2016 = vmatpush1.bf16.msra.mxu0 0
    %2017 = vmatprep.subr.bf16.mxu0 0
    %2018 = vmatpush1.bf16.msra.mxu0 0
    %2019 = vmatprep.subr.bf16.mxu0 0
    %2020 = vmatpush1.bf16.msra.mxu0 0
    %2021 = vmatprep.mubr.bf16.mxu0 0
    %2022 = vmatmul.mubr.bf16.gmra.mrb[0].mxu0 %v1987
    %v2023 = vpop.f32.mrb[0].mxu0
    %v2024 = vadd.f32 0.0, %v2023
    %v2025 = vpop.f32.mrb[0].mxu0
    %v2026 = vpop.f32.mrb[0].mxu0
    %v2027 = vadd.f32 0.0, %v2026
    %v2028 = vpop.f32.mrb[0].mxu0
    %2029 = vdwg.mxu0
    %v2030 = vmul.f32 %v2024, %v159
    %v2031 = vmul.f32 %v2027, %v159
    %2033 = vrot.lane.b32.xlu0 %v2024, 96
    %v2034 = vpop.permute.xlu0 %2033
    %v2036 = vsel %vm176, %v2030, 0
    %v2038 = vsel %vm176, %v2034, 0
    %2040 = vmatprep.subr.mxu0 0.0
    %2041 = vmatpush1.xpose.msra.mxu0 %v2038
    %2042 = vmatprep.subr.mxu0 0.0
    %2043 = vmatpush1.xpose.msra.mxu0 0.0
    %2044 = vmatprep.subr.mxu0 0.0
    %2045 = vmatpush1.xpose.msra.mxu0 0.0
    %2046 = vmatprep.subr.mxu0 0.0
    %2047 = vmatpush1.xpose.msra.mxu0 0.0
    %2048 = vmatprep.subr.mxu0 0.0
    %2049 = vmatpush1.xpose.msra.mxu0 0.0
    %2050 = vmatprep.subr.mxu0 0.0
    %2051 = vmatpush1.xpose.msra.mxu0 0.0
    %2052 = vmatprep.subr.mxu0 0.0
    %2053 = vmatpush1.xpose.msra.mxu0 0.0
    %2054 = vmatprep.subr.mxu0 0.0
    %2055 = vmatpush1.xpose.msra.mxu0 0.0
    %2056 = vmatprep.subr.mxu0 0.0
    %2057 = vmatpush1.xpose.msra.mxu0 0.0
    %2058 = vmatprep.subr.mxu0 0.0
    %2059 = vmatpush1.xpose.msra.mxu0 0.0
    %2060 = vmatprep.subr.mxu0 0.0
    %2061 = vmatpush1.xpose.msra.mxu0 0.0
    %2062 = vmatprep.subr.mxu0 0.0
    %2063 = vmatpush1.xpose.msra.mxu0 0.0
    %2064 = vmatprep.subr.mxu0 0.0
    %2065 = vmatpush1.xpose.msra.mxu0 0.0
    %2066 = vmatprep.subr.mxu0 0.0
    %2067 = vmatpush1.xpose.msra.mxu0 0.0
    %2068 = vmatprep.subr.mxu0 0.0
    %2069 = vmatpush1.xpose.msra.mxu0 0.0
    %2070 = vmatprep.subr.mxu0 0.0
    %2071 = vmatpush1.xpose.msra.mxu0 0.0
    %2072 = vmatprep.subr.mxu0 0.0
    %2073 = vmatpush1.xpose.msra.mxu0 0.0
    %2074 = vmatprep.subr.mxu0 0.0
    %2075 = vmatpush1.xpose.msra.mxu0 0.0
    %2076 = vmatprep.subr.mxu0 0.0
    %2077 = vmatpush1.xpose.msra.mxu0 0.0
    %2078 = vmatprep.subr.mxu0 0.0
    %2079 = vmatpush1.xpose.msra.mxu0 0.0
    %2080 = vmatprep.subr.mxu0 0.0
    %2081 = vmatpush1.xpose.msra.mxu0 0.0
    %2082 = vmatprep.subr.mxu0 0.0
    %2083 = vmatpush1.xpose.msra.mxu0 0.0
    %2084 = vmatprep.subr.mxu0 0.0
    %2085 = vmatpush1.xpose.msra.mxu0 0.0
    %2086 = vmatprep.subr.mxu0 0.0
    %2087 = vmatpush1.xpose.msra.mxu0 0.0
    %2088 = vmatprep.subr.mxu0 0.0
    %2089 = vmatpush1.xpose.msra.mxu0 0.0
    %2090 = vmatprep.subr.mxu0 0.0
    %2091 = vmatpush1.xpose.msra.mxu0 0.0
    %2092 = vmatprep.subr.mxu0 0.0
    %2093 = vmatpush1.xpose.msra.mxu0 0.0
    %2094 = vmatprep.subr.mxu0 0.0
    %2095 = vmatpush1.xpose.msra.mxu0 0.0
    %2096 = vmatprep.subr.mxu0 0.0
    %2097 = vmatpush1.xpose.msra.mxu0 0.0
    %2098 = vmatprep.subr.mxu0 0.0
    %2099 = vmatpush1.xpose.msra.mxu0 0.0
    %2100 = vmatprep.subr.mxu0 0.0
    %2101 = vmatpush1.xpose.msra.mxu0 0.0
    %2102 = vmatprep.subr.mxu0 0.0
    %2103 = vmatpush1.xpose.msra.mxu0 0.0
    %2104 = vmatprep.mubr.f32.mxu0 0.0
    %2105 = vmatmul.mubr.f32.gmra.mrb[0].mxu0 %v2036
    %v2106 = vpop.f32.mrb[0].mxu0
    %v2107 = vadd.f32 0.0, %v2106
    %v2108 = vpop.f32.mrb[0].mxu0
    %2109 = vdwg.mxu0
    %2111 = vrot.lane.b32.xlu0 %v2027, 96
    %v2112 = vpop.permute.xlu0 %2111
    %v2114 = vsel %vm176, %v2031, 0
    %v2116 = vsel %vm176, %v2112, 0
    %2118 = vmatprep.subr.mxu0 0.0
    %2119 = vmatpush1.xpose.msra.mxu0 %v2116
    %2120 = vmatprep.subr.mxu0 0.0
    %2121 = vmatpush1.xpose.msra.mxu0 0.0
    %2122 = vmatprep.subr.mxu0 0.0
    %2123 = vmatpush1.xpose.msra.mxu0 0.0
    %2124 = vmatprep.subr.mxu0 0.0
    %2125 = vmatpush1.xpose.msra.mxu0 0.0
    %2126 = vmatprep.subr.mxu0 0.0
    %2127 = vmatpush1.xpose.msra.mxu0 0.0
    %2128 = vmatprep.subr.mxu0 0.0
    %2129 = vmatpush1.xpose.msra.mxu0 0.0
    %2130 = vmatprep.subr.mxu0 0.0
    %2131 = vmatpush1.xpose.msra.mxu0 0.0
    %2132 = vmatprep.subr.mxu0 0.0
    %2133 = vmatpush1.xpose.msra.mxu0 0.0
    %2134 = vmatprep.subr.mxu0 0.0
    %2135 = vmatpush1.xpose.msra.mxu0 0.0
    %2136 = vmatprep.subr.mxu0 0.0
    %2137 = vmatpush1.xpose.msra.mxu0 0.0
    %2138 = vmatprep.subr.mxu0 0.0
    %2139 = vmatpush1.xpose.msra.mxu0 0.0
    %2140 = vmatprep.subr.mxu0 0.0
    %2141 = vmatpush1.xpose.msra.mxu0 0.0
    %2142 = vmatprep.subr.mxu0 0.0
    %2143 = vmatpush1.xpose.msra.mxu0 0.0
    %2144 = vmatprep.subr.mxu0 0.0
    %2145 = vmatpush1.xpose.msra.mxu0 0.0
    %2146 = vmatprep.subr.mxu0 0.0
    %2147 = vmatpush1.xpose.msra.mxu0 0.0
    %2148 = vmatprep.subr.mxu0 0.0
    %2149 = vmatpush1.xpose.msra.mxu0 0.0
    %2150 = vmatprep.subr.mxu0 0.0
    %2151 = vmatpush1.xpose.msra.mxu0 0.0
    %2152 = vmatprep.subr.mxu0 0.0
    %2153 = vmatpush1.xpose.msra.mxu0 0.0
    %2154 = vmatprep.subr.mxu0 0.0
    %2155 = vmatpush1.xpose.msra.mxu0 0.0
    %2156 = vmatprep.subr.mxu0 0.0
    %2157 = vmatpush1.xpose.msra.mxu0 0.0
    %2158 = vmatprep.subr.mxu0 0.0
    %2159 = vmatpush1.xpose.msra.mxu0 0.0
    %2160 = vmatprep.subr.mxu0 0.0
    %2161 = vmatpush1.xpose.msra.mxu0 0.0
    %2162 = vmatprep.subr.mxu0 0.0
    %2163 = vmatpush1.xpose.msra.mxu0 0.0
    %2164 = vmatprep.subr.mxu0 0.0
    %2165 = vmatpush1.xpose.msra.mxu0 0.0
    %2166 = vmatprep.subr.mxu0 0.0
    %2167 = vmatpush1.xpose.msra.mxu0 0.0
    %2168 = vmatprep.subr.mxu0 0.0
    %2169 = vmatpush1.xpose.msra.mxu0 0.0
    %2170 = vmatprep.subr.mxu0 0.0
    %2171 = vmatpush1.xpose.msra.mxu0 0.0
    %2172 = vmatprep.subr.mxu0 0.0
    %2173 = vmatpush1.xpose.msra.mxu0 0.0
    %2174 = vmatprep.subr.mxu0 0.0
    %2175 = vmatpush1.xpose.msra.mxu0 0.0
    %2176 = vmatprep.subr.mxu0 0.0
    %2177 = vmatpush1.xpose.msra.mxu0 0.0
    %2178 = vmatprep.subr.mxu0 0.0
    %2179 = vmatpush1.xpose.msra.mxu0 0.0
    %2180 = vmatprep.subr.mxu0 0.0
    %2181 = vmatpush1.xpose.msra.mxu0 0.0
    %2182 = vmatprep.mubr.f32.mxu0 0.0
    %2183 = vmatmul.mubr.f32.gmra.mrb[0].mxu0 %v2114
    %v2184 = vpop.f32.mrb[0].mxu0
    %v2185 = vadd.f32 0.0, %v2184
    %v2186 = vpop.f32.mrb[0].mxu0
    %2187 = vdwg.mxu0
    %v2188 = vmul.f32 %v2107, 0.35355338
    %v2189 = vmul.f32 %v2185, 0.35355338
    %v2190 = vadd.f32 %v2188, %v154
    %v2191 = vadd.f32 %v2189, %v154
    %v2192 = vsel %vm439, %v2190, -inf
    %2193 = vmax.xlane.f32.xlu0 %v2192
    %v2194 = vpop.xlane.xlu0 %2193
    %v2195 = vsel %vm439, %v2191, -inf
    %2196 = vmax.xlane.f32.xlu0 %v2195
    %v2197 = vpop.xlane.xlu0 %2196
    %v2198 = vsub.f32 %v2190, %v2194
    %v2199 = vsub.f32 %v2191, %v2197
    %v2200 = vmul.f32 %v2198, 1.442695
    %v2201 = vpow.pop %v2200
    %v2202 = vmul.f32 %v2199, 1.442695
    %v2203 = vpow.pop %v2202
    %v2204 = vsel %vm439, %v2201, 0.0
    %2205 = vadd.xlane.f32.xlu0 %v2204
    %v2206 = vpop.xlane.xlu0 %2205
    %v2207 = vsel %vm439, %v2203, 0.0
    %2208 = vadd.xlane.f32.xlu0 %v2207
    %v2209 = vpop.xlane.xlu0 %2208
    %v2210 = vrcp.pop %v2206
    %v2211 = vrcp.pop %v2209
    %v2212 = vmul.f32 %v2201, %v2210
    %v2213 = vmul.f32 %v2203, %v2211
    %v2214 = vmul.f32 %v2024, %v464
    %v2215 = vmul.f32 %v2027, %v464
    %v2216 = vmul.f32 %v2024, %v164
    %v2217 = vmul.f32 %v2027, %v164
    %v2219 = vsel %vm176, %v2216, 0
    %2221 = vmatprep.subr.mxu0 0.0
    %2222 = vmatpush1.xpose.msra.mxu0 %v2038
    %2223 = vmatprep.subr.mxu0 0.0
    %2224 = vmatpush1.xpose.msra.mxu0 0.0
    %2225 = vmatprep.subr.mxu0 0.0
    %2226 = vmatpush1.xpose.msra.mxu0 0.0
    %2227 = vmatprep.subr.mxu0 0.0
    %2228 = vmatpush1.xpose.msra.mxu0 0.0
    %2229 = vmatprep.subr.mxu0 0.0
    %2230 = vmatpush1.xpose.msra.mxu0 0.0
    %2231 = vmatprep.subr.mxu0 0.0
    %2232 = vmatpush1.xpose.msra.mxu0 0.0
    %2233 = vmatprep.subr.mxu0 0.0
    %2234 = vmatpush1.xpose.msra.mxu0 0.0
    %2235 = vmatprep.subr.mxu0 0.0
    %2236 = vmatpush1.xpose.msra.mxu0 0.0
    %2237 = vmatprep.subr.mxu0 0.0
    %2238 = vmatpush1.xpose.msra.mxu0 0.0
    %2239 = vmatprep.subr.mxu0 0.0
    %2240 = vmatpush1.xpose.msra.mxu0 0.0
    %2241 = vmatprep.subr.mxu0 0.0
    %2242 = vmatpush1.xpose.msra.mxu0 0.0
    %2243 = vmatprep.subr.mxu0 0.0
    %2244 = vmatpush1.xpose.msra.mxu0 0.0
    %2245 = vmatprep.subr.mxu0 0.0
    %2246 = vmatpush1.xpose.msra.mxu0 0.0
    %2247 = vmatprep.subr.mxu0 0.0
    %2248 = vmatpush1.xpose.msra.mxu0 0.0
    %2249 = vmatprep.subr.mxu0 0.0
    %2250 = vmatpush1.xpose.msra.mxu0 0.0
    %2251 = vmatprep.subr.mxu0 0.0
    %2252 = vmatpush1.xpose.msra.mxu0 0.0
    %2253 = vmatprep.subr.mxu0 0.0
    %2254 = vmatpush1.xpose.msra.mxu0 0.0
    %2255 = vmatprep.subr.mxu0 0.0
    %2256 = vmatpush1.xpose.msra.mxu0 0.0
    %2257 = vmatprep.subr.mxu0 0.0
    %2258 = vmatpush1.xpose.msra.mxu0 0.0
    %2259 = vmatprep.subr.mxu0 0.0
    %2260 = vmatpush1.xpose.msra.mxu0 0.0
    %2261 = vmatprep.subr.mxu0 0.0
    %2262 = vmatpush1.xpose.msra.mxu0 0.0
    %2263 = vmatprep.subr.mxu0 0.0
    %2264 = vmatpush1.xpose.msra.mxu0 0.0
    %2265 = vmatprep.subr.mxu0 0.0
    %2266 = vmatpush1.xpose.msra.mxu0 0.0
    %2267 = vmatprep.subr.mxu0 0.0
    %2268 = vmatpush1.xpose.msra.mxu0 0.0
    %2269 = vmatprep.subr.mxu0 0.0
    %2270 = vmatpush1.xpose.msra.mxu0 0.0
    %2271 = vmatprep.subr.mxu0 0.0
    %2272 = vmatpush1.xpose.msra.mxu0 0.0
    %2273 = vmatprep.subr.mxu0 0.0
    %2274 = vmatpush1.xpose.msra.mxu0 0.0
    %2275 = vmatprep.subr.mxu0 0.0
    %2276 = vmatpush1.xpose.msra.mxu0 0.0
    %2277 = vmatprep.subr.mxu0 0.0
    %2278 = vmatpush1.xpose.msra.mxu0 0.0
    %2279 = vmatprep.subr.mxu0 0.0
    %2280 = vmatpush1.xpose.msra.mxu0 0.0
    %2281 = vmatprep.subr.mxu0 0.0
    %2282 = vmatpush1.xpose.msra.mxu0 0.0
    %2283 = vmatprep.subr.mxu0 0.0
    %2284 = vmatpush1.xpose.msra.mxu0 0.0
    %2285 = vmatprep.mubr.f32.mxu0 0.0
    %2286 = vmatmul.mubr.f32.gmra.mrb[0].mxu0 %v2219
    %v2287 = vpop.f32.mrb[0].mxu0
    %v2288 = vadd.f32 0.0, %v2287
    %v2289 = vpop.f32.mrb[0].mxu0
    %2290 = vdwg.mxu0
    %v2292 = vsel %vm176, %v2217, 0
    %2294 = vmatprep.subr.mxu0 0.0
    %2295 = vmatpush1.xpose.msra.mxu0 %v2116
    %2296 = vmatprep.subr.mxu0 0.0
    %2297 = vmatpush1.xpose.msra.mxu0 0.0
    %2298 = vmatprep.subr.mxu0 0.0
    %2299 = vmatpush1.xpose.msra.mxu0 0.0
    %2300 = vmatprep.subr.mxu0 0.0
    %2301 = vmatpush1.xpose.msra.mxu0 0.0
    %2302 = vmatprep.subr.mxu0 0.0
    %2303 = vmatpush1.xpose.msra.mxu0 0.0
    %2304 = vmatprep.subr.mxu0 0.0
    %2305 = vmatpush1.xpose.msra.mxu0 0.0
    %2306 = vmatprep.subr.mxu0 0.0
    %2307 = vmatpush1.xpose.msra.mxu0 0.0
    %2308 = vmatprep.subr.mxu0 0.0
    %2309 = vmatpush1.xpose.msra.mxu0 0.0
    %2310 = vmatprep.subr.mxu0 0.0
    %2311 = vmatpush1.xpose.msra.mxu0 0.0
    %2312 = vmatprep.subr.mxu0 0.0
    %2313 = vmatpush1.xpose.msra.mxu0 0.0
    %2314 = vmatprep.subr.mxu0 0.0
    %2315 = vmatpush1.xpose.msra.mxu0 0.0
    %2316 = vmatprep.subr.mxu0 0.0
    %2317 = vmatpush1.xpose.msra.mxu0 0.0
    %2318 = vmatprep.subr.mxu0 0.0
    %2319 = vmatpush1.xpose.msra.mxu0 0.0
    %2320 = vmatprep.subr.mxu0 0.0
    %2321 = vmatpush1.xpose.msra.mxu0 0.0
    %2322 = vmatprep.subr.mxu0 0.0
    %2323 = vmatpush1.xpose.msra.mxu0 0.0
    %2324 = vmatprep.subr.mxu0 0.0
    %2325 = vmatpush1.xpose.msra.mxu0 0.0
    %2326 = vmatprep.subr.mxu0 0.0
    %2327 = vmatpush1.xpose.msra.mxu0 0.0
    %2328 = vmatprep.subr.mxu0 0.0
    %2329 = vmatpush1.xpose.msra.mxu0 0.0
    %2330 = vmatprep.subr.mxu0 0.0
    %2331 = vmatpush1.xpose.msra.mxu0 0.0
    %2332 = vmatprep.subr.mxu0 0.0
    %2333 = vmatpush1.xpose.msra.mxu0 0.0
    %2334 = vmatprep.subr.mxu0 0.0
    %2335 = vmatpush1.xpose.msra.mxu0 0.0
    %2336 = vmatprep.subr.mxu0 0.0
    %2337 = vmatpush1.xpose.msra.mxu0 0.0
    %2338 = vmatprep.subr.mxu0 0.0
    %2339 = vmatpush1.xpose.msra.mxu0 0.0
    %2340 = vmatprep.subr.mxu0 0.0
    %2341 = vmatpush1.xpose.msra.mxu0 0.0
    %2342 = vmatprep.subr.mxu0 0.0
    %2343 = vmatpush1.xpose.msra.mxu0 0.0
    %2344 = vmatprep.subr.mxu0 0.0
    %2345 = vmatpush1.xpose.msra.mxu0 0.0
    %2346 = vmatprep.subr.mxu0 0.0
    %2347 = vmatpush1.xpose.msra.mxu0 0.0
    %2348 = vmatprep.subr.mxu0 0.0
    %2349 = vmatpush1.xpose.msra.mxu0 0.0
    %2350 = vmatprep.subr.mxu0 0.0
    %2351 = vmatpush1.xpose.msra.mxu0 0.0
    %2352 = vmatprep.subr.mxu0 0.0
    %2353 = vmatpush1.xpose.msra.mxu0 0.0
    %2354 = vmatprep.subr.mxu0 0.0
    %2355 = vmatpush1.xpose.msra.mxu0 0.0
    %2356 = vmatprep.subr.mxu0 0.0
    %2357 = vmatpush1.xpose.msra.mxu0 0.0
    %2358 = vmatprep.mubr.f32.mxu0 0.0
    %2359 = vmatmul.mubr.f32.gmra.mrb[0].mxu0 %v2292
    %v2360 = vpop.f32.mrb[0].mxu0
    %v2361 = vadd.f32 0.0, %v2360
    %v2362 = vpop.f32.mrb[0].mxu0
    %2363 = vdwg.mxu0
    %v2364 = vmul.f32 %v2288, 0.35355338
    %v2365 = vmul.f32 %v2361, 0.35355338
    %v2366 = vadd.f32 %v2364, %v154
    %v2367 = vadd.f32 %v2365, %v154
    %v2368 = vsel %vm439, %v2366, -inf
    %2369 = vmax.xlane.f32.xlu0 %v2368
    %v2370 = vpop.xlane.xlu0 %2369
    %v2371 = vsel %vm439, %v2367, -inf
    %2372 = vmax.xlane.f32.xlu0 %v2371
    %v2373 = vpop.xlane.xlu0 %2372
    %v2374 = vsub.f32 %v2366, %v2370
    %v2375 = vsub.f32 %v2367, %v2373
    %v2376 = vmul.f32 %v2374, 1.442695
    %v2377 = vpow.pop %v2376
    %v2378 = vmul.f32 %v2375, 1.442695
    %v2379 = vpow.pop %v2378
    %v2380 = vsel %vm439, %v2377, 0.0
    %2381 = vadd.xlane.f32.xlu0 %v2380
    %v2382 = vpop.xlane.xlu0 %2381
    %v2383 = vsel %vm439, %v2379, 0.0
    %2384 = vadd.xlane.f32.xlu0 %v2383
    %v2385 = vpop.xlane.xlu0 %2384
    %v2386 = vrcp.pop %v2382
    %v2387 = vrcp.pop %v2385
    %v2388 = vmul.f32 %v2377, %v2386
    %v2389 = vmul.f32 %v2379, %v2387
    %v2390 = vmul.f32 %v2024, %v644
    %v2391 = vmul.f32 %v2027, %v644
    %2393 = vrot.lane.b32.xlu0 %v2390, 64
    %v2394 = vpop.permute.xlu0 %2393
    %v2397 = vsel %vm439, %v2388, 0
    %2399 = vmatprep.subr.mxu0 0.0
    %2400 = vmatpush1.msra.mxu0 %v2394
    %2401 = vmatprep.subr.mxu0 0.0
    %2402 = vmatpush1.msra.mxu0 0.0
    %2403 = vmatprep.subr.mxu0 0.0
    %2404 = vmatpush1.msra.mxu0 0.0
    %2405 = vmatprep.subr.mxu0 0.0
    %2406 = vmatpush1.msra.mxu0 0.0
    %2407 = vmatprep.subr.mxu0 0.0
    %2408 = vmatpush1.msra.mxu0 0.0
    %2409 = vmatprep.subr.mxu0 0.0
    %2410 = vmatpush1.msra.mxu0 0.0
    %2411 = vmatprep.subr.mxu0 0.0
    %2412 = vmatpush1.msra.mxu0 0.0
    %2413 = vmatprep.subr.mxu0 0.0
    %2414 = vmatpush1.msra.mxu0 0.0
    %2415 = vmatprep.subr.mxu0 0.0
    %2416 = vmatpush1.msra.mxu0 0.0
    %2417 = vmatprep.subr.mxu0 0.0
    %2418 = vmatpush1.msra.mxu0 0.0
    %2419 = vmatprep.subr.mxu0 0.0
    %2420 = vmatpush1.msra.mxu0 0.0
    %2421 = vmatprep.subr.mxu0 0.0
    %2422 = vmatpush1.msra.mxu0 0.0
    %2423 = vmatprep.subr.mxu0 0.0
    %2424 = vmatpush1.msra.mxu0 0.0
    %2425 = vmatprep.subr.mxu0 0.0
    %2426 = vmatpush1.msra.mxu0 0.0
    %2427 = vmatprep.subr.mxu0 0.0
    %2428 = vmatpush1.msra.mxu0 0.0
    %2429 = vmatprep.subr.mxu0 0.0
    %2430 = vmatpush1.msra.mxu0 0.0
    %2431 = vmatprep.subr.mxu0 0.0
    %2432 = vmatpush1.msra.mxu0 0.0
    %2433 = vmatprep.subr.mxu0 0.0
    %2434 = vmatpush1.msra.mxu0 0.0
    %2435 = vmatprep.subr.mxu0 0.0
    %2436 = vmatpush1.msra.mxu0 0.0
    %2437 = vmatprep.subr.mxu0 0.0
    %2438 = vmatpush1.msra.mxu0 0.0
    %2439 = vmatprep.subr.mxu0 0.0
    %2440 = vmatpush1.msra.mxu0 0.0
    %2441 = vmatprep.subr.mxu0 0.0
    %2442 = vmatpush1.msra.mxu0 0.0
    %2443 = vmatprep.subr.mxu0 0.0
    %2444 = vmatpush1.msra.mxu0 0.0
    %2445 = vmatprep.subr.mxu0 0.0
    %2446 = vmatpush1.msra.mxu0 0.0
    %2447 = vmatprep.subr.mxu0 0.0
    %2448 = vmatpush1.msra.mxu0 0.0
    %2449 = vmatprep.subr.mxu0 0.0
    %2450 = vmatpush1.msra.mxu0 0.0
    %2451 = vmatprep.subr.mxu0 0.0
    %2452 = vmatpush1.msra.mxu0 0.0
    %2453 = vmatprep.subr.mxu0 0.0
    %2454 = vmatpush1.msra.mxu0 0.0
    %2455 = vmatprep.subr.mxu0 0.0
    %2456 = vmatpush1.msra.mxu0 0.0
    %2457 = vmatprep.subr.mxu0 0.0
    %2458 = vmatpush1.msra.mxu0 0.0
    %2459 = vmatprep.subr.mxu0 0.0
    %2460 = vmatpush1.msra.mxu0 0.0
    %2461 = vmatprep.subr.mxu0 0.0
    %2462 = vmatpush1.msra.mxu0 0.0
    %2463 = vmatprep.mubr.f32.mxu0 0.0
    %2464 = vmatmul.mubr.f32.gmra.mrb[0].mxu0 %v2397
    %v2465 = vpop.f32.mrb[0].mxu0
    %v2466 = vadd.f32 0.0, %v2465
    %v2467 = vpop.f32.mrb[0].mxu0
    %2468 = vdwg.mxu0
    %2470 = vrot.lane.b32.xlu0 %v2391, 64
    %v2471 = vpop.permute.xlu0 %2470
    %v2474 = vsel %vm439, %v2389, 0
    %2476 = vmatprep.subr.mxu0 0.0
    %2477 = vmatpush1.msra.mxu0 %v2471
    %2478 = vmatprep.subr.mxu0 0.0
    %2479 = vmatpush1.msra.mxu0 0.0
    %2480 = vmatprep.subr.mxu0 0.0
    %2481 = vmatpush1.msra.mxu0 0.0
    %2482 = vmatprep.subr.mxu0 0.0
    %2483 = vmatpush1.msra.mxu0 0.0
    %2484 = vmatprep.subr.mxu0 0.0
    %2485 = vmatpush1.msra.mxu0 0.0
    %2486 = vmatprep.subr.mxu0 0.0
    %2487 = vmatpush1.msra.mxu0 0.0
    %2488 = vmatprep.subr.mxu0 0.0
    %2489 = vmatpush1.msra.mxu0 0.0
    %2490 = vmatprep.subr.mxu0 0.0
    %2491 = vmatpush1.msra.mxu0 0.0
    %2492 = vmatprep.subr.mxu0 0.0
    %2493 = vmatpush1.msra.mxu0 0.0
    %2494 = vmatprep.subr.mxu0 0.0
    %2495 = vmatpush1.msra.mxu0 0.0
    %2496 = vmatprep.subr.mxu0 0.0
    %2497 = vmatpush1.msra.mxu0 0.0
    %2498 = vmatprep.subr.mxu0 0.0
    %2499 = vmatpush1.msra.mxu0 0.0
    %2500 = vmatprep.subr.mxu0 0.0
    %2501 = vmatpush1.msra.mxu0 0.0
    %2502 = vmatprep.subr.mxu0 0.0
    %2503 = vmatpush1.msra.mxu0 0.0
    %2504 = vmatprep.subr.mxu0 0.0
    %2505 = vmatpush1.msra.mxu0 0.0
    %2506 = vmatprep.subr.mxu0 0.0
    %2507 = vmatpush1.msra.mxu0 0.0
    %2508 = vmatprep.subr.mxu0 0.0
    %2509 = vmatpush1.msra.mxu0 0.0
    %2510 = vmatprep.subr.mxu0 0.0
    %2511 = vmatpush1.msra.mxu0 0.0
    %2512 = vmatprep.subr.mxu0 0.0
    %2513 = vmatpush1.msra.mxu0 0.0
    %2514 = vmatprep.subr.mxu0 0.0
    %2515 = vmatpush1.msra.mxu0 0.0
    %2516 = vmatprep.subr.mxu0 0.0
    %2517 = vmatpush1.msra.mxu0 0.0
    %2518 = vmatprep.subr.mxu0 0.0
    %2519 = vmatpush1.msra.mxu0 0.0
    %2520 = vmatprep.subr.mxu0 0.0
    %2521 = vmatpush1.msra.mxu0 0.0
    %2522 = vmatprep.subr.mxu0 0.0
    %2523 = vmatpush1.msra.mxu0 0.0
    %2524 = vmatprep.subr.mxu0 0.0
    %2525 = vmatpush1.msra.mxu0 0.0
    %2526 = vmatprep.subr.mxu0 0.0
    %2527 = vmatpush1.msra.mxu0 0.0
    %2528 = vmatprep.subr.mxu0 0.0
    %2529 = vmatpush1.msra.mxu0 0.0
    %2530 = vmatprep.subr.mxu0 0.0
    %2531 = vmatpush1.msra.mxu0 0.0
    %2532 = vmatprep.subr.mxu0 0.0
    %2533 = vmatpush1.msra.mxu0 0.0
    %2534 = vmatprep.subr.mxu0 0.0
    %2535 = vmatpush1.msra.mxu0 0.0
    %2536 = vmatprep.subr.mxu0 0.0
    %2537 = vmatpush1.msra.mxu0 0.0
    %2538 = vmatprep.subr.mxu0 0.0
    %2539 = vmatpush1.msra.mxu0 0.0
    %2540 = vmatprep.mubr.f32.mxu0 0.0
    %2541 = vmatmul.mubr.f32.gmra.mrb[0].mxu0 %v2474
    %v2542 = vpop.f32.mrb[0].mxu0
    %v2543 = vadd.f32 0.0, %v2542
    %v2544 = vpop.f32.mrb[0].mxu0
    %2545 = vdwg.mxu0
    %2547 = vrot.lane.b32.xlu0 %v2214, 64
    %v2548 = vpop.permute.xlu0 %2547
    %v2551 = vsel %vm439, %v2212, 0
    %2553 = vmatprep.subr.mxu0 0.0
    %2554 = vmatpush1.msra.mxu0 %v2548
    %2555 = vmatprep.subr.mxu0 0.0
    %2556 = vmatpush1.msra.mxu0 0.0
    %2557 = vmatprep.subr.mxu0 0.0
    %2558 = vmatpush1.msra.mxu0 0.0
    %2559 = vmatprep.subr.mxu0 0.0
    %2560 = vmatpush1.msra.mxu0 0.0
    %2561 = vmatprep.subr.mxu0 0.0
    %2562 = vmatpush1.msra.mxu0 0.0
    %2563 = vmatprep.subr.mxu0 0.0
    %2564 = vmatpush1.msra.mxu0 0.0
    %2565 = vmatprep.subr.mxu0 0.0
    %2566 = vmatpush1.msra.mxu0 0.0
    %2567 = vmatprep.subr.mxu0 0.0
    %2568 = vmatpush1.msra.mxu0 0.0
    %2569 = vmatprep.subr.mxu0 0.0
    %2570 = vmatpush1.msra.mxu0 0.0
    %2571 = vmatprep.subr.mxu0 0.0
    %2572 = vmatpush1.msra.mxu0 0.0
    %2573 = vmatprep.subr.mxu0 0.0
    %2574 = vmatpush1.msra.mxu0 0.0
    %2575 = vmatprep.subr.mxu0 0.0
    %2576 = vmatpush1.msra.mxu0 0.0
    %2577 = vmatprep.subr.mxu0 0.0
    %2578 = vmatpush1.msra.mxu0 0.0
    %2579 = vmatprep.subr.mxu0 0.0
    %2580 = vmatpush1.msra.mxu0 0.0
    %2581 = vmatprep.subr.mxu0 0.0
    %2582 = vmatpush1.msra.mxu0 0.0
    %2583 = vmatprep.subr.mxu0 0.0
    %2584 = vmatpush1.msra.mxu0 0.0
    %2585 = vmatprep.subr.mxu0 0.0
    %2586 = vmatpush1.msra.mxu0 0.0
    %2587 = vmatprep.subr.mxu0 0.0
    %2588 = vmatpush1.msra.mxu0 0.0
    %2589 = vmatprep.subr.mxu0 0.0
    %2590 = vmatpush1.msra.mxu0 0.0
    %2591 = vmatprep.subr.mxu0 0.0
    %2592 = vmatpush1.msra.mxu0 0.0
    %2593 = vmatprep.subr.mxu0 0.0
    %2594 = vmatpush1.msra.mxu0 0.0
    %2595 = vmatprep.subr.mxu0 0.0
    %2596 = vmatpush1.msra.mxu0 0.0
    %2597 = vmatprep.subr.mxu0 0.0
    %2598 = vmatpush1.msra.mxu0 0.0
    %2599 = vmatprep.subr.mxu0 0.0
    %2600 = vmatpush1.msra.mxu0 0.0
    %2601 = vmatprep.subr.mxu0 0.0
    %2602 = vmatpush1.msra.mxu0 0.0
    %2603 = vmatprep.subr.mxu0 0.0
    %2604 = vmatpush1.msra.mxu0 0.0
    %2605 = vmatprep.subr.mxu0 0.0
    %2606 = vmatpush1.msra.mxu0 0.0
    %2607 = vmatprep.subr.mxu0 0.0
    %2608 = vmatpush1.msra.mxu0 0.0
    %2609 = vmatprep.subr.mxu0 0.0
    %2610 = vmatpush1.msra.mxu0 0.0
    %2611 = vmatprep.subr.mxu0 0.0
    %2612 = vmatpush1.msra.mxu0 0.0
    %2613 = vmatprep.subr.mxu0 0.0
    %2614 = vmatpush1.msra.mxu0 0.0
    %2615 = vmatprep.subr.mxu0 0.0
    %2616 = vmatpush1.msra.mxu0 0.0
    %2617 = vmatprep.mubr.f32.mxu0 0.0
    %2618 = vmatmul.mubr.f32.gmra.mrb[0].mxu0 %v2551
    %v2619 = vpop.f32.mrb[0].mxu0
    %v2620 = vadd.f32 %v2466, %v2619
    %v2621 = vpop.f32.mrb[0].mxu0
    %2622 = vdwg.mxu0
    %2624 = vrot.lane.b32.xlu0 %v2215, 64
    %v2625 = vpop.permute.xlu0 %2624
    %v2628 = vsel %vm439, %v2213, 0
    %2630 = vmatprep.subr.mxu0 0.0
    %2631 = vmatpush1.msra.mxu0 %v2625
    %2632 = vmatprep.subr.mxu0 0.0
    %2633 = vmatpush1.msra.mxu0 0.0
    %2634 = vmatprep.subr.mxu0 0.0
    %2635 = vmatpush1.msra.mxu0 0.0
    %2636 = vmatprep.subr.mxu0 0.0
    %2637 = vmatpush1.msra.mxu0 0.0
    %2638 = vmatprep.subr.mxu0 0.0
    %2639 = vmatpush1.msra.mxu0 0.0
    %2640 = vmatprep.subr.mxu0 0.0
    %2641 = vmatpush1.msra.mxu0 0.0
    %2642 = vmatprep.subr.mxu0 0.0
    %2643 = vmatpush1.msra.mxu0 0.0
    %2644 = vmatprep.subr.mxu0 0.0
    %2645 = vmatpush1.msra.mxu0 0.0
    %2646 = vmatprep.subr.mxu0 0.0
    %2647 = vmatpush1.msra.mxu0 0.0
    %2648 = vmatprep.subr.mxu0 0.0
    %2649 = vmatpush1.msra.mxu0 0.0
    %2650 = vmatprep.subr.mxu0 0.0
    %2651 = vmatpush1.msra.mxu0 0.0
    %2652 = vmatprep.subr.mxu0 0.0
    %2653 = vmatpush1.msra.mxu0 0.0
    %2654 = vmatprep.subr.mxu0 0.0
    %2655 = vmatpush1.msra.mxu0 0.0
    %2656 = vmatprep.subr.mxu0 0.0
    %2657 = vmatpush1.msra.mxu0 0.0
    %2658 = vmatprep.subr.mxu0 0.0
    %2659 = vmatpush1.msra.mxu0 0.0
    %2660 = vmatprep.subr.mxu0 0.0
    %2661 = vmatpush1.msra.mxu0 0.0
    %2662 = vmatprep.subr.mxu0 0.0
    %2663 = vmatpush1.msra.mxu0 0.0
    %2664 = vmatprep.subr.mxu0 0.0
    %2665 = vmatpush1.msra.mxu0 0.0
    %2666 = vmatprep.subr.mxu0 0.0
    %2667 = vmatpush1.msra.mxu0 0.0
    %2668 = vmatprep.subr.mxu0 0.0
    %2669 = vmatpush1.msra.mxu0 0.0
    %2670 = vmatprep.subr.mxu0 0.0
    %2671 = vmatpush1.msra.mxu0 0.0
    %2672 = vmatprep.subr.mxu0 0.0
    %2673 = vmatpush1.msra.mxu0 0.0
    %2674 = vmatprep.subr.mxu0 0.0
    %2675 = vmatpush1.msra.mxu0 0.0
    %2676 = vmatprep.subr.mxu0 0.0
    %2677 = vmatpush1.msra.mxu0 0.0
    %2678 = vmatprep.subr.mxu0 0.0
    %2679 = vmatpush1.msra.mxu0 0.0
    %2680 = vmatprep.subr.mxu0 0.0
    %2681 = vmatpush1.msra.mxu0 0.0
    %2682 = vmatprep.subr.mxu0 0.0
    %2683 = vmatpush1.msra.mxu0 0.0
    %2684 = vmatprep.subr.mxu0 0.0
    %2685 = vmatpush1.msra.mxu0 0.0
    %2686 = vmatprep.subr.mxu0 0.0
    %2687 = vmatpush1.msra.mxu0 0.0
    %2688 = vmatprep.subr.mxu0 0.0
    %2689 = vmatpush1.msra.mxu0 0.0
    %2690 = vmatprep.subr.mxu0 0.0
    %2691 = vmatpush1.msra.mxu0 0.0
    %2692 = vmatprep.subr.mxu0 0.0
    %2693 = vmatpush1.msra.mxu0 0.0
    %2694 = vmatprep.mubr.f32.mxu0 0.0
    %2695 = vmatmul.mubr.f32.gmra.mrb[0].mxu0 %v2628
    %v2696 = vpop.f32.mrb[0].mxu0
    %v2697 = vadd.f32 %v2543, %v2696
    %v2698 = vpop.f32.mrb[0].mxu0
    %2699 = vdwg.mxu0
    %v2700 = vmul.f32 %v2024, %v169
    %v2701 = vmul.f32 %v2027, %v169
    %v2703 = vsel %vm176, %v2700, 0
    %2705 = vmatprep.subr.mxu0 0.0
    %2706 = vmatpush1.xpose.msra.mxu0 %v2038
    %2707 = vmatprep.subr.mxu0 0.0
    %2708 = vmatpush1.xpose.msra.mxu0 0.0
    %2709 = vmatprep.subr.mxu0 0.0
    %2710 = vmatpush1.xpose.msra.mxu0 0.0
    %2711 = vmatprep.subr.mxu0 0.0
    %2712 = vmatpush1.xpose.msra.mxu0 0.0
    %2713 = vmatprep.subr.mxu0 0.0
    %2714 = vmatpush1.xpose.msra.mxu0 0.0
    %2715 = vmatprep.subr.mxu0 0.0
    %2716 = vmatpush1.xpose.msra.mxu0 0.0
    %2717 = vmatprep.subr.mxu0 0.0
    %2718 = vmatpush1.xpose.msra.mxu0 0.0
    %2719 = vmatprep.subr.mxu0 0.0
    %2720 = vmatpush1.xpose.msra.mxu0 0.0
    %2721 = vmatprep.subr.mxu0 0.0
    %2722 = vmatpush1.xpose.msra.mxu0 0.0
    %2723 = vmatprep.subr.mxu0 0.0
    %2724 = vmatpush1.xpose.msra.mxu0 0.0
    %2725 = vmatprep.subr.mxu0 0.0
    %2726 = vmatpush1.xpose.msra.mxu0 0.0
    %2727 = vmatprep.subr.mxu0 0.0
    %2728 = vmatpush1.xpose.msra.mxu0 0.0
    %2729 = vmatprep.subr.mxu0 0.0
    %2730 = vmatpush1.xpose.msra.mxu0 0.0
    %2731 = vmatprep.subr.mxu0 0.0
    %2732 = vmatpush1.xpose.msra.mxu0 0.0
    %2733 = vmatprep.subr.mxu0 0.0
    %2734 = vmatpush1.xpose.msra.mxu0 0.0
    %2735 = vmatprep.subr.mxu0 0.0
    %2736 = vmatpush1.xpose.msra.mxu0 0.0
    %2737 = vmatprep.subr.mxu0 0.0
    %2738 = vmatpush1.xpose.msra.mxu0 0.0
    %2739 = vmatprep.subr.mxu0 0.0
    %2740 = vmatpush1.xpose.msra.mxu0 0.0
    %2741 = vmatprep.subr.mxu0 0.0
    %2742 = vmatpush1.xpose.msra.mxu0 0.0
    %2743 = vmatprep.subr.mxu0 0.0
    %2744 = vmatpush1.xpose.msra.mxu0 0.0
    %2745 = vmatprep.subr.mxu0 0.0
    %2746 = vmatpush1.xpose.msra.mxu0 0.0
    %2747 = vmatprep.subr.mxu0 0.0
    %2748 = vmatpush1.xpose.msra.mxu0 0.0
    %2749 = vmatprep.subr.mxu0 0.0
    %2750 = vmatpush1.xpose.msra.mxu0 0.0
    %2751 = vmatprep.subr.mxu0 0.0
    %2752 = vmatpush1.xpose.msra.mxu0 0.0
    %2753 = vmatprep.subr.mxu0 0.0
    %2754 = vmatpush1.xpose.msra.mxu0 0.0
    %2755 = vmatprep.subr.mxu0 0.0
    %2756 = vmatpush1.xpose.msra.mxu0 0.0
    %2757 = vmatprep.subr.mxu0 0.0
    %2758 = vmatpush1.xpose.msra.mxu0 0.0
    %2759 = vmatprep.subr.mxu0 0.0
    %2760 = vmatpush1.xpose.msra.mxu0 0.0
    %2761 = vmatprep.subr.mxu0 0.0
    %2762 = vmatpush1.xpose.msra.mxu0 0.0
    %2763 = vmatprep.subr.mxu0 0.0
    %2764 = vmatpush1.xpose.msra.mxu0 0.0
    %2765 = vmatprep.subr.mxu0 0.0
    %2766 = vmatpush1.xpose.msra.mxu0 0.0
    %2767 = vmatprep.subr.mxu0 0.0
    %2768 = vmatpush1.xpose.msra.mxu0 0.0
    %2769 = vmatprep.mubr.f32.mxu0 0.0
    %2770 = vmatmul.mubr.f32.gmra.mrb[0].mxu0 %v2703
    %v2771 = vpop.f32.mrb[0].mxu0
    %v2772 = vadd.f32 0.0, %v2771
    %v2773 = vpop.f32.mrb[0].mxu0
    %2774 = vdwg.mxu0
    %v2776 = vsel %vm176, %v2701, 0
    %2778 = vmatprep.subr.mxu0 0.0
    %2779 = vmatpush1.xpose.msra.mxu0 %v2116
    %2780 = vmatprep.subr.mxu0 0.0
    %2781 = vmatpush1.xpose.msra.mxu0 0.0
    %2782 = vmatprep.subr.mxu0 0.0
    %2783 = vmatpush1.xpose.msra.mxu0 0.0
    %2784 = vmatprep.subr.mxu0 0.0
    %2785 = vmatpush1.xpose.msra.mxu0 0.0
    %2786 = vmatprep.subr.mxu0 0.0
    %2787 = vmatpush1.xpose.msra.mxu0 0.0
    %2788 = vmatprep.subr.mxu0 0.0
    %2789 = vmatpush1.xpose.msra.mxu0 0.0
    %2790 = vmatprep.subr.mxu0 0.0
    %2791 = vmatpush1.xpose.msra.mxu0 0.0
    %2792 = vmatprep.subr.mxu0 0.0
    %2793 = vmatpush1.xpose.msra.mxu0 0.0
    %2794 = vmatprep.subr.mxu0 0.0
    %2795 = vmatpush1.xpose.msra.mxu0 0.0
    %2796 = vmatprep.subr.mxu0 0.0
    %2797 = vmatpush1.xpose.msra.mxu0 0.0
    %2798 = vmatprep.subr.mxu0 0.0
    %2799 = vmatpush1.xpose.msra.mxu0 0.0
    %2800 = vmatprep.subr.mxu0 0.0
    %2801 = vmatpush1.xpose.msra.mxu0 0.0
    %2802 = vmatprep.subr.mxu0 0.0
    %2803 = vmatpush1.xpose.msra.mxu0 0.0
    %2804 = vmatprep.subr.mxu0 0.0
    %2805 = vmatpush1.xpose.msra.mxu0 0.0
    %2806 = vmatprep.subr.mxu0 0.0
    %2807 = vmatpush1.xpose.msra.mxu0 0.0
    %2808 = vmatprep.subr.mxu0 0.0
    %2809 = vmatpush1.xpose.msra.mxu0 0.0
    %2810 = vmatprep.subr.mxu0 0.0
    %2811 = vmatpush1.xpose.msra.mxu0 0.0
    %2812 = vmatprep.subr.mxu0 0.0
    %2813 = vmatpush1.xpose.msra.mxu0 0.0
    %2814 = vmatprep.subr.mxu0 0.0
    %2815 = vmatpush1.xpose.msra.mxu0 0.0
    %2816 = vmatprep.subr.mxu0 0.0
    %2817 = vmatpush1.xpose.msra.mxu0 0.0
    %2818 = vmatprep.subr.mxu0 0.0
    %2819 = vmatpush1.xpose.msra.mxu0 0.0
    %2820 = vmatprep.subr.mxu0 0.0
    %2821 = vmatpush1.xpose.msra.mxu0 0.0
    %2822 = vmatprep.subr.mxu0 0.0
    %2823 = vmatpush1.xpose.msra.mxu0 0.0
    %2824 = vmatprep.subr.mxu0 0.0
    %2825 = vmatpush1.xpose.msra.mxu0 0.0
    %2826 = vmatprep.subr.mxu0 0.0
    %2827 = vmatpush1.xpose.msra.mxu0 0.0
    %2828 = vmatprep.subr.mxu0 0.0
    %2829 = vmatpush1.xpose.msra.mxu0 0.0
    %2830 = vmatprep.subr.mxu0 0.0
    %2831 = vmatpush1.xpose.msra.mxu0 0.0
    %2832 = vmatprep.subr.mxu0 0.0
    %2833 = vmatpush1.xpose.msra.mxu0 0.0
    %2834 = vmatprep.subr.mxu0 0.0
    %2835 = vmatpush1.xpose.msra.mxu0 0.0
    %2836 = vmatprep.subr.mxu0 0.0
    %2837 = vmatpush1.xpose.msra.mxu0 0.0
    %2838 = vmatprep.subr.mxu0 0.0
    %2839 = vmatpush1.xpose.msra.mxu0 0.0
    %2840 = vmatprep.subr.mxu0 0.0
    %2841 = vmatpush1.xpose.msra.mxu0 0.0
    %2842 = vmatprep.mubr.f32.mxu0 0.0
    %2843 = vmatmul.mubr.f32.gmra.mrb[0].mxu0 %v2776
    %v2844 = vpop.f32.mrb[0].mxu0
    %v2845 = vadd.f32 0.0, %v2844
    %v2846 = vpop.f32.mrb[0].mxu0
    %2847 = vdwg.mxu0
    %v2848 = vmul.f32 %v2772, 0.35355338
    %v2849 = vmul.f32 %v2845, 0.35355338
    %v2850 = vadd.f32 %v2848, %v154
    %v2851 = vadd.f32 %v2849, %v154
    %v2852 = vsel %vm439, %v2850, -inf
    %2853 = vmax.xlane.f32.xlu0 %v2852
    %v2854 = vpop.xlane.xlu0 %2853
    %v2855 = vsel %vm439, %v2851, -inf
    %2856 = vmax.xlane.f32.xlu0 %v2855
    %v2857 = vpop.xlane.xlu0 %2856
    %v2858 = vsub.f32 %v2850, %v2854
    %v2859 = vsub.f32 %v2851, %v2857
    %v2860 = vmul.f32 %v2858, 1.442695
    %v2861 = vpow.pop %v2860
    %v2862 = vmul.f32 %v2859, 1.442695
    %v2863 = vpow.pop %v2862
    %v2864 = vsel %vm439, %v2861, 0.0
    %2865 = vadd.xlane.f32.xlu0 %v2864
    %v2866 = vpop.xlane.xlu0 %2865
    %v2867 = vsel %vm439, %v2863, 0.0
    %2868 = vadd.xlane.f32.xlu0 %v2867
    %v2869 = vpop.xlane.xlu0 %2868
    %v2870 = vrcp.pop %v2866
    %v2871 = vrcp.pop %v2869
    %v2872 = vmul.f32 %v2861, %v2870
    %v2873 = vmul.f32 %v2863, %v2871
    %v2874 = vmul.f32 %v2024, %v1132
    %v2875 = vmul.f32 %v2027, %v1132
    %2877 = vrot.lane.b32.xlu0 %v2874, 64
    %v2878 = vpop.permute.xlu0 %2877
    %v2881 = vsel %vm439, %v2872, 0
    %2883 = vmatprep.subr.mxu0 0.0
    %2884 = vmatpush1.msra.mxu0 %v2878
    %2885 = vmatprep.subr.mxu0 0.0
    %2886 = vmatpush1.msra.mxu0 0.0
    %2887 = vmatprep.subr.mxu0 0.0
    %2888 = vmatpush1.msra.mxu0 0.0
    %2889 = vmatprep.subr.mxu0 0.0
    %2890 = vmatpush1.msra.mxu0 0.0
    %2891 = vmatprep.subr.mxu0 0.0
    %2892 = vmatpush1.msra.mxu0 0.0
    %2893 = vmatprep.subr.mxu0 0.0
    %2894 = vmatpush1.msra.mxu0 0.0
    %2895 = vmatprep.subr.mxu0 0.0
    %2896 = vmatpush1.msra.mxu0 0.0
    %2897 = vmatprep.subr.mxu0 0.0
    %2898 = vmatpush1.msra.mxu0 0.0
    %2899 = vmatprep.subr.mxu0 0.0
    %2900 = vmatpush1.msra.mxu0 0.0
    %2901 = vmatprep.subr.mxu0 0.0
    %2902 = vmatpush1.msra.mxu0 0.0
    %2903 = vmatprep.subr.mxu0 0.0
    %2904 = vmatpush1.msra.mxu0 0.0
    %2905 = vmatprep.subr.mxu0 0.0
    %2906 = vmatpush1.msra.mxu0 0.0
    %2907 = vmatprep.subr.mxu0 0.0
    %2908 = vmatpush1.msra.mxu0 0.0
    %2909 = vmatprep.subr.mxu0 0.0
    %2910 = vmatpush1.msra.mxu0 0.0
    %2911 = vmatprep.subr.mxu0 0.0
    %2912 = vmatpush1.msra.mxu0 0.0
    %2913 = vmatprep.subr.mxu0 0.0
    %2914 = vmatpush1.msra.mxu0 0.0
    %2915 = vmatprep.subr.mxu0 0.0
    %2916 = vmatpush1.msra.mxu0 0.0
    %2917 = vmatprep.subr.mxu0 0.0
    %2918 = vmatpush1.msra.mxu0 0.0
    %2919 = vmatprep.subr.mxu0 0.0
    %2920 = vmatpush1.msra.mxu0 0.0
    %2921 = vmatprep.subr.mxu0 0.0
    %2922 = vmatpush1.msra.mxu0 0.0
    %2923 = vmatprep.subr.mxu0 0.0
    %2924 = vmatpush1.msra.mxu0 0.0
    %2925 = vmatprep.subr.mxu0 0.0
    %2926 = vmatpush1.msra.mxu0 0.0
    %2927 = vmatprep.subr.mxu0 0.0
    %2928 = vmatpush1.msra.mxu0 0.0
    %2929 = vmatprep.subr.mxu0 0.0
    %2930 = vmatpush1.msra.mxu0 0.0
    %2931 = vmatprep.subr.mxu0 0.0
    %2932 = vmatpush1.msra.mxu0 0.0
    %2933 = vmatprep.subr.mxu0 0.0
    %2934 = vmatpush1.msra.mxu0 0.0
    %2935 = vmatprep.subr.mxu0 0.0
    %2936 = vmatpush1.msra.mxu0 0.0
    %2937 = vmatprep.subr.mxu0 0.0
    %2938 = vmatpush1.msra.mxu0 0.0
    %2939 = vmatprep.subr.mxu0 0.0
    %2940 = vmatpush1.msra.mxu0 0.0
    %2941 = vmatprep.subr.mxu0 0.0
    %2942 = vmatpush1.msra.mxu0 0.0
    %2943 = vmatprep.subr.mxu0 0.0
    %2944 = vmatpush1.msra.mxu0 0.0
    %2945 = vmatprep.subr.mxu0 0.0
    %2946 = vmatpush1.msra.mxu0 0.0
    %2947 = vmatprep.mubr.f32.mxu0 0.0
    %2948 = vmatmul.mubr.f32.gmra.mrb[0].mxu0 %v2881
    %v2949 = vpop.f32.mrb[0].mxu0
    %v2950 = vadd.f32 0.0, %v2949
    %v2951 = vpop.f32.mrb[0].mxu0
    %2952 = vdwg.mxu0
    %2954 = vrot.lane.b32.xlu0 %v2875, 64
    %v2955 = vpop.permute.xlu0 %2954
    %v2958 = vsel %vm439, %v2873, 0
    %2960 = vmatprep.subr.mxu0 0.0
    %2961 = vmatpush1.msra.mxu0 %v2955
    %2962 = vmatprep.subr.mxu0 0.0
    %2963 = vmatpush1.msra.mxu0 0.0
    %2964 = vmatprep.subr.mxu0 0.0
    %2965 = vmatpush1.msra.mxu0 0.0
    %2966 = vmatprep.subr.mxu0 0.0
    %2967 = vmatpush1.msra.mxu0 0.0
    %2968 = vmatprep.subr.mxu0 0.0
    %2969 = vmatpush1.msra.mxu0 0.0
    %2970 = vmatprep.subr.mxu0 0.0
    %2971 = vmatpush1.msra.mxu0 0.0
    %2972 = vmatprep.subr.mxu0 0.0
    %2973 = vmatpush1.msra.mxu0 0.0
    %2974 = vmatprep.subr.mxu0 0.0
    %2975 = vmatpush1.msra.mxu0 0.0
    %2976 = vmatprep.subr.mxu0 0.0
    %2977 = vmatpush1.msra.mxu0 0.0
    %2978 = vmatprep.subr.mxu0 0.0
    %2979 = vmatpush1.msra.mxu0 0.0
    %2980 = vmatprep.subr.mxu0 0.0
    %2981 = vmatpush1.msra.mxu0 0.0
    %2982 = vmatprep.subr.mxu0 0.0
    %2983 = vmatpush1.msra.mxu0 0.0
    %2984 = vmatprep.subr.mxu0 0.0
    %2985 = vmatpush1.msra.mxu0 0.0
    %2986 = vmatprep.subr.mxu0 0.0
    %2987 = vmatpush1.msra.mxu0 0.0
    %2988 = vmatprep.subr.mxu0 0.0
    %2989 = vmatpush1.msra.mxu0 0.0
    %2990 = vmatprep.subr.mxu0 0.0
    %2991 = vmatpush1.msra.mxu0 0.0
    %2992 = vmatprep.subr.mxu0 0.0
    %2993 = vmatpush1.msra.mxu0 0.0
    %2994 = vmatprep.subr.mxu0 0.0
    %2995 = vmatpush1.msra.mxu0 0.0
    %2996 = vmatprep.subr.mxu0 0.0
    %2997 = vmatpush1.msra.mxu0 0.0
    %2998 = vmatprep.subr.mxu0 0.0
    %2999 = vmatpush1.msra.mxu0 0.0
    %3000 = vmatprep.subr.mxu0 0.0
    %3001 = vmatpush1.msra.mxu0 0.0
    %3002 = vmatprep.subr.mxu0 0.0
    %3003 = vmatpush1.msra.mxu0 0.0
    %3004 = vmatprep.subr.mxu0 0.0
    %3005 = vmatpush1.msra.mxu0 0.0
    %3006 = vmatprep.subr.mxu0 0.0
    %3007 = vmatpush1.msra.mxu0 0.0
    %3008 = vmatprep.subr.mxu0 0.0
    %3009 = vmatpush1.msra.mxu0 0.0
    %3010 = vmatprep.subr.mxu0 0.0
    %3011 = vmatpush1.msra.mxu0 0.0
    %3012 = vmatprep.subr.mxu0 0.0
    %3013 = vmatpush1.msra.mxu0 0.0
    %3014 = vmatprep.subr.mxu0 0.0
    %3015 = vmatpush1.msra.mxu0 0.0
    %3016 = vmatprep.subr.mxu0 0.0
    %3017 = vmatpush1.msra.mxu0 0.0
    %3018 = vmatprep.subr.mxu0 0.0
    %3019 = vmatpush1.msra.mxu0 0.0
    %3020 = vmatprep.subr.mxu0 0.0
    %3021 = vmatpush1.msra.mxu0 0.0
    %3022 = vmatprep.subr.mxu0 0.0
    %3023 = vmatpush1.msra.mxu0 0.0
    %3024 = vmatprep.mubr.f32.mxu0 0.0
    %3025 = vmatmul.mubr.f32.gmra.mrb[0].mxu0 %v2958
    %v3026 = vpop.f32.mrb[0].mxu0
    %v3027 = vadd.f32 0.0, %v3026
    %v3028 = vpop.f32.mrb[0].mxu0
    %3029 = vdwg.mxu0
    %v3030 = vadd.f32 %v2620, %v2950
    %v3031 = vadd.f32 %v2697, %v3027
    %v3032 = vmul.f32 %v2024, %v174
    %v3033 = vmul.f32 %v2027, %v174
    %v3035 = vsel %vm176, %v3032, 0
    %3037 = vmatprep.subr.mxu0 0.0
    %3038 = vmatpush1.xpose.msra.mxu0 %v2038
    %3039 = vmatprep.subr.mxu0 0.0
    %3040 = vmatpush1.xpose.msra.mxu0 0.0
    %3041 = vmatprep.subr.mxu0 0.0
    %3042 = vmatpush1.xpose.msra.mxu0 0.0
    %3043 = vmatprep.subr.mxu0 0.0
    %3044 = vmatpush1.xpose.msra.mxu0 0.0
    %3045 = vmatprep.subr.mxu0 0.0
    %3046 = vmatpush1.xpose.msra.mxu0 0.0
    %3047 = vmatprep.subr.mxu0 0.0
    %3048 = vmatpush1.xpose.msra.mxu0 0.0
    %3049 = vmatprep.subr.mxu0 0.0
    %3050 = vmatpush1.xpose.msra.mxu0 0.0
    %3051 = vmatprep.subr.mxu0 0.0
    %3052 = vmatpush1.xpose.msra.mxu0 0.0
    %3053 = vmatprep.subr.mxu0 0.0
    %3054 = vmatpush1.xpose.msra.mxu0 0.0
    %3055 = vmatprep.subr.mxu0 0.0
    %3056 = vmatpush1.xpose.msra.mxu0 0.0
    %3057 = vmatprep.subr.mxu0 0.0
    %3058 = vmatpush1.xpose.msra.mxu0 0.0
    %3059 = vmatprep.subr.mxu0 0.0
    %3060 = vmatpush1.xpose.msra.mxu0 0.0
    %3061 = vmatprep.subr.mxu0 0.0
    %3062 = vmatpush1.xpose.msra.mxu0 0.0
    %3063 = vmatprep.subr.mxu0 0.0
    %3064 = vmatpush1.xpose.msra.mxu0 0.0
    %3065 = vmatprep.subr.mxu0 0.0
    %3066 = vmatpush1.xpose.msra.mxu0 0.0
    %3067 = vmatprep.subr.mxu0 0.0
    %3068 = vmatpush1.xpose.msra.mxu0 0.0
    %3069 = vmatprep.subr.mxu0 0.0
    %3070 = vmatpush1.xpose.msra.mxu0 0.0
    %3071 = vmatprep.subr.mxu0 0.0
    %3072 = vmatpush1.xpose.msra.mxu0 0.0
    %3073 = vmatprep.subr.mxu0 0.0
    %3074 = vmatpush1.xpose.msra.mxu0 0.0
    %3075 = vmatprep.subr.mxu0 0.0
    %3076 = vmatpush1.xpose.msra.mxu0 0.0
    %3077 = vmatprep.subr.mxu0 0.0
    %3078 = vmatpush1.xpose.msra.mxu0 0.0
    %3079 = vmatprep.subr.mxu0 0.0
    %3080 = vmatpush1.xpose.msra.mxu0 0.0
    %3081 = vmatprep.subr.mxu0 0.0
    %3082 = vmatpush1.xpose.msra.mxu0 0.0
    %3083 = vmatprep.subr.mxu0 0.0
    %3084 = vmatpush1.xpose.msra.mxu0 0.0
    %3085 = vmatprep.subr.mxu0 0.0
    %3086 = vmatpush1.xpose.msra.mxu0 0.0
    %3087 = vmatprep.subr.mxu0 0.0
    %3088 = vmatpush1.xpose.msra.mxu0 0.0
    %3089 = vmatprep.subr.mxu0 0.0
    %3090 = vmatpush1.xpose.msra.mxu0 0.0
    %3091 = vmatprep.subr.mxu0 0.0
    %3092 = vmatpush1.xpose.msra.mxu0 0.0
    %3093 = vmatprep.subr.mxu0 0.0
    %3094 = vmatpush1.xpose.msra.mxu0 0.0
    %3095 = vmatprep.subr.mxu0 0.0
    %3096 = vmatpush1.xpose.msra.mxu0 0.0
    %3097 = vmatprep.subr.mxu0 0.0
    %3098 = vmatpush1.xpose.msra.mxu0 0.0
    %3099 = vmatprep.subr.mxu0 0.0
    %3100 = vmatpush1.xpose.msra.mxu0 0.0
    %3101 = vmatprep.mubr.f32.mxu0 0.0
    %3102 = vmatmul.mubr.f32.gmra.mrb[0].mxu0 %v3035
    %v3103 = vpop.f32.mrb[0].mxu0
    %v3104 = vadd.f32 0.0, %v3103
    %v3105 = vpop.f32.mrb[0].mxu0
    %3106 = vdwg.mxu0
    %v3108 = vsel %vm176, %v3033, 0
    %3110 = vmatprep.subr.mxu0 0.0
    %3111 = vmatpush1.xpose.msra.mxu0 %v2116
    %3112 = vmatprep.subr.mxu0 0.0
    %3113 = vmatpush1.xpose.msra.mxu0 0.0
    %3114 = vmatprep.subr.mxu0 0.0
    %3115 = vmatpush1.xpose.msra.mxu0 0.0
    %3116 = vmatprep.subr.mxu0 0.0
    %3117 = vmatpush1.xpose.msra.mxu0 0.0
    %3118 = vmatprep.subr.mxu0 0.0
    %3119 = vmatpush1.xpose.msra.mxu0 0.0
    %3120 = vmatprep.subr.mxu0 0.0
    %3121 = vmatpush1.xpose.msra.mxu0 0.0
    %3122 = vmatprep.subr.mxu0 0.0
    %3123 = vmatpush1.xpose.msra.mxu0 0.0
    %3124 = vmatprep.subr.mxu0 0.0
    %3125 = vmatpush1.xpose.msra.mxu0 0.0
    %3126 = vmatprep.subr.mxu0 0.0
    %3127 = vmatpush1.xpose.msra.mxu0 0.0
    %3128 = vmatprep.subr.mxu0 0.0
    %3129 = vmatpush1.xpose.msra.mxu0 0.0
    %3130 = vmatprep.subr.mxu0 0.0
    %3131 = vmatpush1.xpose.msra.mxu0 0.0
    %3132 = vmatprep.subr.mxu0 0.0
    %3133 = vmatpush1.xpose.msra.mxu0 0.0
    %3134 = vmatprep.subr.mxu0 0.0
    %3135 = vmatpush1.xpose.msra.mxu0 0.0
    %3136 = vmatprep.subr.mxu0 0.0
    %3137 = vmatpush1.xpose.msra.mxu0 0.0
    %3138 = vmatprep.subr.mxu0 0.0
    %3139 = vmatpush1.xpose.msra.mxu0 0.0
    %3140 = vmatprep.subr.mxu0 0.0
    %3141 = vmatpush1.xpose.msra.mxu0 0.0
    %3142 = vmatprep.subr.mxu0 0.0
    %3143 = vmatpush1.xpose.msra.mxu0 0.0
    %3144 = vmatprep.subr.mxu0 0.0
    %3145 = vmatpush1.xpose.msra.mxu0 0.0
    %3146 = vmatprep.subr.mxu0 0.0
    %3147 = vmatpush1.xpose.msra.mxu0 0.0
    %3148 = vmatprep.subr.mxu0 0.0
    %3149 = vmatpush1.xpose.msra.mxu0 0.0
    %3150 = vmatprep.subr.mxu0 0.0
    %3151 = vmatpush1.xpose.msra.mxu0 0.0
    %3152 = vmatprep.subr.mxu0 0.0
    %3153 = vmatpush1.xpose.msra.mxu0 0.0
    %3154 = vmatprep.subr.mxu0 0.0
    %3155 = vmatpush1.xpose.msra.mxu0 0.0
    %3156 = vmatprep.subr.mxu0 0.0
    %3157 = vmatpush1.xpose.msra.mxu0 0.0
    %3158 = vmatprep.subr.mxu0 0.0
    %3159 = vmatpush1.xpose.msra.mxu0 0.0
    %3160 = vmatprep.subr.mxu0 0.0
    %3161 = vmatpush1.xpose.msra.mxu0 0.0
    %3162 = vmatprep.subr.mxu0 0.0
    %3163 = vmatpush1.xpose.msra.mxu0 0.0
    %3164 = vmatprep.subr.mxu0 0.0
    %3165 = vmatpush1.xpose.msra.mxu0 0.0
    %3166 = vmatprep.subr.mxu0 0.0
    %3167 = vmatpush1.xpose.msra.mxu0 0.0
    %3168 = vmatprep.subr.mxu0 0.0
    %3169 = vmatpush1.xpose.msra.mxu0 0.0
    %3170 = vmatprep.subr.mxu0 0.0
    %3171 = vmatpush1.xpose.msra.mxu0 0.0
    %3172 = vmatprep.subr.mxu0 0.0
    %3173 = vmatpush1.xpose.msra.mxu0 0.0
    %3174 = vmatprep.mubr.f32.mxu0 0.0
    %3175 = vmatmul.mubr.f32.gmra.mrb[0].mxu0 %v3108
    %v3176 = vpop.f32.mrb[0].mxu0
    %v3177 = vadd.f32 0.0, %v3176
    %v3178 = vpop.f32.mrb[0].mxu0
    %3179 = vdwg.mxu0
    %v3180 = vmul.f32 %v3104, 0.35355338
    %v3181 = vmul.f32 %v3177, 0.35355338
    %v3182 = vadd.f32 %v3180, %v154
    %v3183 = vadd.f32 %v3181, %v154
    %v3184 = vsel %vm439, %v3182, -inf
    %3185 = vmax.xlane.f32.xlu0 %v3184
    %v3186 = vpop.xlane.xlu0 %3185
    %v3187 = vsel %vm439, %v3183, -inf
    %3188 = vmax.xlane.f32.xlu0 %v3187
    %v3189 = vpop.xlane.xlu0 %3188
    %v3190 = vsub.f32 %v3182, %v3186
    %v3191 = vsub.f32 %v3183, %v3189
    %v3192 = vmul.f32 %v3190, 1.442695
    %v3193 = vpow.pop %v3192
    %v3194 = vmul.f32 %v3191, 1.442695
    %v3195 = vpow.pop %v3194
    %v3196 = vsel %vm439, %v3193, 0.0
    %3197 = vadd.xlane.f32.xlu0 %v3196
    %v3198 = vpop.xlane.xlu0 %3197
    %v3199 = vsel %vm439, %v3195, 0.0
    %3200 = vadd.xlane.f32.xlu0 %v3199
    %v3201 = vpop.xlane.xlu0 %3200
    %v3202 = vrcp.pop %v3198
    %v3203 = vrcp.pop %v3201
    %v3204 = vmul.f32 %v3193, %v3202
    %v3205 = vmul.f32 %v3195, %v3203
    %v3206 = vmul.f32 %v2024, %v1468
    %v3207 = vmul.f32 %v2027, %v1468
    %3209 = vrot.lane.b32.xlu0 %v3206, 64
    %v3210 = vpop.permute.xlu0 %3209
    %v3213 = vsel %vm439, %v3204, 0
    %3215 = vmatprep.subr.mxu0 0.0
    %3216 = vmatpush1.msra.mxu0 %v3210
    %3217 = vmatprep.subr.mxu0 0.0
    %3218 = vmatpush1.msra.mxu0 0.0
    %3219 = vmatprep.subr.mxu0 0.0
    %3220 = vmatpush1.msra.mxu0 0.0
    %3221 = vmatprep.subr.mxu0 0.0
    %3222 = vmatpush1.msra.mxu0 0.0
    %3223 = vmatprep.subr.mxu0 0.0
    %3224 = vmatpush1.msra.mxu0 0.0
    %3225 = vmatprep.subr.mxu0 0.0
    %3226 = vmatpush1.msra.mxu0 0.0
    %3227 = vmatprep.subr.mxu0 0.0
    %3228 = vmatpush1.msra.mxu0 0.0
    %3229 = vmatprep.subr.mxu0 0.0
    %3230 = vmatpush1.msra.mxu0 0.0
    %3231 = vmatprep.subr.mxu0 0.0
    %3232 = vmatpush1.msra.mxu0 0.0
    %3233 = vmatprep.subr.mxu0 0.0
    %3234 = vmatpush1.msra.mxu0 0.0
    %3235 = vmatprep.subr.mxu0 0.0
    %3236 = vmatpush1.msra.mxu0 0.0
    %3237 = vmatprep.subr.mxu0 0.0
    %3238 = vmatpush1.msra.mxu0 0.0
    %3239 = vmatprep.subr.mxu0 0.0
    %3240 = vmatpush1.msra.mxu0 0.0
    %3241 = vmatprep.subr.mxu0 0.0
    %3242 = vmatpush1.msra.mxu0 0.0
    %3243 = vmatprep.subr.mxu0 0.0
    %3244 = vmatpush1.msra.mxu0 0.0
    %3245 = vmatprep.subr.mxu0 0.0
    %3246 = vmatpush1.msra.mxu0 0.0
    %3247 = vmatprep.subr.mxu0 0.0
    %3248 = vmatpush1.msra.mxu0 0.0
    %3249 = vmatprep.subr.mxu0 0.0
    %3250 = vmatpush1.msra.mxu0 0.0
    %3251 = vmatprep.subr.mxu0 0.0
    %3252 = vmatpush1.msra.mxu0 0.0
    %3253 = vmatprep.subr.mxu0 0.0
    %3254 = vmatpush1.msra.mxu0 0.0
    %3255 = vmatprep.subr.mxu0 0.0
    %3256 = vmatpush1.msra.mxu0 0.0
    %3257 = vmatprep.subr.mxu0 0.0
    %3258 = vmatpush1.msra.mxu0 0.0
    %3259 = vmatprep.subr.mxu0 0.0
    %3260 = vmatpush1.msra.mxu0 0.0
    %3261 = vmatprep.subr.mxu0 0.0
    %3262 = vmatpush1.msra.mxu0 0.0
    %3263 = vmatprep.subr.mxu0 0.0
    %3264 = vmatpush1.msra.mxu0 0.0
    %3265 = vmatprep.subr.mxu0 0.0
    %3266 = vmatpush1.msra.mxu0 0.0
    %3267 = vmatprep.subr.mxu0 0.0
    %3268 = vmatpush1.msra.mxu0 0.0
    %3269 = vmatprep.subr.mxu0 0.0
    %3270 = vmatpush1.msra.mxu0 0.0
    %3271 = vmatprep.subr.mxu0 0.0
    %3272 = vmatpush1.msra.mxu0 0.0
    %3273 = vmatprep.subr.mxu0 0.0
    %3274 = vmatpush1.msra.mxu0 0.0
    %3275 = vmatprep.subr.mxu0 0.0
    %3276 = vmatpush1.msra.mxu0 0.0
    %3277 = vmatprep.subr.mxu0 0.0
    %3278 = vmatpush1.msra.mxu0 0.0
    %3279 = vmatprep.mubr.f32.mxu0 0.0
    %3280 = vmatmul.mubr.f32.gmra.mrb[0].mxu0 %v3213
    %v3281 = vpop.f32.mrb[0].mxu0
    %v3282 = vadd.f32 0.0, %v3281
    %v3283 = vpop.f32.mrb[0].mxu0
    %3284 = vdwg.mxu0
    %3286 = vrot.lane.b32.xlu0 %v3207, 64
    %v3287 = vpop.permute.xlu0 %3286
    %v3290 = vsel %vm439, %v3205, 0
    %3292 = vmatprep.subr.mxu0 0.0
    %3293 = vmatpush1.msra.mxu0 %v3287
    %3294 = vmatprep.subr.mxu0 0.0
    %3295 = vmatpush1.msra.mxu0 0.0
    %3296 = vmatprep.subr.mxu0 0.0
    %3297 = vmatpush1.msra.mxu0 0.0
    %3298 = vmatprep.subr.mxu0 0.0
    %3299 = vmatpush1.msra.mxu0 0.0
    %3300 = vmatprep.subr.mxu0 0.0
    %3301 = vmatpush1.msra.mxu0 0.0
    %3302 = vmatprep.subr.mxu0 0.0
    %3303 = vmatpush1.msra.mxu0 0.0
    %3304 = vmatprep.subr.mxu0 0.0
    %3305 = vmatpush1.msra.mxu0 0.0
    %3306 = vmatprep.subr.mxu0 0.0
    %3307 = vmatpush1.msra.mxu0 0.0
    %3308 = vmatprep.subr.mxu0 0.0
    %3309 = vmatpush1.msra.mxu0 0.0
    %3310 = vmatprep.subr.mxu0 0.0
    %3311 = vmatpush1.msra.mxu0 0.0
    %3312 = vmatprep.subr.mxu0 0.0
    %3313 = vmatpush1.msra.mxu0 0.0
    %3314 = vmatprep.subr.mxu0 0.0
    %3315 = vmatpush1.msra.mxu0 0.0
    %3316 = vmatprep.subr.mxu0 0.0
    %3317 = vmatpush1.msra.mxu0 0.0
    %3318 = vmatprep.subr.mxu0 0.0
    %3319 = vmatpush1.msra.mxu0 0.0
    %3320 = vmatprep.subr.mxu0 0.0
    %3321 = vmatpush1.msra.mxu0 0.0
    %3322 = vmatprep.subr.mxu0 0.0
    %3323 = vmatpush1.msra.mxu0 0.0
    %3324 = vmatprep.subr.mxu0 0.0
    %3325 = vmatpush1.msra.mxu0 0.0
    %3326 = vmatprep.subr.mxu0 0.0
    %3327 = vmatpush1.msra.mxu0 0.0
    %3328 = vmatprep.subr.mxu0 0.0
    %3329 = vmatpush1.msra.mxu0 0.0
    %3330 = vmatprep.subr.mxu0 0.0
    %3331 = vmatpush1.msra.mxu0 0.0
    %3332 = vmatprep.subr.mxu0 0.0
    %3333 = vmatpush1.msra.mxu0 0.0
    %3334 = vmatprep.subr.mxu0 0.0
    %3335 = vmatpush1.msra.mxu0 0.0
    %3336 = vmatprep.subr.mxu0 0.0
    %3337 = vmatpush1.msra.mxu0 0.0
    %3338 = vmatprep.subr.mxu0 0.0
    %3339 = vmatpush1.msra.mxu0 0.0
    %3340 = vmatprep.subr.mxu0 0.0
    %3341 = vmatpush1.msra.mxu0 0.0
    %3342 = vmatprep.subr.mxu0 0.0
    %3343 = vmatpush1.msra.mxu0 0.0
    %3344 = vmatprep.subr.mxu0 0.0
    %3345 = vmatpush1.msra.mxu0 0.0
    %3346 = vmatprep.subr.mxu0 0.0
    %3347 = vmatpush1.msra.mxu0 0.0
    %3348 = vmatprep.subr.mxu0 0.0
    %3349 = vmatpush1.msra.mxu0 0.0
    %3350 = vmatprep.subr.mxu0 0.0
    %3351 = vmatpush1.msra.mxu0 0.0
    %3352 = vmatprep.subr.mxu0 0.0
    %3353 = vmatpush1.msra.mxu0 0.0
    %3354 = vmatprep.subr.mxu0 0.0
    %3355 = vmatpush1.msra.mxu0 0.0
    %3356 = vmatprep.mubr.f32.mxu0 0.0
    %3357 = vmatmul.mubr.f32.gmra.mrb[0].mxu0 %v3290
    %v3358 = vpop.f32.mrb[0].mxu0
    %v3359 = vadd.f32 0.0, %v3358
    %v3360 = vpop.f32.mrb[0].mxu0
    %3361 = vdwg.mxu0
    %v3362 = vadd.f32 %v3030, %v3282
    %v3363 = vadd.f32 %v3031, %v3359
    %v3364 = vpack.c.bf16 %v3363, %v3362
    %s3365 = scalar_lea.vmem %s5, 16
    %v3366 = vld [vmem:[%s3365] sm:$0xf]
    %v3367 = vld [vmem:[%s3365 + $0x4] sm:$0xf]
    %v3368 = vld [vmem:[%s3365 + $0x8] sm:$0xf]
    %v3369 = vld [vmem:[%s3365 + $0xc] sm:$0xf]
    %v3370 = vlaneseq
    %v3371 = vshrl.u32 %v3370, 7
    %v3372 = vsub.s32 4, %v3371
    %v3373 = vrot.slane %v1929, %v3372
    %v3378 = vunpack.c.l.b16 %v3366
    %v3379 = vunpack.c.l.b16 %v3367
    %v3380 = vunpack.c.l.b16 %v3368
    %v3381 = vunpack.c.l.b16 %v3369
    %v3382 = vpack.c.b16 %v3379, %v3378
    %v3383 = vpack.c.b16 %v3381, %v3380
    %v3387 = vsel %vm176, %v3364, 0
    %3389 = vmatprep.subr.bf16.mxu0 0
    %3390 = vmatpush1.bf16.msra.mxu0 %v3382
    %3391 = vmatprep.subr.bf16.mxu0 0
    %3392 = vmatpush1.bf16.msra.mxu0 %v3383
    %3393 = vmatprep.subr.bf16.mxu0 0
    %3394 = vmatpush1.bf16.msra.mxu0 0
    %3395 = vmatprep.subr.bf16.mxu0 0
    %3396 = vmatpush1.bf16.msra.mxu0 0
    %3397 = vmatprep.subr.bf16.mxu0 0
    %3398 = vmatpush1.bf16.msra.mxu0 0
    %3399 = vmatprep.subr.bf16.mxu0 0
    %3400 = vmatpush1.bf16.msra.mxu0 0
    %3401 = vmatprep.subr.bf16.mxu0 0
    %3402 = vmatpush1.bf16.msra.mxu0 0
    %3403 = vmatprep.subr.bf16.mxu0 0
    %3404 = vmatpush1.bf16.msra.mxu0 0
    %3405 = vmatprep.subr.bf16.mxu0 0
    %3406 = vmatpush1.bf16.msra.mxu0 0
    %3407 = vmatprep.subr.bf16.mxu0 0
    %3408 = vmatpush1.bf16.msra.mxu0 0
    %3409 = vmatprep.subr.bf16.mxu0 0
    %3410 = vmatpush1.bf16.msra.mxu0 0
    %3411 = vmatprep.subr.bf16.mxu0 0
    %3412 = vmatpush1.bf16.msra.mxu0 0
    %3413 = vmatprep.subr.bf16.mxu0 0
    %3414 = vmatpush1.bf16.msra.mxu0 0
    %3415 = vmatprep.subr.bf16.mxu0 0
    %3416 = vmatpush1.bf16.msra.mxu0 0
    %3417 = vmatprep.subr.bf16.mxu0 0
    %3418 = vmatpush1.bf16.msra.mxu0 0
    %3419 = vmatprep.subr.bf16.mxu0 0
    %3420 = vmatpush1.bf16.msra.mxu0 0
    %3421 = vmatprep.mubr.bf16.mxu0 0
    %3422 = vmatmul.mubr.bf16.gmra.mrb[0].mxu0 %v3387
    %v3423 = vpop.f32.mrb[0].mxu0
    %v3424 = vadd.f32 %v3373, %v3423
    %v3425 = vpop.f32.mrb[0].mxu0
    %v3426 = vpop.f32.mrb[0].mxu0
    %v3427 = vadd.f32 %v3373, %v3426
    %v3428 = vpop.f32.mrb[0].mxu0
    %3429 = vdwg.mxu0
    %v3430 = vadd.f32 %v3424, %v1926
    %v3431 = vadd.f32 %v3427, %v1927
    %v3432 = vsel %vm176, %v3430, 0.0
    %3433 = vadd.xlane.f32.xlu0 %v3432
    %v3434 = vpop.xlane.xlu0 %3433
    %v3435 = vsel %vm176, %v3431, 0.0
    %3436 = vadd.xlane.f32.xlu0 %v3435
    %v3437 = vpop.xlane.xlu0 %3436
    %v3438 = vmul.f32 %v3434, %v183
    %v3439 = vmul.f32 %v3437, %v183
    %v3440 = vsub.f32 %v3430, %v3438
    %v3441 = vsub.f32 %v3431, %v3439
    %v3442 = vmul.f32 %v3440, %v3440
    %v3443 = vmul.f32 %v3441, %v3441
    %v3444 = vsel %vm176, %v3442, 0.0
    %3445 = vadd.xlane.f32.xlu0 %v3444
    %v3446 = vpop.xlane.xlu0 %3445
    %v3447 = vsel %vm176, %v3443, 0.0
    %3448 = vadd.xlane.f32.xlu0 %v3447
    %v3449 = vpop.xlane.xlu0 %3448
    %v3450 = vmul.f32 %v3446, 0.032258064
    %v3451 = vmul.f32 %v3449, 0.032258064
    %v3452 = vadd.f32 %v3450, 1e-05
    %v3453 = vadd.f32 %v3451, 1e-05
    %v3454 = vrsqrt.pop %v3452
    %v3455 = vrsqrt.pop %v3453
    %v3456 = vmul.f32 %v3440, %v3454
    %v3457 = vmul.f32 %v3441, %v3455
    %v3458 = vlaneseq
    %v3459 = vshrl.u32 %v3458, 7
    %v3460 = vsub.s32 2, %v3459
    %v3461 = vrot.slane %v1929, %v3460
    %v3462 = vmul.f32 %v3461, %v3456
    %v3463 = vmul.f32 %v3461, %v3457
    %v3464 = vlaneseq
    %v3465 = vshrl.u32 %v3464, 7
    %v3466 = vsub.s32 3, %v3465
    %v3467 = vrot.slane %v1929, %v3466
    %v3468 = vadd.f32 %v3462, %v3467
    %v3469 = vadd.f32 %v3463, %v3467
    %v3470 = vpack.c.bf16 %v3469, %v3468
    %s3471 = scalar_lea.vmem %s6, 16
    %v3472 = vld [vmem:[%s3471] sm:$0xf]
    %v3473 = vld [vmem:[%s3471 + $0x4] sm:$0xf]
    %v3474 = vld [vmem:[%s3471 + $0x8] sm:$0xf]
    %v3475 = vld [vmem:[%s3471 + $0xc] sm:$0xf]
    %v3476 = vlaneseq
    %v3477 = vshrl.u32 %v3476, 7
    %v3478 = vsub.s32 6, %v3477
    %v3479 = vrot.slane %v1929, %v3478
    %v3484 = vunpack.c.l.b16 %v3472
    %v3485 = vunpack.c.l.b16 %v3473
    %v3486 = vunpack.c.l.b16 %v3474
    %v3487 = vunpack.c.l.b16 %v3475
    %v3488 = vpack.c.b16 %v3485, %v3484
    %v3489 = vpack.c.b16 %v3487, %v3486
    %v3493 = vsel %vm176, %v3470, 0
    %3495 = vmatprep.subr.bf16.mxu0 0
    %3496 = vmatpush1.bf16.msra.mxu0 %v3488
    %3497 = vmatprep.subr.bf16.mxu0 0
    %3498 = vmatpush1.bf16.msra.mxu0 %v3489
    %3499 = vmatprep.subr.bf16.mxu0 0
    %3500 = vmatpush1.bf16.msra.mxu0 0
    %3501 = vmatprep.subr.bf16.mxu0 0
    %3502 = vmatpush1.bf16.msra.mxu0 0
    %3503 = vmatprep.subr.bf16.mxu0 0
    %3504 = vmatpush1.bf16.msra.mxu0 0
    %3505 = vmatprep.subr.bf16.mxu0 0
    %3506 = vmatpush1.bf16.msra.mxu0 0
    %3507 = vmatprep.subr.bf16.mxu0 0
    %3508 = vmatpush1.bf16.msra.mxu0 0
    %3509 = vmatprep.subr.bf16.mxu0 0
    %3510 = vmatpush1.bf16.msra.mxu0 0
    %3511 = vmatprep.subr.bf16.mxu0 0
    %3512 = vmatpush1.bf16.msra.mxu0 0
    %3513 = vmatprep.subr.bf16.mxu0 0
    %3514 = vmatpush1.bf16.msra.mxu0 0
    %3515 = vmatprep.subr.bf16.mxu0 0
    %3516 = vmatpush1.bf16.msra.mxu0 0
    %3517 = vmatprep.subr.bf16.mxu0 0
    %3518 = vmatpush1.bf16.msra.mxu0 0
    %3519 = vmatprep.subr.bf16.mxu0 0
    %3520 = vmatpush1.bf16.msra.mxu0 0
    %3521 = vmatprep.subr.bf16.mxu0 0
    %3522 = vmatpush1.bf16.msra.mxu0 0
    %3523 = vmatprep.subr.bf16.mxu0 0
    %3524 = vmatpush1.bf16.msra.mxu0 0
    %3525 = vmatprep.subr.bf16.mxu0 0
    %3526 = vmatpush1.bf16.msra.mxu0 0
    %3527 = vmatprep.mubr.bf16.mxu0 0
    %3528 = vmatmul.mubr.bf16.gmra.mrb[0].mxu0 %v3493
    %v3529 = vpop.f32.mrb[0].mxu0
    %v3530 = vadd.f32 %v3479, %v3529
    %v3531 = vpop.f32.mrb[0].mxu0
    %v3532 = vpop.f32.mrb[0].mxu0
    %v3533 = vadd.f32 %v3479, %v3532
    %v3534 = vpop.f32.mrb[0].mxu0
    %3535 = vdwg.mxu0
    %v3536 = vmul.f32 %v3530, 0.5
    %v3537 = vmul.f32 %v3533, 0.5
    %v3538 = vmul.f32 %v3530, 0.044715
    %v3539 = vmul.f32 %v3533, 0.044715
    %v3540 = vmul.f32 %v3538, %v3530
    %v3541 = vmul.f32 %v3539, %v3533
    %v3542 = vmul.f32 %v3540, %v3530
    %v3543 = vmul.f32 %v3541, %v3533
    %v3544 = vadd.f32 %v3530, %v3542
    %v3545 = vadd.f32 %v3533, %v3543
    %v3546 = vmul.f32 %v3544, 0.7978846
    %v3547 = vmul.f32 %v3545, 0.7978846
    %v3548 = vtanh.pop %v3546
    %v3549 = vtanh.pop %v3547
    %v3550 = vadd.f32 %v3548, 1.0
    %v3551 = vadd.f32 %v3549, 1.0
    %v3552 = vmul.f32 %v3536, %v3550
    %v3553 = vmul.f32 %v3537, %v3551
    %v3554 = vpack.c.bf16 %v3553, %v3552
    %s3555 = scalar_lea.vmem %s7, 64
    %v3556 = vld [vmem:[%s3555] sm:$0xf]
    %v3557 = vld [vmem:[%s3555 + $0x4] sm:$0xf]
    %v3558 = vld [vmem:[%s3555 + $0x8] sm:$0xf]
    %v3559 = vld [vmem:[%s3555 + $0xc] sm:$0xf]
    %v3560 = vld [vmem:[%s3555 + $0x10] sm:$0xf]
    %v3561 = vld [vmem:[%s3555 + $0x14] sm:$0xf]
    %v3562 = vld [vmem:[%s3555 + $0x18] sm:$0xf]
    %v3563 = vld [vmem:[%s3555 + $0x1c] sm:$0xf]
    %v3564 = vld [vmem:[%s3555 + $0x20] sm:$0xf]
    %v3565 = vld [vmem:[%s3555 + $0x24] sm:$0xf]
    %v3566 = vld [vmem:[%s3555 + $0x28] sm:$0xf]
    %v3567 = vld [vmem:[%s3555 + $0x2c] sm:$0xf]
    %v3568 = vld [vmem:[%s3555 + $0x30] sm:$0xf]
    %v3569 = vld [vmem:[%s3555 + $0x34] sm:$0xf]
    %v3570 = vld [vmem:[%s3555 + $0x38] sm:$0xf]
    %v3571 = vld [vmem:[%s3555 + $0x3c] sm:$0xf]
    %v3572 = vlaneseq
    %v3573 = vshrl.u32 %v3572, 7
    %v3574 = vsub.s32 5, %v3573
    %v3575 = vrot.slane %v1929, %v3574
    %v3592 = vunpack.c.l.b16 %v3556
    %v3593 = vunpack.c.l.b16 %v3557
    %v3594 = vunpack.c.l.b16 %v3558
    %v3595 = vunpack.c.l.b16 %v3559
    %v3596 = vunpack.c.l.b16 %v3560
    %v3597 = vunpack.c.l.b16 %v3561
    %v3598 = vunpack.c.l.b16 %v3562
    %v3599 = vunpack.c.l.b16 %v3563
    %v3600 = vunpack.c.l.b16 %v3564
    %v3601 = vunpack.c.l.b16 %v3565
    %v3602 = vunpack.c.l.b16 %v3566
    %v3603 = vunpack.c.l.b16 %v3567
    %v3604 = vunpack.c.l.b16 %v3568
    %v3605 = vunpack.c.l.b16 %v3569
    %v3606 = vunpack.c.l.b16 %v3570
    %v3607 = vunpack.c.l.b16 %v3571
    %v3608 = vpack.c.b16 %v3593, %v3592
    %v3609 = vpack.c.b16 %v3595, %v3594
    %v3610 = vpack.c.b16 %v3597, %v3596
    %v3611 = vpack.c.b16 %v3599, %v3598
    %v3612 = vpack.c.b16 %v3601, %v3600
    %v3613 = vpack.c.b16 %v3603, %v3602
    %v3614 = vpack.c.b16 %v3605, %v3604
    %v3615 = vpack.c.b16 %v3607, %v3606
    %3624 = vmatprep.subr.bf16.mxu0 0
    %3625 = vmatpush1.bf16.msra.mxu0 %v3608
    %3626 = vmatprep.subr.bf16.mxu0 0
    %3627 = vmatpush1.bf16.msra.mxu0 %v3609
    %3628 = vmatprep.subr.bf16.mxu0 0
    %3629 = vmatpush1.bf16.msra.mxu0 %v3610
    %3630 = vmatprep.subr.bf16.mxu0 0
    %3631 = vmatpush1.bf16.msra.mxu0 %v3611
    %3632 = vmatprep.subr.bf16.mxu0 0
    %3633 = vmatpush1.bf16.msra.mxu0 %v3612
    %3634 = vmatprep.subr.bf16.mxu0 0
    %3635 = vmatpush1.bf16.msra.mxu0 %v3613
    %3636 = vmatprep.subr.bf16.mxu0 0
    %3637 = vmatpush1.bf16.msra.mxu0 %v3614
    %3638 = vmatprep.subr.bf16.mxu0 0
    %3639 = vmatpush1.bf16.msra.mxu0 %v3615
    %3640 = vmatprep.subr.bf16.mxu0 0
    %3641 = vmatpush1.bf16.msra.mxu0 0
    %3642 = vmatprep.subr.bf16.mxu0 0
    %3643 = vmatpush1.bf16.msra.mxu0 0
    %3644 = vmatprep.subr.bf16.mxu0 0
    %3645 = vmatpush1.bf16.msra.mxu0 0
    %3646 = vmatprep.subr.bf16.mxu0 0
    %3647 = vmatpush1.bf16.msra.mxu0 0
    %3648 = vmatprep.subr.bf16.mxu0 0
    %3649 = vmatpush1.bf16.msra.mxu0 0
    %3650 = vmatprep.subr.bf16.mxu0 0
    %3651 = vmatpush1.bf16.msra.mxu0 0
    %3652 = vmatprep.subr.bf16.mxu0 0
    %3653 = vmatpush1.bf16.msra.mxu0 0
    %3654 = vmatprep.subr.bf16.mxu0 0
    %3655 = vmatpush1.bf16.msra.mxu0 0
    %3656 = vmatprep.mubr.bf16.mxu0 0
    %3657 = vmatmul.mubr.bf16.gmra.mrb[0].mxu0 %v3554
    %v3658 = vpop.f32.mrb[0].mxu0
    %v3659 = vadd.f32 %v3575, %v3658
    %v3660 = vpop.f32.mrb[0].mxu0
    %v3661 = vpop.f32.mrb[0].mxu0
    %v3662 = vadd.f32 %v3575, %v3661
    %v3663 = vpop.f32.mrb[0].mxu0
    %3664 = vdwg.mxu0
    %v3665 = vadd.f32 %v3659, %v3430
    %v3666 = vadd.f32 %v3662, %v3431
    %v3667 = vld [vmem:[%s8] sm:$0x1]
    %v3668 = vld [vmem:[%s8 + $0x1] sm:$0x1]
    %v3669 = vsel %vm176, %v3665, 0.0
    %3670 = vadd.xlane.f32.xlu0 %v3669
    %v3671 = vpop.xlane.xlu0 %3670
    %v3672 = vsel %vm176, %v3666, 0.0
    %3673 = vadd.xlane.f32.xlu0 %v3672
    %v3674 = vpop.xlane.xlu0 %3673
    %v3675 = vmul.f32 %v3671, %v183
    %v3676 = vmul.f32 %v3674, %v183
    %v3677 = vsub.f32 %v3665, %v3675
    %v3678 = vsub.f32 %v3666, %v3676
    %v3679 = vmul.f32 %v3677, %v3677
    %v3680 = vmul.f32 %v3678, %v3678
    %v3681 = vsel %vm176, %v3679, 0.0
    %3682 = vadd.xlane.f32.xlu0 %v3681
    %v3683 = vpop.xlane.xlu0 %3682
    %v3684 = vsel %vm176, %v3680, 0.0
    %3685 = vadd.xlane.f32.xlu0 %v3684
    %v3686 = vpop.xlane.xlu0 %3685
    %v3687 = vmul.f32 %v3683, 0.032258064
    %v3688 = vmul.f32 %v3686, 0.032258064
    %v3689 = vadd.f32 %v3687, 1e-05
    %v3690 = vadd.f32 %v3688, 1e-05
    %v3691 = vrsqrt.pop %v3689
    %v3692 = vrsqrt.pop %v3690
    %v3693 = vmul.f32 %v3677, %v3691
    %v3694 = vmul.f32 %v3678, %v3692
    %v3695 = vlaneseq
    %v3696 = vshrl.u32 %v3695, 7
    %v3697 = vsub.s32 0, %v3696
    %v3698 = vrot.slane %v3667, %v3697
    %v3699 = vmul.f32 %v3698, %v3693
    %v3700 = vmul.f32 %v3698, %v3694
    %v3701 = vlaneseq
    %v3702 = vshrl.u32 %v3701, 7
    %v3703 = vsub.s32 0, %v3702
    %v3704 = vrot.slane %v3668, %v3703
    %v3705 = vadd.f32 %v3699, %v3704
    %v3706 = vadd.f32 %v3700, %v3704
    %v3707 = vpack.c.bf16 %v3706, %v3705
    %v3708 = vld [vmem:[%s9] sm:$0xf]
    %v3709 = vld [vmem:[%s9 + $0x4] sm:$0xf]
    %v3710 = vld [vmem:[%s9 + $0x8] sm:$0xf]
    %v3711 = vld [vmem:[%s9 + $0xc] sm:$0xf]
    %v3716 = vunpack.c.l.b16 %v3708
    %v3717 = vunpack.c.l.b16 %v3709
    %v3718 = vunpack.c.l.b16 %v3710
    %v3719 = vunpack.c.l.b16 %v3711
    %v3720 = vpack.c.b16 %v3717, %v3716
    %v3721 = vpack.c.b16 %v3719, %v3718
    %v3725 = vsel %vm176, %v3707, 0
    %3727 = vmatprep.subr.bf16.mxu0 0
    %3728 = vmatpush1.bf16.msra.mxu0 %v3720
    %3729 = vmatprep.subr.bf16.mxu0 0
    %3730 = vmatpush1.bf16.msra.mxu0 %v3721
    %3731 = vmatprep.subr.bf16.mxu0 0
    %3732 = vmatpush1.bf16.msra.mxu0 0
    %3733 = vmatprep.subr.bf16.mxu0 0
    %3734 = vmatpush1.bf16.msra.mxu0 0
    %3735 = vmatprep.subr.bf16.mxu0 0
    %3736 = vmatpush1.bf16.msra.mxu0 0
    %3737 = vmatprep.subr.bf16.mxu0 0
    %3738 = vmatpush1.bf16.msra.mxu0 0
    %3739 = vmatprep.subr.bf16.mxu0 0
    %3740 = vmatpush1.bf16.msra.mxu0 0
    %3741 = vmatprep.subr.bf16.mxu0 0
    %3742 = vmatpush1.bf16.msra.mxu0 0
    %3743 = vmatprep.subr.bf16.mxu0 0
    %3744 = vmatpush1.bf16.msra.mxu0 0
    %3745 = vmatprep.subr.bf16.mxu0 0
    %3746 = vmatpush1.bf16.msra.mxu0 0
    %3747 = vmatprep.subr.bf16.mxu0 0
    %3748 = vmatpush1.bf16.msra.mxu0 0
    %3749 = vmatprep.subr.bf16.mxu0 0
    %3750 = vmatpush1.bf16.msra.mxu0 0
    %3751 = vmatprep.subr.bf16.mxu0 0
    %3752 = vmatpush1.bf16.msra.mxu0 0
    %3753 = vmatprep.subr.bf16.mxu0 0
    %3754 = vmatpush1.bf16.msra.mxu0 0
    %3755 = vmatprep.subr.bf16.mxu0 0
    %3756 = vmatpush1.bf16.msra.mxu0 0
    %3757 = vmatprep.subr.bf16.mxu0 0
    %3758 = vmatpush1.bf16.msra.mxu0 0
    %3759 = vmatprep.mubr.bf16.mxu0 0
    %3760 = vmatmul.mubr.bf16.gmra.mrb[0].mxu0 %v3725
    %v3761 = vpop.f32.mrb[0].mxu0
    %v3762 = vadd.f32 0.0, %v3761
    %v3763 = vpop.f32.mrb[0].mxu0
    %v3764 = vpop.f32.mrb[0].mxu0
    %v3765 = vadd.f32 0.0, %v3764
    %v3766 = vpop.f32.mrb[0].mxu0
    %3767 = vdwg.mxu0
    %3768 = vst [vmem:[#allocation6] sm:$0xff] %v3762
    %3769 = vst [vmem:[#allocation6 + $0x8] sm:$0xff] %v3765
    // Predicated region
    $region46: #{tpu_custom_call.1} parent=1 // pred_check
      _
    $region47: #{tpu_custom_call.1} parent=1 // pred_check_branch
      %3771 = sbr.rel (0) target = $region49
    $region48: #{tpu_custom_call.1} parent=1 // pred_region
      %s3773 = ssub.s32 256, 256
      %3774 = vsyncadd [#allocation4], %s3773
      %s3775 = sshll.u32 [#allocation6], 4
      %s3776 = int_to_ptr.vmem [resolvable:$true] %s3775
      %3781 = dma.vmem_to_hbm [thread:$0]  %s3776, 256, %s10, [#allocation4], 128, 128, 8
    $region49: #{tpu_custom_call.1} parent=1 // pred_fallthru
      _
    // Predicated region
    $region50: #{tpu_custom_call.1} parent=1 // pred_check
      _
    $region51: #{tpu_custom_call.1} parent=1 // pred_check_branch
      %3783 = sbr.rel (0) target = $region53
    $region52: #{tpu_custom_call.1} parent=1 // pred_region
      %3784 = dma.done [#allocation4], 256
    $region53: #{tpu_custom_call.1} parent=1 // pred_fallthru
      _
    %3785 = vsyncpa [#allocation4], 1
    %3786 = vsyncpa [#allocation5], 1

</llo_original>
